<compile_context>
chip_gen: v7x
topology: tpu7x:2x2x1
jax: 0.10.0
libtpu: 0.0.40
codegen_flags: <defaults>
</compile_context>

<pallas_src>
import math

import jax
import jax.numpy as jnp
from jax.experimental import pallas as pl
from jax.experimental.pallas import tpu as pltpu


# ----------------------------- fused Pallas kernel ----------------------------- #

def _make_fused_kernel(layer_cfg, C0, K, S, Wc, KH, KW, TB):
    """Build the fused decoder kernel.

    layer_cfg: list of (cin, cout, apply_relu) per ConvTranspose2d layer.
    C0: channels of the encoded feature map, K: code_size,
    S = H*W canvas size, Wc = canvas width (W), KH/KW: kernel size,
    TB: batch canvases per grid step (laid out along lanes).
    """
    n_layers = len(layer_cfg)

    def kernel(*refs):
        x_ref    = refs[0]                     # (TB, 1, K)   raw code vectors
        rep_ref  = refs[1]                     # (K, C0*K)    0/1 lane-replication matrix
        mask_ref = refs[2]                     # (C0, C0*K)   0/1 block-diagonal mask
        lw_ref   = refs[3]                     # (C0*K, S)    canvas linear weight
        lb_ref   = refs[4]                     # (C0, S)      canvas linear bias
        conv_refs = refs[5:5 + 2 * n_layers]   # per layer: (cout, KH*KW*cin), (cout, TB*S)
        out_ref  = refs[5 + 2 * n_layers]      # (TB, C_last, S)
        col_refs = refs[6 + 2 * n_layers:]     # per layer scratch (KH*KW*cin, TB*S)

        # ---- Linear -> (C0, TB*S) canvas (block-diagonal MXU matmul per tb) ----
        # xblk[c, c*K + k] = x[tb, k]; act_tb = xblk @ lw_canvas + lb_canvas.
        acts = []
        for tb in range(TB):
            xrow = x_ref[tb]                                      # (1, K)
            # Lane-replicate x C0 times on the (idle) MXU, then block-diag mask.
            xt = jnp.dot(xrow, rep_ref[...],
                         preferred_element_type=jnp.float32)      # (1, C0*K)
            xblk = mask_ref[...] * xt                             # (C0, C0*K)
            a = jnp.dot(xblk, lw_ref[...],
                        preferred_element_type=jnp.float32)
            acts.append(a + lb_ref[...])                          # (C0, S), zero gutter
        act = acts[0] if TB == 1 else jnp.concatenate(acts, axis=1)   # (C0, TB*S)

        # ---- ConvTranspose2d layers (stride=1, groups=1) -----------------------
        for li, (cin, _cout, apply_relu) in enumerate(layer_cfg):
            w_ref   = conv_refs[2 * li]        # (cout, KH*KW*cin)
            b_ref   = conv_refs[2 * li + 1]    # (cout, TB*S) masked-bias canvases
            col_ref = col_refs[li]             # (KH*KW*cin, TB*S)

            # im2col in canvas coords: col[t*cin+ic, s] = act[ic, s - (kh*Wc+kw)].
            # pltpu.roll (XLU) + full-width unmasked stores; every wrapped lane
            # (row wrap, canvas wrap, batch wrap) reads the zero gutter.
            for kh in range(KH):
                for kw in range(KW):
                    off = kh * Wc + kw
                    r0 = (kh * KW + kw) * cin
                    if off == 0:
                        col_ref[r0:r0 + cin, :] = act
                    else:
                        col_ref[r0:r0 + cin, :] = pltpu.roll(act, shift=off, axis=1)

            # One big matmul per layer: (cout, KH*KW*cin) @ (KH*KW*cin, TB*S)
            pre = jnp.dot(w_ref[...], col_ref[...],
                          preferred_element_type=jnp.float32) + b_ref[...]
            act = jnp.maximum(pre, 0.0) if apply_relu else pre

        # Lane-dense output stores: (C, 256)-wide, 256-lane-aligned per canvas.
        for tb in range(TB):
            out_ref[tb] = act[:, tb * S:(tb + 1) * S].astype(out_ref.dtype)

    return kernel


# ----------------------------- Module wrapper ------------------------------ #

class DecoderConv2dPallas:
    def __init__(self, shape, code_size, kernel_size=3, channels=(16, 32),
                 key=jax.random.PRNGKey(0)):
        C, H, W = shape
        k = int(kernel_size)
        self.shape = shape
        self.code_size = code_size
        self.kernel_size = k
        self.channels = tuple(channels)
        chans = [*self.channels, C]                      # e.g. [16, 32, C]
        n_layers = len(chans) - 1
        self.n_layers = n_layers
        C0 = chans[0]
        H0 = H - n_layers * (k - 1)
        W0 = W - n_layers * (k - 1)
        assert H0 > 0 and W0 > 0
        self.encoded_shape = (C0, H0, W0)

        # Zero-gutter invariant required by the flat lane-shift (pltpu.roll)
        # im2col: every layer-input canvas must keep >= k-1 zero rows/columns of
        # gutter at the bottom/right of the final (H, W) canvas, so row-wrapped
        # and canvas-wrapped lanes always read zeros.  Always true for stride=1;
        # asserted statically so other configs fail loudly instead of silently.
        for li in range(n_layers):
            h_in = H0 + li * (k - 1)
            w_in = W0 + li * (k - 1)
            assert (H - h_in) >= (k - 1) and (W - w_in) >= (k - 1), \
                "flat-shift im2col needs a zero gutter of width >= kernel_size-1"

        keys = jax.random.split(key, 2 + 2 * n_layers)
        P = C0 * H0 * W0
        # ---- PyTorch-layout parameters (used by the pure-JAX reference) -------
        self.lin_w = (jax.random.normal(keys[0], (code_size, P), jnp.float32)
                      * (1.0 / math.sqrt(code_size)))     # stored as W^T
        self.lin_b = jax.random.normal(keys[1], (P,), jnp.float32) * 0.01
        self.conv_w, self.conv_b = [], []
        for li in range(n_layers):
            cin, cout = chans[li], chans[li + 1]
            fan = cin * k * k
            self.conv_w.append(jax.random.normal(
                keys[2 + 2 * li], (cin, cout, k, k), jnp.float32)
                * (1.0 / math.sqrt(fan)))
            self.conv_b.append(jax.random.normal(
                keys[3 + 2 * li], (cout,), jnp.float32) * 0.01)

        # ---- Hoisted kernel-layout constants (done ONCE, at init) -------------
        S = H * W
        self.S = S
        # Linear weight/bias embedded into the (H, W) canvas; rows ordered (c, k).
        w3 = self.lin_w.reshape(code_size, C0, H0, W0)     # [k, c, h, w]
        w4 = jnp.transpose(w3, (1, 0, 2, 3))               # [c, k, h, w]
        lw_canvas = jnp.zeros((C0, code_size, H, W), jnp.float32)
        lw_canvas = lw_canvas.at[:, :, :H0, :W0].set(w4)
        self.lw_canvas = lw_canvas.reshape(C0 * code_size, S)
        lb_canvas = jnp.zeros((C0, H, W), jnp.float32)
        lb_canvas = lb_canvas.at[:, :H0, :W0].set(self.lin_b.reshape(C0, H0, W0))
        self.lb_canvas = lb_canvas.reshape(C0, S)
        # 0/1 lane-replication matrix (x tiled C0 times via one MXU push) and
        # block-diagonal mask: replaces the wrapper-side jnp.tile and the
        # in-kernel iota/compare/select of the previous version.
        self.rep = jnp.tile(jnp.eye(code_size, dtype=jnp.float32), (1, C0))
        row = jax.lax.broadcasted_iota(jnp.int32, (C0, C0 * code_size), 0)
        col = jax.lax.broadcasted_iota(jnp.int32, (C0, C0 * code_size), 1)
        self.mask = (col // code_size == row).astype(jnp.float32)
        # ConvTranspose weights as (cout, k*k*cin) tap matrices (no flip needed in
        # the out[y,x] = sum w[.,.,kh,kw]*in[y-kh,x-kw] form) + masked bias canvases.
        self.conv_wm, self.conv_bc = [], []
        Hcur, Wcur = H0, W0
        for li in range(n_layers):
            cin, cout = chans[li], chans[li + 1]
            wt = self.conv_w[li]                                   # (cin,cout,k,k)
            wm = jnp.transpose(wt, (2, 3, 0, 1)).reshape(k * k * cin, cout).T
            self.conv_wm.append(wm)                                # (cout, k*k*cin)
            Ho, Wo = Hcur + k - 1, Wcur + k - 1
            bc = jnp.zeros((cout, H, W), jnp.float32)
            bc = bc.at[:, :Ho, :Wo].set(self.conv_b[li][:, None, None])
            self.conv_bc.append(bc.reshape(cout, S))
            Hcur, Wcur = Ho, Wo
        assert (Hcur, Wcur) == (H, W)

        self._layer_cfg = [(chans[li], chans[li + 1], li < n_layers - 1)
                           for li in range(n_layers)]
        self._cache = {}            # per-batch-size compiled forward fns

    def _build_forward(self, B):
        C, H, W = self.shape
        C0 = self.encoded_shape[0]
        K = self.code_size
        S = self.S
        k = self.kernel_size
        # Batch tile: largest divisor of B up to 8 canvases per grid step
        # (amortizes the ~0.35us/step overhead and widens every matmul/store;
        #  keeps col scratch well below the 16 MiB default scoped VMEM on v5e).
        TB = max(d for d in range(1, min(B, 8) + 1) if B % d == 0)

        kernel = _make_fused_kernel(self._layer_cfg, C0, K, S, W, k, k, TB)
        conv_b_tiled = [jnp.tile(bc, (1, TB)) for bc in self.conv_bc]  # once per B

        in_specs = [
            pl.BlockSpec((TB, 1, K), lambda b: (b, 0, 0)),
            pl.BlockSpec(self.rep.shape, lambda b: (0, 0)),
            pl.BlockSpec(self.mask.shape, lambda b: (0, 0)),
            pl.BlockSpec(self.lw_canvas.shape, lambda b: (0, 0)),
            pl.BlockSpec(self.lb_canvas.shape, lambda b: (0, 0)),
        ]
        const_args = [self.rep, self.mask, self.lw_canvas, self.lb_canvas]
        for li in range(self.n_layers):
            in_specs.append(pl.BlockSpec(self.conv_wm[li].shape, lambda b: (0, 0)))
            in_specs.append(pl.BlockSpec(conv_b_tiled[li].shape, lambda b: (0, 0)))
            const_args += [self.conv_wm[li], conv_b_tiled[li]]

        scratch = [pltpu.VMEM((k * k * cin, TB * S), jnp.float32)
                   for (cin, _, _) in self._layer_cfg]

        call = pl.pallas_call(
            kernel,
            out_shape=jax.ShapeDtypeStruct((B, C, S), jnp.float32),
            grid_spec=pltpu.PrefetchScalarGridSpec(
                num_scalar_prefetch=0,
                grid=(B // TB,),
                in_specs=in_specs,
                out_specs=pl.BlockSpec((TB, C, S), lambda b: (b, 0, 0)),
                scratch_shapes=scratch,
            ),
            compiler_params=pltpu.CompilerParams(
                dimension_semantics=("parallel",)),
        )

        def fwd(x):
            out = call(x.reshape(B, 1, K), *const_args)
            return out.reshape(B, C, H, W)                 # free metadata reshape

        return jax.jit(fwd)

    def __call__(self, x):
        B = x.shape[0]
        fn = self._cache.get(B)
        if fn is None:
            fn = self._build_forward(B)
            self._cache[B] = fn
        return fn(x)


# ------------------------ pure-JAX reference (check) ------------------------ #

def _ref_conv_transpose(x_nchw, w_t, b, relu):
    cin, cout, kh, kw = w_t.shape
    xp = jnp.pad(x_nchw, ((0, 0), (0, 0), (kh - 1, kh - 1), (kw - 1, kw - 1)))
    w_conv = jnp.flip(w_t, axis=(2, 3)).transpose(1, 0, 2, 3)   # (Cout,Cin,KH,KW)
    out = jax.lax.conv_general_dilated(
        xp, w_conv, window_strides=(1, 1), padding="VALID",
        dimension_numbers=("NCHW", "OIHW", "NCHW"))
    out = out + b[None, :, None, None]
    return jnp.maximum(out, 0.0) if relu else out


def reference_forward(model, x):
    B = x.shape[0]
    C0, H0, W0 = model.encoded_shape
    h = x @ model.lin_w + model.lin_b
    h = h.reshape(B, C0, H0, W0)
    for li in range(model.n_layers):
        relu = li < model.n_layers - 1
        h = _ref_conv_transpose(h, model.conv_w[li], model.conv_b[li], relu)
    return h


# ---------------------------------- main ----------------------------------- #

if __name__ == "__main__":
    key = jax.random.PRNGKey(0)
    k_param, k_x = jax.random.split(key)

    shape = (4, 16, 16)       # (C, H, W) target output image shape
    code_size = 32
    batch = 2

    model = DecoderConv2dPallas(shape=shape, code_size=code_size,
                                kernel_size=3, channels=(16, 32), key=k_param)

    x = jax.random.normal(k_x, (batch, code_size), jnp.float32)

    out = jax.block_until_ready(model(x))
    assert out.shape == (batch, *shape), out.shape

    ref = jax.block_until_ready(reference_forward(model, x))
    max_err = float(jnp.max(jnp.abs(out - ref)))
    assert jnp.allclose(out, ref, atol=1e-3, rtol=1e-3), max_err

    print("KERNEL_OK")
</pallas_src>

<mosaic_0001>
module attributes {stable_mosaic.version = 11 : i64} {
  func.func @kernel(%arg0: i32, %arg1: memref<2x1x32xf32, #tpu.memory_space<vmem>>, %arg2: memref<32x512xf32, #tpu.memory_space<vmem>>, %arg3: memref<16x512xf32, #tpu.memory_space<vmem>>, %arg4: memref<512x256xf32, #tpu.memory_space<vmem>>, %arg5: memref<16x256xf32, #tpu.memory_space<vmem>>, %arg6: memref<32x144xf32, #tpu.memory_space<vmem>>, %arg7: memref<32x512xf32, #tpu.memory_space<vmem>>, %arg8: memref<4x288xf32, #tpu.memory_space<vmem>>, %arg9: memref<4x512xf32, #tpu.memory_space<vmem>>, %arg10: memref<2x4x256xf32, #tpu.memory_space<vmem>>, %arg11: memref<144x512xf32, #tpu.memory_space<vmem>>, %arg12: memref<288x512xf32, #tpu.memory_space<vmem>>) attributes {dimension_semantics = [#tpu.dimension_semantics<parallel>], iteration_bounds = array<i64: 1>, scalar_prefetch = 0 : i64, scratch_operands = 2 : i64, tpu.core_type = #tpu.core_type<tc>, window_params = [{transform_indices = @transform_0, window_bounds = array<i64: 2, 1, 32>}, {pipeline_mode = #tpu.pipeline_mode<synchronous>, transform_indices = @transform_1, window_bounds = array<i64: 32, 512>}, {pipeline_mode = #tpu.pipeline_mode<synchronous>, transform_indices = @transform_2, window_bounds = array<i64: 16, 512>}, {pipeline_mode = #tpu.pipeline_mode<synchronous>, transform_indices = @transform_3, window_bounds = array<i64: 512, 256>}, {pipeline_mode = #tpu.pipeline_mode<synchronous>, transform_indices = @transform_4, window_bounds = array<i64: 16, 256>}, {pipeline_mode = #tpu.pipeline_mode<synchronous>, transform_indices = @transform_5, window_bounds = array<i64: 32, 144>}, {pipeline_mode = #tpu.pipeline_mode<synchronous>, transform_indices = @transform_6, window_bounds = array<i64: 32, 512>}, {pipeline_mode = #tpu.pipeline_mode<synchronous>, transform_indices = @transform_7, window_bounds = array<i64: 4, 288>}, {pipeline_mode = #tpu.pipeline_mode<synchronous>, transform_indices = @transform_8, window_bounds = array<i64: 4, 512>}, {transform_indices = @transform_9, window_bounds = array<i64: 2, 4, 256>}]} {
    %c0 = arith.constant 0 : index
    %c0_0 = arith.constant 0 : index
    %c0_1 = arith.constant 0 : index
    %0 = vector.load %arg1[%c0, %c0_0, %c0_1] : memref<2x1x32xf32, #tpu.memory_space<vmem>>, vector<1x1x32xf32>
    %1 = vector.shape_cast %0 : vector<1x1x32xf32> to vector<1x32xf32>
    %c0_2 = arith.constant 0 : index
    %c0_3 = arith.constant 0 : index
    %2 = vector.load %arg2[%c0_2, %c0_3] : memref<32x512xf32, #tpu.memory_space<vmem>>, vector<32x512xf32>
    %cst = arith.constant dense<0.000000e+00> : vector<1x512xf32>
    %3 = tpu.matmul %1, %2, %cst {dimension_numbers = #tpu.dot_dimension_numbers<[1], [0], [0], [1], [0, 0, 1, 1], [], []>} : vector<1x32xf32>, vector<32x512xf32>, vector<1x512xf32> -> vector<1x512xf32>
    %c0_4 = arith.constant 0 : index
    %c0_5 = arith.constant 0 : index
    %4 = vector.load %arg3[%c0_4, %c0_5] : memref<16x512xf32, #tpu.memory_space<vmem>>, vector<16x512xf32>
    %5 = vector.broadcast %3 : vector<1x512xf32> to vector<16x512xf32>
    %6 = arith.mulf %4, %5 : vector<16x512xf32>
    %c0_6 = arith.constant 0 : index
    %c0_7 = arith.constant 0 : index
    %7 = vector.load %arg4[%c0_6, %c0_7] : memref<512x256xf32, #tpu.memory_space<vmem>>, vector<512x256xf32>
    %cst_8 = arith.constant dense<0.000000e+00> : vector<16x256xf32>
    %8 = tpu.matmul %6, %7, %cst_8 {dimension_numbers = #tpu.dot_dimension_numbers<[1], [0], [0], [1], [0, 0, 1, 1], [], []>} : vector<16x512xf32>, vector<512x256xf32>, vector<16x256xf32> -> vector<16x256xf32>
    %c0_9 = arith.constant 0 : index
    %c0_10 = arith.constant 0 : index
    %9 = vector.load %arg5[%c0_9, %c0_10] : memref<16x256xf32, #tpu.memory_space<vmem>>, vector<16x256xf32>
    %10 = arith.addf %8, %9 : vector<16x256xf32>
    %c1 = arith.constant 1 : index
    %c0_11 = arith.constant 0 : index
    %c0_12 = arith.constant 0 : index
    %11 = vector.load %arg1[%c1, %c0_11, %c0_12] : memref<2x1x32xf32, #tpu.memory_space<vmem>>, vector<1x1x32xf32>
    %12 = vector.shape_cast %11 : vector<1x1x32xf32> to vector<1x32xf32>
    %c0_13 = arith.constant 0 : index
    %c0_14 = arith.constant 0 : index
    %13 = vector.load %arg2[%c0_13, %c0_14] : memref<32x512xf32, #tpu.memory_space<vmem>>, vector<32x512xf32>
    %cst_15 = arith.constant dense<0.000000e+00> : vector<1x512xf32>
    %14 = tpu.matmul %12, %13, %cst_15 {dimension_numbers = #tpu.dot_dimension_numbers<[1], [0], [0], [1], [0, 0, 1, 1], [], []>} : vector<1x32xf32>, vector<32x512xf32>, vector<1x512xf32> -> vector<1x512xf32>
    %c0_16 = arith.constant 0 : index
    %c0_17 = arith.constant 0 : index
    %15 = vector.load %arg3[%c0_16, %c0_17] : memref<16x512xf32, #tpu.memory_space<vmem>>, vector<16x512xf32>
    %16 = vector.broadcast %14 : vector<1x512xf32> to vector<16x512xf32>
    %17 = arith.mulf %15, %16 : vector<16x512xf32>
    %c0_18 = arith.constant 0 : index
    %c0_19 = arith.constant 0 : index
    %18 = vector.load %arg4[%c0_18, %c0_19] : memref<512x256xf32, #tpu.memory_space<vmem>>, vector<512x256xf32>
    %cst_20 = arith.constant dense<0.000000e+00> : vector<16x256xf32>
    %19 = tpu.matmul %17, %18, %cst_20 {dimension_numbers = #tpu.dot_dimension_numbers<[1], [0], [0], [1], [0, 0, 1, 1], [], []>} : vector<16x512xf32>, vector<512x256xf32>, vector<16x256xf32> -> vector<16x256xf32>
    %c0_21 = arith.constant 0 : index
    %c0_22 = arith.constant 0 : index
    %20 = vector.load %arg5[%c0_21, %c0_22] : memref<16x256xf32, #tpu.memory_space<vmem>>, vector<16x256xf32>
    %21 = arith.addf %19, %20 : vector<16x256xf32>
    %22 = tpu.concatenate %10, %21 in 1 : vector<16x256xf32>, vector<16x256xf32> -> vector<16x512xf32>
    %c0_23 = arith.constant 0 : index
    %c0_24 = arith.constant 0 : index
    %23 = vector.load %arg11[%c0_23, %c0_24] : memref<144x512xf32, #tpu.memory_space<vmem>>, vector<16x512xf32>
    tpu.vector_store %arg11[%c0_23, %c0_24], %22 {strides = array<i32>} : memref<144x512xf32, #tpu.memory_space<vmem>>, vector<16x512xf32>,
    %c1_i32 = arith.constant 1 : i32
    %24 = tpu.dynamic_rotate %22 by %c1_i32 dim 1 : vector<16x512xf32>, i32 -> vector<16x512xf32>
    %c16 = arith.constant 16 : index
    %c0_25 = arith.constant 0 : index
    %25 = vector.load %arg11[%c16, %c0_25] : memref<144x512xf32, #tpu.memory_space<vmem>>, vector<16x512xf32>
    tpu.vector_store %arg11[%c16, %c0_25], %24 {strides = array<i32>} : memref<144x512xf32, #tpu.memory_space<vmem>>, vector<16x512xf32>,
    %c2_i32 = arith.constant 2 : i32
    %26 = tpu.dynamic_rotate %22 by %c2_i32 dim 1 : vector<16x512xf32>, i32 -> vector<16x512xf32>
    %c32 = arith.constant 32 : index
    %c0_26 = arith.constant 0 : index
    %27 = vector.load %arg11[%c32, %c0_26] : memref<144x512xf32, #tpu.memory_space<vmem>>, vector<16x512xf32>
    tpu.vector_store %arg11[%c32, %c0_26], %26 {strides = array<i32>} : memref<144x512xf32, #tpu.memory_space<vmem>>, vector<16x512xf32>,
    %c16_i32 = arith.constant 16 : i32
    %28 = tpu.dynamic_rotate %22 by %c16_i32 dim 1 : vector<16x512xf32>, i32 -> vector<16x512xf32>
    %c48 = arith.constant 48 : index
    %c0_27 = arith.constant 0 : index
    %29 = vector.load %arg11[%c48, %c0_27] : memref<144x512xf32, #tpu.memory_space<vmem>>, vector<16x512xf32>
    tpu.vector_store %arg11[%c48, %c0_27], %28 {strides = array<i32>} : memref<144x512xf32, #tpu.memory_space<vmem>>, vector<16x512xf32>,
    %c17_i32 = arith.constant 17 : i32
    %30 = tpu.dynamic_rotate %22 by %c17_i32 dim 1 : vector<16x512xf32>, i32 -> vector<16x512xf32>
    %c64 = arith.constant 64 : index
    %c0_28 = arith.constant 0 : index
    %31 = vector.load %arg11[%c64, %c0_28] : memref<144x512xf32, #tpu.memory_space<vmem>>, vector<16x512xf32>
    tpu.vector_store %arg11[%c64, %c0_28], %30 {strides = array<i32>} : memref<144x512xf32, #tpu.memory_space<vmem>>, vector<16x512xf32>,
    %c18_i32 = arith.constant 18 : i32
    %32 = tpu.dynamic_rotate %22 by %c18_i32 dim 1 : vector<16x512xf32>, i32 -> vector<16x512xf32>
    %c80 = arith.constant 80 : index
    %c0_29 = arith.constant 0 : index
    %33 = vector.load %arg11[%c80, %c0_29] : memref<144x512xf32, #tpu.memory_space<vmem>>, vector<16x512xf32>
    tpu.vector_store %arg11[%c80, %c0_29], %32 {strides = array<i32>} : memref<144x512xf32, #tpu.memory_space<vmem>>, vector<16x512xf32>,
    %c32_i32 = arith.constant 32 : i32
    %34 = tpu.dynamic_rotate %22 by %c32_i32 dim 1 : vector<16x512xf32>, i32 -> vector<16x512xf32>
    %c96 = arith.constant 96 : index
    %c0_30 = arith.constant 0 : index
    %35 = vector.load %arg11[%c96, %c0_30] : memref<144x512xf32, #tpu.memory_space<vmem>>, vector<16x512xf32>
    tpu.vector_store %arg11[%c96, %c0_30], %34 {strides = array<i32>} : memref<144x512xf32, #tpu.memory_space<vmem>>, vector<16x512xf32>,
    %c33_i32 = arith.constant 33 : i32
    %36 = tpu.dynamic_rotate %22 by %c33_i32 dim 1 : vector<16x512xf32>, i32 -> vector<16x512xf32>
    %c112 = arith.constant 112 : index
    %c0_31 = arith.constant 0 : index
    %37 = vector.load %arg11[%c112, %c0_31] : memref<144x512xf32, #tpu.memory_space<vmem>>, vector<16x512xf32>
    tpu.vector_store %arg11[%c112, %c0_31], %36 {strides = array<i32>} : memref<144x512xf32, #tpu.memory_space<vmem>>, vector<16x512xf32>,
    %c34_i32 = arith.constant 34 : i32
    %38 = tpu.dynamic_rotate %22 by %c34_i32 dim 1 : vector<16x512xf32>, i32 -> vector<16x512xf32>
    %c128 = arith.constant 128 : index
    %c0_32 = arith.constant 0 : index
    %39 = vector.load %arg11[%c128, %c0_32] : memref<144x512xf32, #tpu.memory_space<vmem>>, vector<16x512xf32>
    tpu.vector_store %arg11[%c128, %c0_32], %38 {strides = array<i32>} : memref<144x512xf32, #tpu.memory_space<vmem>>, vector<16x512xf32>,
    %c0_33 = arith.constant 0 : index
    %c0_34 = arith.constant 0 : index
    %40 = vector.load %arg6[%c0_33, %c0_34] : memref<32x144xf32, #tpu.memory_space<vmem>>, vector<32x144xf32>
    %c0_35 = arith.constant 0 : index
    %c0_36 = arith.constant 0 : index
    %41 = vector.load %arg11[%c0_35, %c0_36] : memref<144x512xf32, #tpu.memory_space<vmem>>, vector<144x512xf32>
    %cst_37 = arith.constant dense<0.000000e+00> : vector<32x512xf32>
    %42 = tpu.matmul %40, %41, %cst_37 {dimension_numbers = #tpu.dot_dimension_numbers<[1], [0], [0], [1], [0, 0, 1, 1], [], []>} : vector<32x144xf32>, vector<144x512xf32>, vector<32x512xf32> -> vector<32x512xf32>
    %c0_38 = arith.constant 0 : index
    %c0_39 = arith.constant 0 : index
    %43 = vector.load %arg7[%c0_38, %c0_39] : memref<32x512xf32, #tpu.memory_space<vmem>>, vector<32x512xf32>
    %44 = arith.addf %42, %43 : vector<32x512xf32>
    %cst_40 = arith.constant 0.000000e+00 : f32
    %45 = vector.broadcast %cst_40 : f32 to vector<32x512xf32>
    %46 = arith.maximumf %44, %45 : vector<32x512xf32>
    %c0_41 = arith.constant 0 : index
    %c0_42 = arith.constant 0 : index
    %47 = vector.load %arg12[%c0_41, %c0_42] : memref<288x512xf32, #tpu.memory_space<vmem>>, vector<32x512xf32>
    tpu.vector_store %arg12[%c0_41, %c0_42], %46 {strides = array<i32>} : memref<288x512xf32, #tpu.memory_space<vmem>>, vector<32x512xf32>,
    %c1_i32_43 = arith.constant 1 : i32
    %48 = tpu.dynamic_rotate %46 by %c1_i32_43 dim 1 : vector<32x512xf32>, i32 -> vector<32x512xf32>
    %c32_44 = arith.constant 32 : index
    %c0_45 = arith.constant 0 : index
    %49 = vector.load %arg12[%c32_44, %c0_45] : memref<288x512xf32, #tpu.memory_space<vmem>>, vector<32x512xf32>
    tpu.vector_store %arg12[%c32_44, %c0_45], %48 {strides = array<i32>} : memref<288x512xf32, #tpu.memory_space<vmem>>, vector<32x512xf32>,
    %c2_i32_46 = arith.constant 2 : i32
    %50 = tpu.dynamic_rotate %46 by %c2_i32_46 dim 1 : vector<32x512xf32>, i32 -> vector<32x512xf32>
    %c64_47 = arith.constant 64 : index
    %c0_48 = arith.constant 0 : index
    %51 = vector.load %arg12[%c64_47, %c0_48] : memref<288x512xf32, #tpu.memory_space<vmem>>, vector<32x512xf32>
    tpu.vector_store %arg12[%c64_47, %c0_48], %50 {strides = array<i32>} : memref<288x512xf32, #tpu.memory_space<vmem>>, vector<32x512xf32>,
    %c16_i32_49 = arith.constant 16 : i32
    %52 = tpu.dynamic_rotate %46 by %c16_i32_49 dim 1 : vector<32x512xf32>, i32 -> vector<32x512xf32>
    %c96_50 = arith.constant 96 : index
    %c0_51 = arith.constant 0 : index
    %53 = vector.load %arg12[%c96_50, %c0_51] : memref<288x512xf32, #tpu.memory_space<vmem>>, vector<32x512xf32>
    tpu.vector_store %arg12[%c96_50, %c0_51], %52 {strides = array<i32>} : memref<288x512xf32, #tpu.memory_space<vmem>>, vector<32x512xf32>,
    %c17_i32_52 = arith.constant 17 : i32
    %54 = tpu.dynamic_rotate %46 by %c17_i32_52 dim 1 : vector<32x512xf32>, i32 -> vector<32x512xf32>
    %c128_53 = arith.constant 128 : index
    %c0_54 = arith.constant 0 : index
    %55 = vector.load %arg12[%c128_53, %c0_54] : memref<288x512xf32, #tpu.memory_space<vmem>>, vector<32x512xf32>
    tpu.vector_store %arg12[%c128_53, %c0_54], %54 {strides = array<i32>} : memref<288x512xf32, #tpu.memory_space<vmem>>, vector<32x512xf32>,
    %c18_i32_55 = arith.constant 18 : i32
    %56 = tpu.dynamic_rotate %46 by %c18_i32_55 dim 1 : vector<32x512xf32>, i32 -> vector<32x512xf32>
    %c160 = arith.constant 160 : index
    %c0_56 = arith.constant 0 : index
    %57 = vector.load %arg12[%c160, %c0_56] : memref<288x512xf32, #tpu.memory_space<vmem>>, vector<32x512xf32>
    tpu.vector_store %arg12[%c160, %c0_56], %56 {strides = array<i32>} : memref<288x512xf32, #tpu.memory_space<vmem>>, vector<32x512xf32>,
    %c32_i32_57 = arith.constant 32 : i32
    %58 = tpu.dynamic_rotate %46 by %c32_i32_57 dim 1 : vector<32x512xf32>, i32 -> vector<32x512xf32>
    %c192 = arith.constant 192 : index
    %c0_58 = arith.constant 0 : index
    %59 = vector.load %arg12[%c192, %c0_58] : memref<288x512xf32, #tpu.memory_space<vmem>>, vector<32x512xf32>
    tpu.vector_store %arg12[%c192, %c0_58], %58 {strides = array<i32>} : memref<288x512xf32, #tpu.memory_space<vmem>>, vector<32x512xf32>,
    %c33_i32_59 = arith.constant 33 : i32
    %60 = tpu.dynamic_rotate %46 by %c33_i32_59 dim 1 : vector<32x512xf32>, i32 -> vector<32x512xf32>
    %c224 = arith.constant 224 : index
    %c0_60 = arith.constant 0 : index
    %61 = vector.load %arg12[%c224, %c0_60] : memref<288x512xf32, #tpu.memory_space<vmem>>, vector<32x512xf32>
    tpu.vector_store %arg12[%c224, %c0_60], %60 {strides = array<i32>} : memref<288x512xf32, #tpu.memory_space<vmem>>, vector<32x512xf32>,
    %c34_i32_61 = arith.constant 34 : i32
    %62 = tpu.dynamic_rotate %46 by %c34_i32_61 dim 1 : vector<32x512xf32>, i32 -> vector<32x512xf32>
    %c256 = arith.constant 256 : index
    %c0_62 = arith.constant 0 : index
    %63 = vector.load %arg12[%c256, %c0_62] : memref<288x512xf32, #tpu.memory_space<vmem>>, vector<32x512xf32>
    tpu.vector_store %arg12[%c256, %c0_62], %62 {strides = array<i32>} : memref<288x512xf32, #tpu.memory_space<vmem>>, vector<32x512xf32>,
    %c0_63 = arith.constant 0 : index
    %c0_64 = arith.constant 0 : index
    %64 = vector.load %arg8[%c0_63, %c0_64] : memref<4x288xf32, #tpu.memory_space<vmem>>, vector<4x288xf32>
    %c0_65 = arith.constant 0 : index
    %c0_66 = arith.constant 0 : index
    %65 = vector.load %arg12[%c0_65, %c0_66] : memref<288x512xf32, #tpu.memory_space<vmem>>, vector<288x512xf32>
    %cst_67 = arith.constant dense<0.000000e+00> : vector<4x512xf32>
    %66 = tpu.matmul %64, %65, %cst_67 {dimension_numbers = #tpu.dot_dimension_numbers<[1], [0], [0], [1], [0, 0, 1, 1], [], []>} : vector<4x288xf32>, vector<288x512xf32>, vector<4x512xf32> -> vector<4x512xf32>
    %c0_68 = arith.constant 0 : index
    %c0_69 = arith.constant 0 : index
    %67 = vector.load %arg9[%c0_68, %c0_69] : memref<4x512xf32, #tpu.memory_space<vmem>>, vector<4x512xf32>
    %68 = arith.addf %66, %67 : vector<4x512xf32>
    %69 = vector.extract_strided_slice %68 {offsets = [0, 0], sizes = [4, 256], strides = [1, 1]} : vector<4x512xf32> to vector<4x256xf32>
    %c0_70 = arith.constant 0 : index
    %c0_71 = arith.constant 0 : index
    %c0_72 = arith.constant 0 : index
    %70 = vector.load %arg10[%c0_70, %c0_71, %c0_72] : memref<2x4x256xf32, #tpu.memory_space<vmem>>, vector<1x4x256xf32>
    %71 = vector.shape_cast %70 : vector<1x4x256xf32> to vector<4x256xf32>
    %72 = vector.shape_cast %69 : vector<4x256xf32> to vector<1x4x256xf32>
    tpu.vector_store %arg10[%c0_70, %c0_71, %c0_72], %72 {strides = array<i32>} : memref<2x4x256xf32, #tpu.memory_space<vmem>>, vector<1x4x256xf32>,
    %73 = vector.extract_strided_slice %68 {offsets = [0, 256], sizes = [4, 256], strides = [1, 1]} : vector<4x512xf32> to vector<4x256xf32>
    %c1_73 = arith.constant 1 : index
    %c0_74 = arith.constant 0 : index
    %c0_75 = arith.constant 0 : index
    %74 = vector.load %arg10[%c1_73, %c0_74, %c0_75] : memref<2x4x256xf32, #tpu.memory_space<vmem>>, vector<1x4x256xf32>
    %75 = vector.shape_cast %74 : vector<1x4x256xf32> to vector<4x256xf32>
    %76 = vector.shape_cast %73 : vector<4x256xf32> to vector<1x4x256xf32>
    tpu.vector_store %arg10[%c1_73, %c0_74, %c0_75], %76 {strides = array<i32>} : memref<2x4x256xf32, #tpu.memory_space<vmem>>, vector<1x4x256xf32>,
    return
  }
  func.func @transform_0(%arg0: i32) -> (i32, i32, i32) {
    %c0_i32 = arith.constant 0 : i32
    %c0_i32_0 = arith.constant 0 : i32
    %c0_i32_1 = arith.constant 0 : i32
    return %arg0, %c0_i32, %c0_i32_0 : i32, i32, i32
  }
  func.func @transform_1(%arg0: i32) -> (i32, i32) {
    %c0_i32 = arith.constant 0 : i32
    %c0_i32_0 = arith.constant 0 : i32
    %c0_i32_1 = arith.constant 0 : i32
    return %c0_i32, %c0_i32_0 : i32, i32
  }
  func.func @transform_2(%arg0: i32) -> (i32, i32) {
    %c0_i32 = arith.constant 0 : i32
    %c0_i32_0 = arith.constant 0 : i32
    %c0_i32_1 = arith.constant 0 : i32
    return %c0_i32, %c0_i32_0 : i32, i32
  }
  func.func @transform_3(%arg0: i32) -> (i32, i32) {
    %c0_i32 = arith.constant 0 : i32
    %c0_i32_0 = arith.constant 0 : i32
    %c0_i32_1 = arith.constant 0 : i32
    return %c0_i32, %c0_i32_0 : i32, i32
  }
  func.func @transform_4(%arg0: i32) -> (i32, i32) {
    %c0_i32 = arith.constant 0 : i32
    %c0_i32_0 = arith.constant 0 : i32
    %c0_i32_1 = arith.constant 0 : i32
    return %c0_i32, %c0_i32_0 : i32, i32
  }
  func.func @transform_5(%arg0: i32) -> (i32, i32) {
    %c0_i32 = arith.constant 0 : i32
    %c0_i32_0 = arith.constant 0 : i32
    %c0_i32_1 = arith.constant 0 : i32
    return %c0_i32, %c0_i32_0 : i32, i32
  }
  func.func @transform_6(%arg0: i32) -> (i32, i32) {
    %c0_i32 = arith.constant 0 : i32
    %c0_i32_0 = arith.constant 0 : i32
    %c0_i32_1 = arith.constant 0 : i32
    return %c0_i32, %c0_i32_0 : i32, i32
  }
  func.func @transform_7(%arg0: i32) -> (i32, i32) {
    %c0_i32 = arith.constant 0 : i32
    %c0_i32_0 = arith.constant 0 : i32
    %c0_i32_1 = arith.constant 0 : i32
    return %c0_i32, %c0_i32_0 : i32, i32
  }
  func.func @transform_8(%arg0: i32) -> (i32, i32) {
    %c0_i32 = arith.constant 0 : i32
    %c0_i32_0 = arith.constant 0 : i32
    %c0_i32_1 = arith.constant 0 : i32
    return %c0_i32, %c0_i32_0 : i32, i32
  }
  func.func @transform_9(%arg0: i32) -> (i32, i32, i32) {
    %c0_i32 = arith.constant 0 : i32
    %c0_i32_0 = arith.constant 0 : i32
    %c0_i32_1 = arith.constant 0 : i32
    return %arg0, %c0_i32, %c0_i32_0 : i32, i32, i32
  }
}

</mosaic_0001>

<llo_original>
// kernel: fwd.1
$region0: #{fwd.1}
  #allocation0 [shape = 'u32[]', space=smem, size = 0x4, offset = 0x4, fixed_abs, tag = 'smem constant byte address 0x4 - core index']
  #allocation1 [shape = 'u32[144,128]{1,0:T(1,128)}', space=vmem, size = 0x12000, scoped, tag = 'internal scratch']
  #allocation2 [shape = 'f32[144,512]{1,0:T(8,128)}', space=vmem, size = 0x48000, scoped, tag = 'scratch operand']
  #allocation3 [shape = 'f32[288,512]{1,0:T(8,128)}', space=vmem, size = 0x90000, scoped, tag = 'scratch operand']
  %s0 = inlined_call_operand.vmem [shape: f32[2,1,32], index: 0, kind: input, shape index: {}]
  %s1 = inlined_call_operand.hbm [shape: f32[32,512], index: 1, kind: input, shape index: {}]
  %s2 = inlined_call_operand.hbm [shape: f32[16,512], index: 2, kind: input, shape index: {}]
  %s3 = inlined_call_operand.hbm [shape: f32[512,256], index: 3, kind: input, shape index: {}]
  %s4 = inlined_call_operand.hbm [shape: f32[16,256], index: 4, kind: input, shape index: {}]
  %s5 = inlined_call_operand.hbm [shape: f32[32,144], index: 5, kind: input, shape index: {}]
  %s6 = inlined_call_operand.hbm [shape: f32[32,512], index: 6, kind: input, shape index: {}]
  %s7 = inlined_call_operand.vmem [shape: f32[4,288], index: 7, kind: input, shape index: {}]
  %s8 = inlined_call_operand.vmem [shape: f32[4,512], index: 8, kind: input, shape index: {}]
  %s9 = inlined_call_operand.vmem [shape: f32[2,4,256], index: 9, kind: output, shape index: {}]
  %s10 = sld [smem:[#allocation0]]
  $region70: #{fwd.1} parent=0
    _
  %s12 = ssub.s32 1, %s10
  %s13 = scalar_select 0, %s12, %s10
  $region1: #{fwd.1} parent=0
    #allocation4 [shape = 'u8[65536]{0}', space=vmem, size = 0x10000, scoped, tag = 'input window, operand 1, single buffered']
    #allocation5 [shape = 's32[1]{0}', space=sflag, size = 0x4, scoped, tag = 'scoped memory for fwd.1']
    #allocation6 [shape = 'u8[32768]{0}', space=vmem, size = 0x8000, scoped, tag = 'input window, operand 2, single buffered']
    #allocation7 [shape = 's32[1]{0}', space=sflag, size = 0x4, scoped, tag = 'scoped memory for fwd.1']
    #allocation8 [shape = 'u8[524288]{0}', space=vmem, size = 0x80000, scoped, tag = 'input window, operand 3, single buffered']
    #allocation9 [shape = 'u8[16384]{0}', space=vmem, size = 0x4000, scoped, tag = 'input window, operand 4, single buffered']
    #allocation10 [shape = 's32[1]{0}', space=sflag, size = 0x4, scoped, tag = 'scoped memory for fwd.1']
    #allocation11 [shape = 'u8[32768]{0}', space=vmem, size = 0x8000, scoped, tag = 'input window, operand 5, single buffered']
    #allocation12 [shape = 'u8[65536]{0}', space=vmem, size = 0x10000, scoped, tag = 'input window, operand 6, single buffered']
    #allocation13 [shape = 's32[1]{0}', space=sflag, size = 0x4, scoped, tag = 'scoped memory for fwd.1']
    %14 = vsyncpa [#allocation5], 0
    %15 = vsyncpa [#allocation7], 0
    %16 = vsyncpa [#allocation10], 0
    %17 = vsyncpa [#allocation13], 0
    // Predicated region
    $region2: #{fwd.1} parent=1 // pred_check
      _
    $region3: #{fwd.1} parent=1 // pred_check_branch
      %19 = sbr.rel (0) target = $region5
    $region4: #{fwd.1} parent=1 // pred_region
      _
    $region5: #{fwd.1} parent=1 // pred_fallthru
      _
    // Predicated region
    $region6: #{fwd.1} parent=1 // pred_check
      _
    $region7: #{fwd.1} parent=1 // pred_check_branch
      %21 = sbr.rel (0) target = $region9
    $region8: #{fwd.1} parent=1 // pred_region
      %s23 = ssub.s32 2048, 2048
      %24 = vsyncadd [#allocation5], %s23
      %s25 = sshll.u32 [#allocation4], 4
      %s26 = int_to_ptr.vmem [resolvable:$true] %s25
      %31 = dma.hbm_to_vmem [thread:$0]  %s1, 2048, %s26, [#allocation5], 512, 512, 32
    $region9: #{fwd.1} parent=1 // pred_fallthru
      _
    // Predicated region
    $region10: #{fwd.1} parent=1 // pred_check
      _
    $region11: #{fwd.1} parent=1 // pred_check_branch
      %33 = sbr.rel (0) target = $region13
    $region12: #{fwd.1} parent=1 // pred_region
      %s35 = ssub.s32 1024, 1024
      %36 = vsyncadd [#allocation7], %s35
      %s37 = sshll.u32 [#allocation6], 4
      %s38 = int_to_ptr.vmem [resolvable:$true] %s37
      %43 = dma.hbm_to_vmem [thread:$0]  %s2, 1024, %s38, [#allocation7], 512, 512, 32
    $region13: #{fwd.1} parent=1 // pred_fallthru
      _
    // Predicated region
    $region14: #{fwd.1} parent=1 // pred_check
      _
    $region15: #{fwd.1} parent=1 // pred_check_branch
      %45 = sbr.rel (0) target = $region17
    $region16: #{fwd.1} parent=1 // pred_region
      %s47 = ssub.s32 16384, 16384
      %48 = vsyncadd [#allocation7], %s47
      %s49 = sshll.u32 [#allocation8], 4
      %s50 = int_to_ptr.vmem [resolvable:$true] %s49
      %55 = dma.hbm_to_vmem [thread:$0]  %s3, 16384, %s50, [#allocation7], 256, 256, 16
    $region17: #{fwd.1} parent=1 // pred_fallthru
      _
    // Predicated region
    $region18: #{fwd.1} parent=1 // pred_check
      _
    $region19: #{fwd.1} parent=1 // pred_check_branch
      %57 = sbr.rel (0) target = $region21
    $region20: #{fwd.1} parent=1 // pred_region
      %s59 = ssub.s32 512, 512
      %60 = vsyncadd [#allocation10], %s59
      %s61 = sshll.u32 [#allocation9], 4
      %s62 = int_to_ptr.vmem [resolvable:$true] %s61
      %67 = dma.hbm_to_vmem [thread:$0]  %s4, 512, %s62, [#allocation10], 256, 256, 16
    $region21: #{fwd.1} parent=1 // pred_fallthru
      _
    // Predicated region
    $region22: #{fwd.1} parent=1 // pred_check
      _
    $region23: #{fwd.1} parent=1 // pred_check_branch
      %69 = sbr.rel (0) target = $region25
    $region24: #{fwd.1} parent=1 // pred_region
      %s71 = ssub.s32 1024, 1024
      %72 = vsyncadd [#allocation10], %s71
      %s73 = sshll.u32 [#allocation11], 4
      %s74 = int_to_ptr.vmem [resolvable:$true] %s73
      %79 = dma.hbm_to_vmem [thread:$0]  %s5, 1024, %s74, [#allocation10], 256, 256, 16
    $region25: #{fwd.1} parent=1 // pred_fallthru
      _
    // Predicated region
    $region26: #{fwd.1} parent=1 // pred_check
      _
    $region27: #{fwd.1} parent=1 // pred_check_branch
      %81 = sbr.rel (0) target = $region29
    $region28: #{fwd.1} parent=1 // pred_region
      %s83 = ssub.s32 2048, 2048
      %84 = vsyncadd [#allocation13], %s83
      %s85 = sshll.u32 [#allocation12], 4
      %s86 = int_to_ptr.vmem [resolvable:$true] %s85
      %91 = dma.hbm_to_vmem [thread:$0]  %s6, 2048, %s86, [#allocation13], 512, 512, 32
    $region29: #{fwd.1} parent=1 // pred_fallthru
      _
    // Predicated region
    $region30: #{fwd.1} parent=1 // pred_check
      _
    $region31: #{fwd.1} parent=1 // pred_check_branch
      %93 = sbr.rel (0) target = $region33
    $region32: #{fwd.1} parent=1 // pred_region
      _
    $region33: #{fwd.1} parent=1 // pred_fallthru
      _
    // Predicated region
    $region34: #{fwd.1} parent=1 // pred_check
      _
    $region35: #{fwd.1} parent=1 // pred_check_branch
      %95 = sbr.rel (0) target = $region37
    $region36: #{fwd.1} parent=1 // pred_region
      _
    $region37: #{fwd.1} parent=1 // pred_fallthru
      _
    // Predicated region
    $region38: #{fwd.1} parent=1 // pred_check
      _
    $region39: #{fwd.1} parent=1 // pred_check_branch
      %97 = sbr.rel (0) target = $region41
    $region40: #{fwd.1} parent=1 // pred_region
      %98 = dma.done [#allocation5], 2048
    $region41: #{fwd.1} parent=1 // pred_fallthru
      _
    // Predicated region
    $region42: #{fwd.1} parent=1 // pred_check
      _
    $region43: #{fwd.1} parent=1 // pred_check_branch
      %100 = sbr.rel (0) target = $region45
    $region44: #{fwd.1} parent=1 // pred_region
      %101 = dma.done [#allocation7], 1024
    $region45: #{fwd.1} parent=1 // pred_fallthru
      _
    // Predicated region
    $region46: #{fwd.1} parent=1 // pred_check
      _
    $region47: #{fwd.1} parent=1 // pred_check_branch
      %103 = sbr.rel (0) target = $region49
    $region48: #{fwd.1} parent=1 // pred_region
      %104 = dma.done [#allocation7], 16384
    $region49: #{fwd.1} parent=1 // pred_fallthru
      _
    // Predicated region
    $region50: #{fwd.1} parent=1 // pred_check
      _
    $region51: #{fwd.1} parent=1 // pred_check_branch
      %106 = sbr.rel (0) target = $region53
    $region52: #{fwd.1} parent=1 // pred_region
      %107 = dma.done [#allocation10], 512
    $region53: #{fwd.1} parent=1 // pred_fallthru
      _
    // Predicated region
    $region54: #{fwd.1} parent=1 // pred_check
      _
    $region55: #{fwd.1} parent=1 // pred_check_branch
      %109 = sbr.rel (0) target = $region57
    $region56: #{fwd.1} parent=1 // pred_region
      %110 = dma.done [#allocation10], 1024
    $region57: #{fwd.1} parent=1 // pred_fallthru
      _
    // Predicated region
    $region58: #{fwd.1} parent=1 // pred_check
      _
    $region59: #{fwd.1} parent=1 // pred_check_branch
      %112 = sbr.rel (0) target = $region61
    $region60: #{fwd.1} parent=1 // pred_region
      %113 = dma.done [#allocation13], 2048
    $region61: #{fwd.1} parent=1 // pred_fallthru
      _
    %v114 = vld [vmem:[%s0] sm:$0x1]
    %v115 = vld [vmem:[#allocation4] sm:$0xff]
    %v116 = vld [vmem:[#allocation4 + $0x8] sm:$0xff]
    %v117 = vld [vmem:[#allocation4 + $0x10] sm:$0xff]
    %v118 = vld [vmem:[#allocation4 + $0x18] sm:$0xff]
    %v119 = vld [vmem:[#allocation4 + $0x20] sm:$0xff]
    %v120 = vld [vmem:[#allocation4 + $0x28] sm:$0xff]
    %v121 = vld [vmem:[#allocation4 + $0x30] sm:$0xff]
    %v122 = vld [vmem:[#allocation4 + $0x38] sm:$0xff]
    %v123 = vld [vmem:[#allocation4 + $0x40] sm:$0xff]
    %v124 = vld [vmem:[#allocation4 + $0x48] sm:$0xff]
    %v125 = vld [vmem:[#allocation4 + $0x50] sm:$0xff]
    %v126 = vld [vmem:[#allocation4 + $0x58] sm:$0xff]
    %v127 = vld [vmem:[#allocation4 + $0x60] sm:$0xff]
    %v128 = vld [vmem:[#allocation4 + $0x68] sm:$0xff]
    %v129 = vld [vmem:[#allocation4 + $0x70] sm:$0xff]
    %v130 = vld [vmem:[#allocation4 + $0x78] sm:$0xff]
    %vm131 = vcmask 261120
    %v133 = vsel %vm131, %v114, 0
    %135 = vmatprep.subr.mxu0 %v116
    %136 = vmatpush1.msra.mxu0 %v115
    %137 = vmatprep.subr.mxu0 %v120
    %138 = vmatpush1.msra.mxu0 %v119
    %139 = vmatprep.subr.mxu0 %v124
    %140 = vmatpush1.msra.mxu0 %v123
    %141 = vmatprep.subr.mxu0 %v128
    %142 = vmatpush1.msra.mxu0 %v127
    %143 = vmatprep.subr.mxu0 0.0
    %144 = vmatpush1.msra.mxu0 0.0
    %145 = vmatprep.subr.mxu0 0.0
    %146 = vmatpush1.msra.mxu0 0.0
    %147 = vmatprep.subr.mxu0 0.0
    %148 = vmatpush1.msra.mxu0 0.0
    %149 = vmatprep.subr.mxu0 0.0
    %150 = vmatpush1.msra.mxu0 0.0
    %151 = vmatprep.subr.mxu0 0.0
    %152 = vmatpush1.msra.mxu0 0.0
    %153 = vmatprep.subr.mxu0 0.0
    %154 = vmatpush1.msra.mxu0 0.0
    %155 = vmatprep.subr.mxu0 0.0
    %156 = vmatpush1.msra.mxu0 0.0
    %157 = vmatprep.subr.mxu0 0.0
    %158 = vmatpush1.msra.mxu0 0.0
    %159 = vmatprep.subr.mxu0 0.0
    %160 = vmatpush1.msra.mxu0 0.0
    %161 = vmatprep.subr.mxu0 0.0
    %162 = vmatpush1.msra.mxu0 0.0
    %163 = vmatprep.subr.mxu0 0.0
    %164 = vmatpush1.msra.mxu0 0.0
    %165 = vmatprep.subr.mxu0 0.0
    %166 = vmatpush1.msra.mxu0 0.0
    %167 = vmatprep.subr.mxu0 0.0
    %168 = vmatpush1.msra.mxu0 0.0
    %169 = vmatprep.subr.mxu0 0.0
    %170 = vmatpush1.msra.mxu0 0.0
    %171 = vmatprep.subr.mxu0 0.0
    %172 = vmatpush1.msra.mxu0 0.0
    %173 = vmatprep.subr.mxu0 0.0
    %174 = vmatpush1.msra.mxu0 0.0
    %175 = vmatprep.subr.mxu0 0.0
    %176 = vmatpush1.msra.mxu0 0.0
    %177 = vmatprep.subr.mxu0 0.0
    %178 = vmatpush1.msra.mxu0 0.0
    %179 = vmatprep.subr.mxu0 0.0
    %180 = vmatpush1.msra.mxu0 0.0
    %181 = vmatprep.subr.mxu0 0.0
    %182 = vmatpush1.msra.mxu0 0.0
    %183 = vmatprep.subr.mxu0 0.0
    %184 = vmatpush1.msra.mxu0 0.0
    %185 = vmatprep.subr.mxu0 0.0
    %186 = vmatpush1.msra.mxu0 0.0
    %187 = vmatprep.subr.mxu0 0.0
    %188 = vmatpush1.msra.mxu0 0.0
    %189 = vmatprep.subr.mxu0 0.0
    %190 = vmatpush1.msra.mxu0 0.0
    %191 = vmatprep.subr.mxu0 0.0
    %192 = vmatpush1.msra.mxu0 0.0
    %193 = vmatprep.subr.mxu0 0.0
    %194 = vmatpush1.msra.mxu0 0.0
    %195 = vmatprep.subr.mxu0 0.0
    %196 = vmatpush1.msra.mxu0 0.0
    %197 = vmatprep.subr.mxu0 0.0
    %198 = vmatpush1.msra.mxu0 0.0
    %199 = vmatprep.mubr.f32.mxu0 0.0
    %200 = vmatmul.mubr.f32.gmra.mrb[0].mxu0 %v133
    %v201 = vpop.f32.mrb[0].mxu0
    %v202 = vadd.f32 0.0, %v201
    %v203 = vpop.f32.mrb[0].mxu0
    %v204 = vadd.f32 0.0, %v203
    %205 = vdwg.mxu0
    %206 = vmatprep.subr.mxu0 %v118
    %207 = vmatpush1.msra.mxu0 %v117
    %208 = vmatprep.subr.mxu0 %v122
    %209 = vmatpush1.msra.mxu0 %v121
    %210 = vmatprep.subr.mxu0 %v126
    %211 = vmatpush1.msra.mxu0 %v125
    %212 = vmatprep.subr.mxu0 %v130
    %213 = vmatpush1.msra.mxu0 %v129
    %214 = vmatprep.subr.mxu0 0.0
    %215 = vmatpush1.msra.mxu0 0.0
    %216 = vmatprep.subr.mxu0 0.0
    %217 = vmatpush1.msra.mxu0 0.0
    %218 = vmatprep.subr.mxu0 0.0
    %219 = vmatpush1.msra.mxu0 0.0
    %220 = vmatprep.subr.mxu0 0.0
    %221 = vmatpush1.msra.mxu0 0.0
    %222 = vmatprep.subr.mxu0 0.0
    %223 = vmatpush1.msra.mxu0 0.0
    %224 = vmatprep.subr.mxu0 0.0
    %225 = vmatpush1.msra.mxu0 0.0
    %226 = vmatprep.subr.mxu0 0.0
    %227 = vmatpush1.msra.mxu0 0.0
    %228 = vmatprep.subr.mxu0 0.0
    %229 = vmatpush1.msra.mxu0 0.0
    %230 = vmatprep.subr.mxu0 0.0
    %231 = vmatpush1.msra.mxu0 0.0
    %232 = vmatprep.subr.mxu0 0.0
    %233 = vmatpush1.msra.mxu0 0.0
    %234 = vmatprep.subr.mxu0 0.0
    %235 = vmatpush1.msra.mxu0 0.0
    %236 = vmatprep.subr.mxu0 0.0
    %237 = vmatpush1.msra.mxu0 0.0
    %238 = vmatprep.subr.mxu0 0.0
    %239 = vmatpush1.msra.mxu0 0.0
    %240 = vmatprep.subr.mxu0 0.0
    %241 = vmatpush1.msra.mxu0 0.0
    %242 = vmatprep.subr.mxu0 0.0
    %243 = vmatpush1.msra.mxu0 0.0
    %244 = vmatprep.subr.mxu0 0.0
    %245 = vmatpush1.msra.mxu0 0.0
    %246 = vmatprep.subr.mxu0 0.0
    %247 = vmatpush1.msra.mxu0 0.0
    %248 = vmatprep.subr.mxu0 0.0
    %249 = vmatpush1.msra.mxu0 0.0
    %250 = vmatprep.subr.mxu0 0.0
    %251 = vmatpush1.msra.mxu0 0.0
    %252 = vmatprep.subr.mxu0 0.0
    %253 = vmatpush1.msra.mxu0 0.0
    %254 = vmatprep.subr.mxu0 0.0
    %255 = vmatpush1.msra.mxu0 0.0
    %256 = vmatprep.subr.mxu0 0.0
    %257 = vmatpush1.msra.mxu0 0.0
    %258 = vmatprep.subr.mxu0 0.0
    %259 = vmatpush1.msra.mxu0 0.0
    %260 = vmatprep.subr.mxu0 0.0
    %261 = vmatpush1.msra.mxu0 0.0
    %262 = vmatprep.subr.mxu0 0.0
    %263 = vmatpush1.msra.mxu0 0.0
    %264 = vmatprep.subr.mxu0 0.0
    %265 = vmatpush1.msra.mxu0 0.0
    %266 = vmatprep.subr.mxu0 0.0
    %267 = vmatpush1.msra.mxu0 0.0
    %268 = vmatprep.subr.mxu0 0.0
    %269 = vmatpush1.msra.mxu0 0.0
    %270 = vmatprep.mubr.f32.mxu0 0.0
    %271 = vmatmul.mubr.f32.gmra.mrb[0].mxu0 %v133
    %v272 = vpop.f32.mrb[0].mxu0
    %v273 = vadd.f32 0.0, %v272
    %v274 = vpop.f32.mrb[0].mxu0
    %v275 = vadd.f32 0.0, %v274
    %276 = vdwg.mxu0
    %v277 = vld [vmem:[#allocation6] sm:$0xff]
    %v278 = vld [vmem:[#allocation6 + $0x8] sm:$0xff]
    %v279 = vld [vmem:[#allocation6 + $0x10] sm:$0xff]
    %v280 = vld [vmem:[#allocation6 + $0x18] sm:$0xff]
    %v281 = vld [vmem:[#allocation6 + $0x20] sm:$0xff]
    %v282 = vld [vmem:[#allocation6 + $0x28] sm:$0xff]
    %v283 = vld [vmem:[#allocation6 + $0x30] sm:$0xff]
    %v284 = vld [vmem:[#allocation6 + $0x38] sm:$0xff]
    %v285 = vlaneseq
    %v286 = vshrl.u32 %v285, 7
    %v287 = vsub.s32 0, %v286
    %v288 = vrot.slane %v202, %v287
    %v289 = vlaneseq
    %v290 = vshrl.u32 %v289, 7
    %v291 = vsub.s32 0, %v290
    %v292 = vrot.slane %v204, %v291
    %v293 = vlaneseq
    %v294 = vshrl.u32 %v293, 7
    %v295 = vsub.s32 0, %v294
    %v296 = vrot.slane %v273, %v295
    %v297 = vlaneseq
    %v298 = vshrl.u32 %v297, 7
    %v299 = vsub.s32 0, %v298
    %v300 = vrot.slane %v275, %v299
    %v301 = vmul.f32 %v277, %v288
    %v302 = vmul.f32 %v278, %v292
    %v303 = vmul.f32 %v279, %v296
    %v304 = vmul.f32 %v280, %v300
    %v305 = vmul.f32 %v281, %v288
    %v306 = vmul.f32 %v282, %v292
    %v307 = vmul.f32 %v283, %v296
    %v308 = vmul.f32 %v284, %v300
    %v309 = vld [vmem:[#allocation8] sm:$0xff]
    %v310 = vld [vmem:[#allocation8 + $0x8] sm:$0xff]
    %v311 = vld [vmem:[#allocation8 + $0x10] sm:$0xff]
    %v312 = vld [vmem:[#allocation8 + $0x18] sm:$0xff]
    %v313 = vld [vmem:[#allocation8 + $0x20] sm:$0xff]
    %v314 = vld [vmem:[#allocation8 + $0x28] sm:$0xff]
    %v315 = vld [vmem:[#allocation8 + $0x30] sm:$0xff]
    %v316 = vld [vmem:[#allocation8 + $0x38] sm:$0xff]
    %v317 = vld [vmem:[#allocation8 + $0x40] sm:$0xff]
    %v318 = vld [vmem:[#allocation8 + $0x48] sm:$0xff]
    %v319 = vld [vmem:[#allocation8 + $0x50] sm:$0xff]
    %v320 = vld [vmem:[#allocation8 + $0x58] sm:$0xff]
    %v321 = vld [vmem:[#allocation8 + $0x60] sm:$0xff]
    %v322 = vld [vmem:[#allocation8 + $0x68] sm:$0xff]
    %v323 = vld [vmem:[#allocation8 + $0x70] sm:$0xff]
    %v324 = vld [vmem:[#allocation8 + $0x78] sm:$0xff]
    %v325 = vld [vmem:[#allocation8 + $0x80] sm:$0xff]
    %v326 = vld [vmem:[#allocation8 + $0x88] sm:$0xff]
    %v327 = vld [vmem:[#allocation8 + $0x90] sm:$0xff]
    %v328 = vld [vmem:[#allocation8 + $0x98] sm:$0xff]
    %v329 = vld [vmem:[#allocation8 + $0xa0] sm:$0xff]
    %v330 = vld [vmem:[#allocation8 + $0xa8] sm:$0xff]
    %v331 = vld [vmem:[#allocation8 + $0xb0] sm:$0xff]
    %v332 = vld [vmem:[#allocation8 + $0xb8] sm:$0xff]
    %v333 = vld [vmem:[#allocation8 + $0xc0] sm:$0xff]
    %v334 = vld [vmem:[#allocation8 + $0xc8] sm:$0xff]
    %v335 = vld [vmem:[#allocation8 + $0xd0] sm:$0xff]
    %v336 = vld [vmem:[#allocation8 + $0xd8] sm:$0xff]
    %v337 = vld [vmem:[#allocation8 + $0xe0] sm:$0xff]
    %v338 = vld [vmem:[#allocation8 + $0xe8] sm:$0xff]
    %v339 = vld [vmem:[#allocation8 + $0xf0] sm:$0xff]
    %v340 = vld [vmem:[#allocation8 + $0xf8] sm:$0xff]
    %v341 = vld [vmem:[#allocation8 + $0x100] sm:$0xff]
    %v342 = vld [vmem:[#allocation8 + $0x108] sm:$0xff]
    %v343 = vld [vmem:[#allocation8 + $0x110] sm:$0xff]
    %v344 = vld [vmem:[#allocation8 + $0x118] sm:$0xff]
    %v345 = vld [vmem:[#allocation8 + $0x120] sm:$0xff]
    %v346 = vld [vmem:[#allocation8 + $0x128] sm:$0xff]
    %v347 = vld [vmem:[#allocation8 + $0x130] sm:$0xff]
    %v348 = vld [vmem:[#allocation8 + $0x138] sm:$0xff]
    %v349 = vld [vmem:[#allocation8 + $0x140] sm:$0xff]
    %v350 = vld [vmem:[#allocation8 + $0x148] sm:$0xff]
    %v351 = vld [vmem:[#allocation8 + $0x150] sm:$0xff]
    %v352 = vld [vmem:[#allocation8 + $0x158] sm:$0xff]
    %v353 = vld [vmem:[#allocation8 + $0x160] sm:$0xff]
    %v354 = vld [vmem:[#allocation8 + $0x168] sm:$0xff]
    %v355 = vld [vmem:[#allocation8 + $0x170] sm:$0xff]
    %v356 = vld [vmem:[#allocation8 + $0x178] sm:$0xff]
    %v357 = vld [vmem:[#allocation8 + $0x180] sm:$0xff]
    %v358 = vld [vmem:[#allocation8 + $0x188] sm:$0xff]
    %v359 = vld [vmem:[#allocation8 + $0x190] sm:$0xff]
    %v360 = vld [vmem:[#allocation8 + $0x198] sm:$0xff]
    %v361 = vld [vmem:[#allocation8 + $0x1a0] sm:$0xff]
    %v362 = vld [vmem:[#allocation8 + $0x1a8] sm:$0xff]
    %v363 = vld [vmem:[#allocation8 + $0x1b0] sm:$0xff]
    %v364 = vld [vmem:[#allocation8 + $0x1b8] sm:$0xff]
    %v365 = vld [vmem:[#allocation8 + $0x1c0] sm:$0xff]
    %v366 = vld [vmem:[#allocation8 + $0x1c8] sm:$0xff]
    %v367 = vld [vmem:[#allocation8 + $0x1d0] sm:$0xff]
    %v368 = vld [vmem:[#allocation8 + $0x1d8] sm:$0xff]
    %v369 = vld [vmem:[#allocation8 + $0x1e0] sm:$0xff]
    %v370 = vld [vmem:[#allocation8 + $0x1e8] sm:$0xff]
    %v371 = vld [vmem:[#allocation8 + $0x1f0] sm:$0xff]
    %v372 = vld [vmem:[#allocation8 + $0x1f8] sm:$0xff]
    %v373 = vld [vmem:[#allocation8 + $0x200] sm:$0xff]
    %v374 = vld [vmem:[#allocation8 + $0x208] sm:$0xff]
    %v375 = vld [vmem:[#allocation8 + $0x210] sm:$0xff]
    %v376 = vld [vmem:[#allocation8 + $0x218] sm:$0xff]
    %v377 = vld [vmem:[#allocation8 + $0x220] sm:$0xff]
    %v378 = vld [vmem:[#allocation8 + $0x228] sm:$0xff]
    %v379 = vld [vmem:[#allocation8 + $0x230] sm:$0xff]
    %v380 = vld [vmem:[#allocation8 + $0x238] sm:$0xff]
    %v381 = vld [vmem:[#allocation8 + $0x240] sm:$0xff]
    %v382 = vld [vmem:[#allocation8 + $0x248] sm:$0xff]
    %v383 = vld [vmem:[#allocation8 + $0x250] sm:$0xff]
    %v384 = vld [vmem:[#allocation8 + $0x258] sm:$0xff]
    %v385 = vld [vmem:[#allocation8 + $0x260] sm:$0xff]
    %v386 = vld [vmem:[#allocation8 + $0x268] sm:$0xff]
    %v387 = vld [vmem:[#allocation8 + $0x270] sm:$0xff]
    %v388 = vld [vmem:[#allocation8 + $0x278] sm:$0xff]
    %v389 = vld [vmem:[#allocation8 + $0x280] sm:$0xff]
    %v390 = vld [vmem:[#allocation8 + $0x288] sm:$0xff]
    %v391 = vld [vmem:[#allocation8 + $0x290] sm:$0xff]
    %v392 = vld [vmem:[#allocation8 + $0x298] sm:$0xff]
    %v393 = vld [vmem:[#allocation8 + $0x2a0] sm:$0xff]
    %v394 = vld [vmem:[#allocation8 + $0x2a8] sm:$0xff]
    %v395 = vld [vmem:[#allocation8 + $0x2b0] sm:$0xff]
    %v396 = vld [vmem:[#allocation8 + $0x2b8] sm:$0xff]
    %v397 = vld [vmem:[#allocation8 + $0x2c0] sm:$0xff]
    %v398 = vld [vmem:[#allocation8 + $0x2c8] sm:$0xff]
    %v399 = vld [vmem:[#allocation8 + $0x2d0] sm:$0xff]
    %v400 = vld [vmem:[#allocation8 + $0x2d8] sm:$0xff]
    %v401 = vld [vmem:[#allocation8 + $0x2e0] sm:$0xff]
    %v402 = vld [vmem:[#allocation8 + $0x2e8] sm:$0xff]
    %v403 = vld [vmem:[#allocation8 + $0x2f0] sm:$0xff]
    %v404 = vld [vmem:[#allocation8 + $0x2f8] sm:$0xff]
    %v405 = vld [vmem:[#allocation8 + $0x300] sm:$0xff]
    %v406 = vld [vmem:[#allocation8 + $0x308] sm:$0xff]
    %v407 = vld [vmem:[#allocation8 + $0x310] sm:$0xff]
    %v408 = vld [vmem:[#allocation8 + $0x318] sm:$0xff]
    %v409 = vld [vmem:[#allocation8 + $0x320] sm:$0xff]
    %v410 = vld [vmem:[#allocation8 + $0x328] sm:$0xff]
    %v411 = vld [vmem:[#allocation8 + $0x330] sm:$0xff]
    %v412 = vld [vmem:[#allocation8 + $0x338] sm:$0xff]
    %v413 = vld [vmem:[#allocation8 + $0x340] sm:$0xff]
    %v414 = vld [vmem:[#allocation8 + $0x348] sm:$0xff]
    %v415 = vld [vmem:[#allocation8 + $0x350] sm:$0xff]
    %v416 = vld [vmem:[#allocation8 + $0x358] sm:$0xff]
    %v417 = vld [vmem:[#allocation8 + $0x360] sm:$0xff]
    %v418 = vld [vmem:[#allocation8 + $0x368] sm:$0xff]
    %v419 = vld [vmem:[#allocation8 + $0x370] sm:$0xff]
    %v420 = vld [vmem:[#allocation8 + $0x378] sm:$0xff]
    %v421 = vld [vmem:[#allocation8 + $0x380] sm:$0xff]
    %v422 = vld [vmem:[#allocation8 + $0x388] sm:$0xff]
    %v423 = vld [vmem:[#allocation8 + $0x390] sm:$0xff]
    %v424 = vld [vmem:[#allocation8 + $0x398] sm:$0xff]
    %v425 = vld [vmem:[#allocation8 + $0x3a0] sm:$0xff]
    %v426 = vld [vmem:[#allocation8 + $0x3a8] sm:$0xff]
    %v427 = vld [vmem:[#allocation8 + $0x3b0] sm:$0xff]
    %v428 = vld [vmem:[#allocation8 + $0x3b8] sm:$0xff]
    %v429 = vld [vmem:[#allocation8 + $0x3c0] sm:$0xff]
    %v430 = vld [vmem:[#allocation8 + $0x3c8] sm:$0xff]
    %v431 = vld [vmem:[#allocation8 + $0x3d0] sm:$0xff]
    %v432 = vld [vmem:[#allocation8 + $0x3d8] sm:$0xff]
    %v433 = vld [vmem:[#allocation8 + $0x3e0] sm:$0xff]
    %v434 = vld [vmem:[#allocation8 + $0x3e8] sm:$0xff]
    %v435 = vld [vmem:[#allocation8 + $0x3f0] sm:$0xff]
    %v436 = vld [vmem:[#allocation8 + $0x3f8] sm:$0xff]
    %v437 = vld [vmem:[#allocation9] sm:$0xff]
    %v438 = vld [vmem:[#allocation9 + $0x8] sm:$0xff]
    %v439 = vld [vmem:[#allocation9 + $0x10] sm:$0xff]
    %v440 = vld [vmem:[#allocation9 + $0x18] sm:$0xff]
    %441 = vmatprep.subr.mxu0 %v310
    %442 = vmatpush1.msra.mxu0 %v309
    %443 = vmatprep.subr.mxu0 %v312
    %444 = vmatpush1.msra.mxu0 %v311
    %445 = vmatprep.subr.mxu0 %v314
    %446 = vmatpush1.msra.mxu0 %v313
    %447 = vmatprep.subr.mxu0 %v316
    %448 = vmatpush1.msra.mxu0 %v315
    %449 = vmatprep.subr.mxu0 %v318
    %450 = vmatpush1.msra.mxu0 %v317
    %451 = vmatprep.subr.mxu0 %v320
    %452 = vmatpush1.msra.mxu0 %v319
    %453 = vmatprep.subr.mxu0 %v322
    %454 = vmatpush1.msra.mxu0 %v321
    %455 = vmatprep.subr.mxu0 %v324
    %456 = vmatpush1.msra.mxu0 %v323
    %457 = vmatprep.subr.mxu0 %v326
    %458 = vmatpush1.msra.mxu0 %v325
    %459 = vmatprep.subr.mxu0 %v328
    %460 = vmatpush1.msra.mxu0 %v327
    %461 = vmatprep.subr.mxu0 %v330
    %462 = vmatpush1.msra.mxu0 %v329
    %463 = vmatprep.subr.mxu0 %v332
    %464 = vmatpush1.msra.mxu0 %v331
    %465 = vmatprep.subr.mxu0 %v334
    %466 = vmatpush1.msra.mxu0 %v333
    %467 = vmatprep.subr.mxu0 %v336
    %468 = vmatpush1.msra.mxu0 %v335
    %469 = vmatprep.subr.mxu0 %v338
    %470 = vmatpush1.msra.mxu0 %v337
    %471 = vmatprep.subr.mxu0 %v340
    %472 = vmatpush1.msra.mxu0 %v339
    %473 = vmatprep.subr.mxu0 %v342
    %474 = vmatpush1.msra.mxu0 %v341
    %475 = vmatprep.subr.mxu0 %v344
    %476 = vmatpush1.msra.mxu0 %v343
    %477 = vmatprep.subr.mxu0 %v346
    %478 = vmatpush1.msra.mxu0 %v345
    %479 = vmatprep.subr.mxu0 %v348
    %480 = vmatpush1.msra.mxu0 %v347
    %481 = vmatprep.subr.mxu0 %v350
    %482 = vmatpush1.msra.mxu0 %v349
    %483 = vmatprep.subr.mxu0 %v352
    %484 = vmatpush1.msra.mxu0 %v351
    %485 = vmatprep.subr.mxu0 %v354
    %486 = vmatpush1.msra.mxu0 %v353
    %487 = vmatprep.subr.mxu0 %v356
    %488 = vmatpush1.msra.mxu0 %v355
    %489 = vmatprep.subr.mxu0 %v358
    %490 = vmatpush1.msra.mxu0 %v357
    %491 = vmatprep.subr.mxu0 %v360
    %492 = vmatpush1.msra.mxu0 %v359
    %493 = vmatprep.subr.mxu0 %v362
    %494 = vmatpush1.msra.mxu0 %v361
    %495 = vmatprep.subr.mxu0 %v364
    %496 = vmatpush1.msra.mxu0 %v363
    %497 = vmatprep.subr.mxu0 %v366
    %498 = vmatpush1.msra.mxu0 %v365
    %499 = vmatprep.subr.mxu0 %v368
    %500 = vmatpush1.msra.mxu0 %v367
    %501 = vmatprep.subr.mxu0 %v370
    %502 = vmatpush1.msra.mxu0 %v369
    %503 = vmatprep.subr.mxu0 %v372
    %504 = vmatpush1.msra.mxu0 %v371
    %505 = vmatprep.mubr.f32.mxu0 %v302
    %506 = vmatmul.mubr.f32.gmra.mrb[0].mxu0 %v301
    %v507 = vpop.f32.mrb[0].mxu0
    %v508 = vadd.f32 %v437, %v507
    %v509 = vpop.f32.mrb[0].mxu0
    %v510 = vadd.f32 %v438, %v509
    %511 = vmatprep.mubr.f32.mxu0 %v306
    %512 = vmatmul.mubr.f32.gmra.mrb[0].mxu0 %v305
    %v513 = vpop.f32.mrb[0].mxu0
    %v514 = vadd.f32 %v439, %v513
    %v515 = vpop.f32.mrb[0].mxu0
    %v516 = vadd.f32 %v440, %v515
    %517 = vdwg.mxu0
    %518 = vmatprep.subr.mxu0 %v374
    %519 = vmatpush1.msra.mxu0 %v373
    %520 = vmatprep.subr.mxu0 %v376
    %521 = vmatpush1.msra.mxu0 %v375
    %522 = vmatprep.subr.mxu0 %v378
    %523 = vmatpush1.msra.mxu0 %v377
    %524 = vmatprep.subr.mxu0 %v380
    %525 = vmatpush1.msra.mxu0 %v379
    %526 = vmatprep.subr.mxu0 %v382
    %527 = vmatpush1.msra.mxu0 %v381
    %528 = vmatprep.subr.mxu0 %v384
    %529 = vmatpush1.msra.mxu0 %v383
    %530 = vmatprep.subr.mxu0 %v386
    %531 = vmatpush1.msra.mxu0 %v385
    %532 = vmatprep.subr.mxu0 %v388
    %533 = vmatpush1.msra.mxu0 %v387
    %534 = vmatprep.subr.mxu0 %v390
    %535 = vmatpush1.msra.mxu0 %v389
    %536 = vmatprep.subr.mxu0 %v392
    %537 = vmatpush1.msra.mxu0 %v391
    %538 = vmatprep.subr.mxu0 %v394
    %539 = vmatpush1.msra.mxu0 %v393
    %540 = vmatprep.subr.mxu0 %v396
    %541 = vmatpush1.msra.mxu0 %v395
    %542 = vmatprep.subr.mxu0 %v398
    %543 = vmatpush1.msra.mxu0 %v397
    %544 = vmatprep.subr.mxu0 %v400
    %545 = vmatpush1.msra.mxu0 %v399
    %546 = vmatprep.subr.mxu0 %v402
    %547 = vmatpush1.msra.mxu0 %v401
    %548 = vmatprep.subr.mxu0 %v404
    %549 = vmatpush1.msra.mxu0 %v403
    %550 = vmatprep.subr.mxu0 %v406
    %551 = vmatpush1.msra.mxu0 %v405
    %552 = vmatprep.subr.mxu0 %v408
    %553 = vmatpush1.msra.mxu0 %v407
    %554 = vmatprep.subr.mxu0 %v410
    %555 = vmatpush1.msra.mxu0 %v409
    %556 = vmatprep.subr.mxu0 %v412
    %557 = vmatpush1.msra.mxu0 %v411
    %558 = vmatprep.subr.mxu0 %v414
    %559 = vmatpush1.msra.mxu0 %v413
    %560 = vmatprep.subr.mxu0 %v416
    %561 = vmatpush1.msra.mxu0 %v415
    %562 = vmatprep.subr.mxu0 %v418
    %563 = vmatpush1.msra.mxu0 %v417
    %564 = vmatprep.subr.mxu0 %v420
    %565 = vmatpush1.msra.mxu0 %v419
    %566 = vmatprep.subr.mxu0 %v422
    %567 = vmatpush1.msra.mxu0 %v421
    %568 = vmatprep.subr.mxu0 %v424
    %569 = vmatpush1.msra.mxu0 %v423
    %570 = vmatprep.subr.mxu0 %v426
    %571 = vmatpush1.msra.mxu0 %v425
    %572 = vmatprep.subr.mxu0 %v428
    %573 = vmatpush1.msra.mxu0 %v427
    %574 = vmatprep.subr.mxu0 %v430
    %575 = vmatpush1.msra.mxu0 %v429
    %576 = vmatprep.subr.mxu0 %v432
    %577 = vmatpush1.msra.mxu0 %v431
    %578 = vmatprep.subr.mxu0 %v434
    %579 = vmatpush1.msra.mxu0 %v433
    %580 = vmatprep.subr.mxu0 %v436
    %581 = vmatpush1.msra.mxu0 %v435
    %582 = vmatprep.mubr.f32.mxu0 %v304
    %583 = vmatmul.mubr.f32.gmra.mrb[0].mxu0 %v303
    %v584 = vpop.f32.mrb[0].mxu0
    %v585 = vadd.f32 %v508, %v584
    %v586 = vpop.f32.mrb[0].mxu0
    %v587 = vadd.f32 %v510, %v586
    %588 = vmatprep.mubr.f32.mxu0 %v308
    %589 = vmatmul.mubr.f32.gmra.mrb[0].mxu0 %v307
    %v590 = vpop.f32.mrb[0].mxu0
    %v591 = vadd.f32 %v514, %v590
    %v592 = vpop.f32.mrb[0].mxu0
    %v593 = vadd.f32 %v516, %v592
    %594 = vdwg.mxu0
    %s595 = scalar_lea.vmem %s0, 1
    %v596 = vld [vmem:[%s595] sm:$0x1]
    %v598 = vsel %vm131, %v596, 0
    %600 = vmatprep.subr.mxu0 %v116
    %601 = vmatpush1.msra.mxu0 %v115
    %602 = vmatprep.subr.mxu0 %v120
    %603 = vmatpush1.msra.mxu0 %v119
    %604 = vmatprep.subr.mxu0 %v124
    %605 = vmatpush1.msra.mxu0 %v123
    %606 = vmatprep.subr.mxu0 %v128
    %607 = vmatpush1.msra.mxu0 %v127
    %608 = vmatprep.subr.mxu0 0.0
    %609 = vmatpush1.msra.mxu0 0.0
    %610 = vmatprep.subr.mxu0 0.0
    %611 = vmatpush1.msra.mxu0 0.0
    %612 = vmatprep.subr.mxu0 0.0
    %613 = vmatpush1.msra.mxu0 0.0
    %614 = vmatprep.subr.mxu0 0.0
    %615 = vmatpush1.msra.mxu0 0.0
    %616 = vmatprep.subr.mxu0 0.0
    %617 = vmatpush1.msra.mxu0 0.0
    %618 = vmatprep.subr.mxu0 0.0
    %619 = vmatpush1.msra.mxu0 0.0
    %620 = vmatprep.subr.mxu0 0.0
    %621 = vmatpush1.msra.mxu0 0.0
    %622 = vmatprep.subr.mxu0 0.0
    %623 = vmatpush1.msra.mxu0 0.0
    %624 = vmatprep.subr.mxu0 0.0
    %625 = vmatpush1.msra.mxu0 0.0
    %626 = vmatprep.subr.mxu0 0.0
    %627 = vmatpush1.msra.mxu0 0.0
    %628 = vmatprep.subr.mxu0 0.0
    %629 = vmatpush1.msra.mxu0 0.0
    %630 = vmatprep.subr.mxu0 0.0
    %631 = vmatpush1.msra.mxu0 0.0
    %632 = vmatprep.subr.mxu0 0.0
    %633 = vmatpush1.msra.mxu0 0.0
    %634 = vmatprep.subr.mxu0 0.0
    %635 = vmatpush1.msra.mxu0 0.0
    %636 = vmatprep.subr.mxu0 0.0
    %637 = vmatpush1.msra.mxu0 0.0
    %638 = vmatprep.subr.mxu0 0.0
    %639 = vmatpush1.msra.mxu0 0.0
    %640 = vmatprep.subr.mxu0 0.0
    %641 = vmatpush1.msra.mxu0 0.0
    %642 = vmatprep.subr.mxu0 0.0
    %643 = vmatpush1.msra.mxu0 0.0
    %644 = vmatprep.subr.mxu0 0.0
    %645 = vmatpush1.msra.mxu0 0.0
    %646 = vmatprep.subr.mxu0 0.0
    %647 = vmatpush1.msra.mxu0 0.0
    %648 = vmatprep.subr.mxu0 0.0
    %649 = vmatpush1.msra.mxu0 0.0
    %650 = vmatprep.subr.mxu0 0.0
    %651 = vmatpush1.msra.mxu0 0.0
    %652 = vmatprep.subr.mxu0 0.0
    %653 = vmatpush1.msra.mxu0 0.0
    %654 = vmatprep.subr.mxu0 0.0
    %655 = vmatpush1.msra.mxu0 0.0
    %656 = vmatprep.subr.mxu0 0.0
    %657 = vmatpush1.msra.mxu0 0.0
    %658 = vmatprep.subr.mxu0 0.0
    %659 = vmatpush1.msra.mxu0 0.0
    %660 = vmatprep.subr.mxu0 0.0
    %661 = vmatpush1.msra.mxu0 0.0
    %662 = vmatprep.subr.mxu0 0.0
    %663 = vmatpush1.msra.mxu0 0.0
    %664 = vmatprep.mubr.f32.mxu0 0.0
    %665 = vmatmul.mubr.f32.gmra.mrb[0].mxu0 %v598
    %v666 = vpop.f32.mrb[0].mxu0
    %v667 = vadd.f32 0.0, %v666
    %v668 = vpop.f32.mrb[0].mxu0
    %v669 = vadd.f32 0.0, %v668
    %670 = vdwg.mxu0
    %671 = vmatprep.subr.mxu0 %v118
    %672 = vmatpush1.msra.mxu0 %v117
    %673 = vmatprep.subr.mxu0 %v122
    %674 = vmatpush1.msra.mxu0 %v121
    %675 = vmatprep.subr.mxu0 %v126
    %676 = vmatpush1.msra.mxu0 %v125
    %677 = vmatprep.subr.mxu0 %v130
    %678 = vmatpush1.msra.mxu0 %v129
    %679 = vmatprep.subr.mxu0 0.0
    %680 = vmatpush1.msra.mxu0 0.0
    %681 = vmatprep.subr.mxu0 0.0
    %682 = vmatpush1.msra.mxu0 0.0
    %683 = vmatprep.subr.mxu0 0.0
    %684 = vmatpush1.msra.mxu0 0.0
    %685 = vmatprep.subr.mxu0 0.0
    %686 = vmatpush1.msra.mxu0 0.0
    %687 = vmatprep.subr.mxu0 0.0
    %688 = vmatpush1.msra.mxu0 0.0
    %689 = vmatprep.subr.mxu0 0.0
    %690 = vmatpush1.msra.mxu0 0.0
    %691 = vmatprep.subr.mxu0 0.0
    %692 = vmatpush1.msra.mxu0 0.0
    %693 = vmatprep.subr.mxu0 0.0
    %694 = vmatpush1.msra.mxu0 0.0
    %695 = vmatprep.subr.mxu0 0.0
    %696 = vmatpush1.msra.mxu0 0.0
    %697 = vmatprep.subr.mxu0 0.0
    %698 = vmatpush1.msra.mxu0 0.0
    %699 = vmatprep.subr.mxu0 0.0
    %700 = vmatpush1.msra.mxu0 0.0
    %701 = vmatprep.subr.mxu0 0.0
    %702 = vmatpush1.msra.mxu0 0.0
    %703 = vmatprep.subr.mxu0 0.0
    %704 = vmatpush1.msra.mxu0 0.0
    %705 = vmatprep.subr.mxu0 0.0
    %706 = vmatpush1.msra.mxu0 0.0
    %707 = vmatprep.subr.mxu0 0.0
    %708 = vmatpush1.msra.mxu0 0.0
    %709 = vmatprep.subr.mxu0 0.0
    %710 = vmatpush1.msra.mxu0 0.0
    %711 = vmatprep.subr.mxu0 0.0
    %712 = vmatpush1.msra.mxu0 0.0
    %713 = vmatprep.subr.mxu0 0.0
    %714 = vmatpush1.msra.mxu0 0.0
    %715 = vmatprep.subr.mxu0 0.0
    %716 = vmatpush1.msra.mxu0 0.0
    %717 = vmatprep.subr.mxu0 0.0
    %718 = vmatpush1.msra.mxu0 0.0
    %719 = vmatprep.subr.mxu0 0.0
    %720 = vmatpush1.msra.mxu0 0.0
    %721 = vmatprep.subr.mxu0 0.0
    %722 = vmatpush1.msra.mxu0 0.0
    %723 = vmatprep.subr.mxu0 0.0
    %724 = vmatpush1.msra.mxu0 0.0
    %725 = vmatprep.subr.mxu0 0.0
    %726 = vmatpush1.msra.mxu0 0.0
    %727 = vmatprep.subr.mxu0 0.0
    %728 = vmatpush1.msra.mxu0 0.0
    %729 = vmatprep.subr.mxu0 0.0
    %730 = vmatpush1.msra.mxu0 0.0
    %731 = vmatprep.subr.mxu0 0.0
    %732 = vmatpush1.msra.mxu0 0.0
    %733 = vmatprep.subr.mxu0 0.0
    %734 = vmatpush1.msra.mxu0 0.0
    %735 = vmatprep.mubr.f32.mxu0 0.0
    %736 = vmatmul.mubr.f32.gmra.mrb[0].mxu0 %v598
    %v737 = vpop.f32.mrb[0].mxu0
    %v738 = vadd.f32 0.0, %v737
    %v739 = vpop.f32.mrb[0].mxu0
    %v740 = vadd.f32 0.0, %v739
    %741 = vdwg.mxu0
    %v742 = vlaneseq
    %v743 = vshrl.u32 %v742, 7
    %v744 = vsub.s32 0, %v743
    %v745 = vrot.slane %v667, %v744
    %v746 = vlaneseq
    %v747 = vshrl.u32 %v746, 7
    %v748 = vsub.s32 0, %v747
    %v749 = vrot.slane %v669, %v748
    %v750 = vlaneseq
    %v751 = vshrl.u32 %v750, 7
    %v752 = vsub.s32 0, %v751
    %v753 = vrot.slane %v738, %v752
    %v754 = vlaneseq
    %v755 = vshrl.u32 %v754, 7
    %v756 = vsub.s32 0, %v755
    %v757 = vrot.slane %v740, %v756
    %v758 = vmul.f32 %v277, %v745
    %v759 = vmul.f32 %v278, %v749
    %v760 = vmul.f32 %v279, %v753
    %v761 = vmul.f32 %v280, %v757
    %v762 = vmul.f32 %v281, %v745
    %v763 = vmul.f32 %v282, %v749
    %v764 = vmul.f32 %v283, %v753
    %v765 = vmul.f32 %v284, %v757
    %766 = vmatprep.subr.mxu0 %v310
    %767 = vmatpush1.msra.mxu0 %v309
    %768 = vmatprep.subr.mxu0 %v312
    %769 = vmatpush1.msra.mxu0 %v311
    %770 = vmatprep.subr.mxu0 %v314
    %771 = vmatpush1.msra.mxu0 %v313
    %772 = vmatprep.subr.mxu0 %v316
    %773 = vmatpush1.msra.mxu0 %v315
    %774 = vmatprep.subr.mxu0 %v318
    %775 = vmatpush1.msra.mxu0 %v317
    %776 = vmatprep.subr.mxu0 %v320
    %777 = vmatpush1.msra.mxu0 %v319
    %778 = vmatprep.subr.mxu0 %v322
    %779 = vmatpush1.msra.mxu0 %v321
    %780 = vmatprep.subr.mxu0 %v324
    %781 = vmatpush1.msra.mxu0 %v323
    %782 = vmatprep.subr.mxu0 %v326
    %783 = vmatpush1.msra.mxu0 %v325
    %784 = vmatprep.subr.mxu0 %v328
    %785 = vmatpush1.msra.mxu0 %v327
    %786 = vmatprep.subr.mxu0 %v330
    %787 = vmatpush1.msra.mxu0 %v329
    %788 = vmatprep.subr.mxu0 %v332
    %789 = vmatpush1.msra.mxu0 %v331
    %790 = vmatprep.subr.mxu0 %v334
    %791 = vmatpush1.msra.mxu0 %v333
    %792 = vmatprep.subr.mxu0 %v336
    %793 = vmatpush1.msra.mxu0 %v335
    %794 = vmatprep.subr.mxu0 %v338
    %795 = vmatpush1.msra.mxu0 %v337
    %796 = vmatprep.subr.mxu0 %v340
    %797 = vmatpush1.msra.mxu0 %v339
    %798 = vmatprep.subr.mxu0 %v342
    %799 = vmatpush1.msra.mxu0 %v341
    %800 = vmatprep.subr.mxu0 %v344
    %801 = vmatpush1.msra.mxu0 %v343
    %802 = vmatprep.subr.mxu0 %v346
    %803 = vmatpush1.msra.mxu0 %v345
    %804 = vmatprep.subr.mxu0 %v348
    %805 = vmatpush1.msra.mxu0 %v347
    %806 = vmatprep.subr.mxu0 %v350
    %807 = vmatpush1.msra.mxu0 %v349
    %808 = vmatprep.subr.mxu0 %v352
    %809 = vmatpush1.msra.mxu0 %v351
    %810 = vmatprep.subr.mxu0 %v354
    %811 = vmatpush1.msra.mxu0 %v353
    %812 = vmatprep.subr.mxu0 %v356
    %813 = vmatpush1.msra.mxu0 %v355
    %814 = vmatprep.subr.mxu0 %v358
    %815 = vmatpush1.msra.mxu0 %v357
    %816 = vmatprep.subr.mxu0 %v360
    %817 = vmatpush1.msra.mxu0 %v359
    %818 = vmatprep.subr.mxu0 %v362
    %819 = vmatpush1.msra.mxu0 %v361
    %820 = vmatprep.subr.mxu0 %v364
    %821 = vmatpush1.msra.mxu0 %v363
    %822 = vmatprep.subr.mxu0 %v366
    %823 = vmatpush1.msra.mxu0 %v365
    %824 = vmatprep.subr.mxu0 %v368
    %825 = vmatpush1.msra.mxu0 %v367
    %826 = vmatprep.subr.mxu0 %v370
    %827 = vmatpush1.msra.mxu0 %v369
    %828 = vmatprep.subr.mxu0 %v372
    %829 = vmatpush1.msra.mxu0 %v371
    %830 = vmatprep.mubr.f32.mxu0 %v759
    %831 = vmatmul.mubr.f32.gmra.mrb[0].mxu0 %v758
    %v832 = vpop.f32.mrb[0].mxu0
    %v833 = vadd.f32 %v437, %v832
    %v834 = vpop.f32.mrb[0].mxu0
    %v835 = vadd.f32 %v438, %v834
    %836 = vmatprep.mubr.f32.mxu0 %v763
    %837 = vmatmul.mubr.f32.gmra.mrb[0].mxu0 %v762
    %v838 = vpop.f32.mrb[0].mxu0
    %v839 = vadd.f32 %v439, %v838
    %v840 = vpop.f32.mrb[0].mxu0
    %v841 = vadd.f32 %v440, %v840
    %842 = vdwg.mxu0
    %843 = vmatprep.subr.mxu0 %v374
    %844 = vmatpush1.msra.mxu0 %v373
    %845 = vmatprep.subr.mxu0 %v376
    %846 = vmatpush1.msra.mxu0 %v375
    %847 = vmatprep.subr.mxu0 %v378
    %848 = vmatpush1.msra.mxu0 %v377
    %849 = vmatprep.subr.mxu0 %v380
    %850 = vmatpush1.msra.mxu0 %v379
    %851 = vmatprep.subr.mxu0 %v382
    %852 = vmatpush1.msra.mxu0 %v381
    %853 = vmatprep.subr.mxu0 %v384
    %854 = vmatpush1.msra.mxu0 %v383
    %855 = vmatprep.subr.mxu0 %v386
    %856 = vmatpush1.msra.mxu0 %v385
    %857 = vmatprep.subr.mxu0 %v388
    %858 = vmatpush1.msra.mxu0 %v387
    %859 = vmatprep.subr.mxu0 %v390
    %860 = vmatpush1.msra.mxu0 %v389
    %861 = vmatprep.subr.mxu0 %v392
    %862 = vmatpush1.msra.mxu0 %v391
    %863 = vmatprep.subr.mxu0 %v394
    %864 = vmatpush1.msra.mxu0 %v393
    %865 = vmatprep.subr.mxu0 %v396
    %866 = vmatpush1.msra.mxu0 %v395
    %867 = vmatprep.subr.mxu0 %v398
    %868 = vmatpush1.msra.mxu0 %v397
    %869 = vmatprep.subr.mxu0 %v400
    %870 = vmatpush1.msra.mxu0 %v399
    %871 = vmatprep.subr.mxu0 %v402
    %872 = vmatpush1.msra.mxu0 %v401
    %873 = vmatprep.subr.mxu0 %v404
    %874 = vmatpush1.msra.mxu0 %v403
    %875 = vmatprep.subr.mxu0 %v406
    %876 = vmatpush1.msra.mxu0 %v405
    %877 = vmatprep.subr.mxu0 %v408
    %878 = vmatpush1.msra.mxu0 %v407
    %879 = vmatprep.subr.mxu0 %v410
    %880 = vmatpush1.msra.mxu0 %v409
    %881 = vmatprep.subr.mxu0 %v412
    %882 = vmatpush1.msra.mxu0 %v411
    %883 = vmatprep.subr.mxu0 %v414
    %884 = vmatpush1.msra.mxu0 %v413
    %885 = vmatprep.subr.mxu0 %v416
    %886 = vmatpush1.msra.mxu0 %v415
    %887 = vmatprep.subr.mxu0 %v418
    %888 = vmatpush1.msra.mxu0 %v417
    %889 = vmatprep.subr.mxu0 %v420
    %890 = vmatpush1.msra.mxu0 %v419
    %891 = vmatprep.subr.mxu0 %v422
    %892 = vmatpush1.msra.mxu0 %v421
    %893 = vmatprep.subr.mxu0 %v424
    %894 = vmatpush1.msra.mxu0 %v423
    %895 = vmatprep.subr.mxu0 %v426
    %896 = vmatpush1.msra.mxu0 %v425
    %897 = vmatprep.subr.mxu0 %v428
    %898 = vmatpush1.msra.mxu0 %v427
    %899 = vmatprep.subr.mxu0 %v430
    %900 = vmatpush1.msra.mxu0 %v429
    %901 = vmatprep.subr.mxu0 %v432
    %902 = vmatpush1.msra.mxu0 %v431
    %903 = vmatprep.subr.mxu0 %v434
    %904 = vmatpush1.msra.mxu0 %v433
    %905 = vmatprep.subr.mxu0 %v436
    %906 = vmatpush1.msra.mxu0 %v435
    %907 = vmatprep.mubr.f32.mxu0 %v761
    %908 = vmatmul.mubr.f32.gmra.mrb[0].mxu0 %v760
    %v909 = vpop.f32.mrb[0].mxu0
    %v910 = vadd.f32 %v833, %v909
    %v911 = vpop.f32.mrb[0].mxu0
    %v912 = vadd.f32 %v835, %v911
    %913 = vmatprep.mubr.f32.mxu0 %v765
    %914 = vmatmul.mubr.f32.gmra.mrb[0].mxu0 %v764
    %v915 = vpop.f32.mrb[0].mxu0
    %v916 = vadd.f32 %v839, %v915
    %v917 = vpop.f32.mrb[0].mxu0
    %v918 = vadd.f32 %v841, %v917
    %919 = vdwg.mxu0
    %920 = vst [vmem:[#allocation2] sm:$0xff] %v585
    %921 = vst [vmem:[#allocation2 + $0x8] sm:$0xff] %v587
    %922 = vst [vmem:[#allocation2 + $0x10] sm:$0xff] %v910
    %923 = vst [vmem:[#allocation2 + $0x18] sm:$0xff] %v912
    %924 = vst [vmem:[#allocation2 + $0x20] sm:$0xff] %v591
    %925 = vst [vmem:[#allocation2 + $0x28] sm:$0xff] %v593
    %926 = vst [vmem:[#allocation2 + $0x30] sm:$0xff] %v916
    %927 = vst [vmem:[#allocation2 + $0x38] sm:$0xff] %v918
    %928 = vrot.lane.b32.xlu0 %v585, 1
    %v929 = vpop.permute.xlu0 %928
    %930 = vrot.lane.b32.xlu0 %v591, 1
    %v931 = vpop.permute.xlu0 %930
    %932 = vrot.lane.b32.xlu0 %v587, 1
    %v933 = vpop.permute.xlu0 %932
    %934 = vrot.lane.b32.xlu0 %v593, 1
    %v935 = vpop.permute.xlu0 %934
    %936 = vrot.lane.b32.xlu0 %v910, 1
    %v937 = vpop.permute.xlu0 %936
    %938 = vrot.lane.b32.xlu0 %v916, 1
    %v939 = vpop.permute.xlu0 %938
    %940 = vrot.lane.b32.xlu0 %v912, 1
    %v941 = vpop.permute.xlu0 %940
    %942 = vrot.lane.b32.xlu0 %v918, 1
    %v943 = vpop.permute.xlu0 %942
    %v944 = vlaneseq
    %v945 = vand.u32 %v944, 127
    %vm946 = vcmp.lt.s32.totalorder %v945, 1
    %v947 = vsel %vm946, %v937, %v941
    %v948 = vsel %vm946, %v939, %v943
    %v949 = vsel %vm946, %v933, %v937
    %v950 = vsel %vm946, %v935, %v939
    %v951 = vsel %vm946, %v929, %v933
    %v952 = vsel %vm946, %v931, %v935
    %v953 = vsel %vm946, %v941, %v929
    %v954 = vsel %vm946, %v943, %v931
    %955 = vst [vmem:[#allocation2 + $0x40] sm:$0xff] %v953
    %956 = vst [vmem:[#allocation2 + $0x48] sm:$0xff] %v951
    %957 = vst [vmem:[#allocation2 + $0x50] sm:$0xff] %v949
    %958 = vst [vmem:[#allocation2 + $0x58] sm:$0xff] %v947
    %959 = vst [vmem:[#allocation2 + $0x60] sm:$0xff] %v954
    %960 = vst [vmem:[#allocation2 + $0x68] sm:$0xff] %v952
    %961 = vst [vmem:[#allocation2 + $0x70] sm:$0xff] %v950
    %962 = vst [vmem:[#allocation2 + $0x78] sm:$0xff] %v948
    %963 = vrot.lane.b32.xlu0 %v585, 2
    %v964 = vpop.permute.xlu0 %963
    %965 = vrot.lane.b32.xlu0 %v591, 2
    %v966 = vpop.permute.xlu0 %965
    %967 = vrot.lane.b32.xlu0 %v587, 2
    %v968 = vpop.permute.xlu0 %967
    %969 = vrot.lane.b32.xlu0 %v593, 2
    %v970 = vpop.permute.xlu0 %969
    %971 = vrot.lane.b32.xlu0 %v910, 2
    %v972 = vpop.permute.xlu0 %971
    %973 = vrot.lane.b32.xlu0 %v916, 2
    %v974 = vpop.permute.xlu0 %973
    %975 = vrot.lane.b32.xlu0 %v912, 2
    %v976 = vpop.permute.xlu0 %975
    %977 = vrot.lane.b32.xlu0 %v918, 2
    %v978 = vpop.permute.xlu0 %977
    %vm979 = vcmp.lt.s32.totalorder %v945, 2
    %v980 = vsel %vm979, %v972, %v976
    %v981 = vsel %vm979, %v974, %v978
    %v982 = vsel %vm979, %v968, %v972
    %v983 = vsel %vm979, %v970, %v974
    %v984 = vsel %vm979, %v964, %v968
    %v985 = vsel %vm979, %v966, %v970
    %v986 = vsel %vm979, %v976, %v964
    %v987 = vsel %vm979, %v978, %v966
    %988 = vst [vmem:[#allocation2 + $0x80] sm:$0xff] %v986
    %989 = vst [vmem:[#allocation2 + $0x88] sm:$0xff] %v984
    %990 = vst [vmem:[#allocation2 + $0x90] sm:$0xff] %v982
    %991 = vst [vmem:[#allocation2 + $0x98] sm:$0xff] %v980
    %992 = vst [vmem:[#allocation2 + $0xa0] sm:$0xff] %v987
    %993 = vst [vmem:[#allocation2 + $0xa8] sm:$0xff] %v985
    %994 = vst [vmem:[#allocation2 + $0xb0] sm:$0xff] %v983
    %995 = vst [vmem:[#allocation2 + $0xb8] sm:$0xff] %v981
    %996 = vrot.lane.b32.xlu0 %v585, 16
    %v997 = vpop.permute.xlu0 %996
    %998 = vrot.lane.b32.xlu0 %v591, 16
    %v999 = vpop.permute.xlu0 %998
    %1000 = vrot.lane.b32.xlu0 %v587, 16
    %v1001 = vpop.permute.xlu0 %1000
    %1002 = vrot.lane.b32.xlu0 %v593, 16
    %v1003 = vpop.permute.xlu0 %1002
    %1004 = vrot.lane.b32.xlu0 %v910, 16
    %v1005 = vpop.permute.xlu0 %1004
    %1006 = vrot.lane.b32.xlu0 %v916, 16
    %v1007 = vpop.permute.xlu0 %1006
    %1008 = vrot.lane.b32.xlu0 %v912, 16
    %v1009 = vpop.permute.xlu0 %1008
    %1010 = vrot.lane.b32.xlu0 %v918, 16
    %v1011 = vpop.permute.xlu0 %1010
    %vm1012 = vcmp.lt.s32.totalorder %v945, 16
    %v1013 = vsel %vm1012, %v1005, %v1009
    %v1014 = vsel %vm1012, %v1007, %v1011
    %v1015 = vsel %vm1012, %v1001, %v1005
    %v1016 = vsel %vm1012, %v1003, %v1007
    %v1017 = vsel %vm1012, %v997, %v1001
    %v1018 = vsel %vm1012, %v999, %v1003
    %v1019 = vsel %vm1012, %v1009, %v997
    %v1020 = vsel %vm1012, %v1011, %v999
    %1021 = vst [vmem:[#allocation2 + $0xc0] sm:$0xff] %v1019
    %1022 = vst [vmem:[#allocation2 + $0xc8] sm:$0xff] %v1017
    %1023 = vst [vmem:[#allocation2 + $0xd0] sm:$0xff] %v1015
    %1024 = vst [vmem:[#allocation2 + $0xd8] sm:$0xff] %v1013
    %1025 = vst [vmem:[#allocation2 + $0xe0] sm:$0xff] %v1020
    %1026 = vst [vmem:[#allocation2 + $0xe8] sm:$0xff] %v1018
    %1027 = vst [vmem:[#allocation2 + $0xf0] sm:$0xff] %v1016
    %1028 = vst [vmem:[#allocation2 + $0xf8] sm:$0xff] %v1014
    %1029 = vrot.lane.b32.xlu0 %v585, 17
    %v1030 = vpop.permute.xlu0 %1029
    %1031 = vrot.lane.b32.xlu0 %v591, 17
    %v1032 = vpop.permute.xlu0 %1031
    %1033 = vrot.lane.b32.xlu0 %v587, 17
    %v1034 = vpop.permute.xlu0 %1033
    %1035 = vrot.lane.b32.xlu0 %v593, 17
    %v1036 = vpop.permute.xlu0 %1035
    %1037 = vrot.lane.b32.xlu0 %v910, 17
    %v1038 = vpop.permute.xlu0 %1037
    %1039 = vrot.lane.b32.xlu0 %v916, 17
    %v1040 = vpop.permute.xlu0 %1039
    %1041 = vrot.lane.b32.xlu0 %v912, 17
    %v1042 = vpop.permute.xlu0 %1041
    %1043 = vrot.lane.b32.xlu0 %v918, 17
    %v1044 = vpop.permute.xlu0 %1043
    %vm1045 = vcmp.lt.s32.totalorder %v945, 17
    %v1046 = vsel %vm1045, %v1038, %v1042
    %v1047 = vsel %vm1045, %v1040, %v1044
    %v1048 = vsel %vm1045, %v1034, %v1038
    %v1049 = vsel %vm1045, %v1036, %v1040
    %v1050 = vsel %vm1045, %v1030, %v1034
    %v1051 = vsel %vm1045, %v1032, %v1036
    %v1052 = vsel %vm1045, %v1042, %v1030
    %v1053 = vsel %vm1045, %v1044, %v1032
    %1054 = vst [vmem:[#allocation2 + $0x100] sm:$0xff] %v1052
    %1055 = vst [vmem:[#allocation2 + $0x108] sm:$0xff] %v1050
    %1056 = vst [vmem:[#allocation2 + $0x110] sm:$0xff] %v1048
    %1057 = vst [vmem:[#allocation2 + $0x118] sm:$0xff] %v1046
    %1058 = vst [vmem:[#allocation2 + $0x120] sm:$0xff] %v1053
    %1059 = vst [vmem:[#allocation2 + $0x128] sm:$0xff] %v1051
    %1060 = vst [vmem:[#allocation2 + $0x130] sm:$0xff] %v1049
    %1061 = vst [vmem:[#allocation2 + $0x138] sm:$0xff] %v1047
    %1062 = vrot.lane.b32.xlu0 %v585, 18
    %v1063 = vpop.permute.xlu0 %1062
    %1064 = vrot.lane.b32.xlu0 %v591, 18
    %v1065 = vpop.permute.xlu0 %1064
    %1066 = vrot.lane.b32.xlu0 %v587, 18
    %v1067 = vpop.permute.xlu0 %1066
    %1068 = vrot.lane.b32.xlu0 %v593, 18
    %v1069 = vpop.permute.xlu0 %1068
    %1070 = vrot.lane.b32.xlu0 %v910, 18
    %v1071 = vpop.permute.xlu0 %1070
    %1072 = vrot.lane.b32.xlu0 %v916, 18
    %v1073 = vpop.permute.xlu0 %1072
    %1074 = vrot.lane.b32.xlu0 %v912, 18
    %v1075 = vpop.permute.xlu0 %1074
    %1076 = vrot.lane.b32.xlu0 %v918, 18
    %v1077 = vpop.permute.xlu0 %1076
    %vm1078 = vcmp.lt.s32.totalorder %v945, 18
    %v1079 = vsel %vm1078, %v1071, %v1075
    %v1080 = vsel %vm1078, %v1073, %v1077
    %v1081 = vsel %vm1078, %v1067, %v1071
    %v1082 = vsel %vm1078, %v1069, %v1073
    %v1083 = vsel %vm1078, %v1063, %v1067
    %v1084 = vsel %vm1078, %v1065, %v1069
    %v1085 = vsel %vm1078, %v1075, %v1063
    %v1086 = vsel %vm1078, %v1077, %v1065
    %1087 = vst [vmem:[#allocation2 + $0x140] sm:$0xff] %v1085
    %1088 = vst [vmem:[#allocation2 + $0x148] sm:$0xff] %v1083
    %1089 = vst [vmem:[#allocation2 + $0x150] sm:$0xff] %v1081
    %1090 = vst [vmem:[#allocation2 + $0x158] sm:$0xff] %v1079
    %1091 = vst [vmem:[#allocation2 + $0x160] sm:$0xff] %v1086
    %1092 = vst [vmem:[#allocation2 + $0x168] sm:$0xff] %v1084
    %1093 = vst [vmem:[#allocation2 + $0x170] sm:$0xff] %v1082
    %1094 = vst [vmem:[#allocation2 + $0x178] sm:$0xff] %v1080
    %1095 = vrot.lane.b32.xlu0 %v585, 32
    %v1096 = vpop.permute.xlu0 %1095
    %1097 = vrot.lane.b32.xlu0 %v591, 32
    %v1098 = vpop.permute.xlu0 %1097
    %1099 = vrot.lane.b32.xlu0 %v587, 32
    %v1100 = vpop.permute.xlu0 %1099
    %1101 = vrot.lane.b32.xlu0 %v593, 32
    %v1102 = vpop.permute.xlu0 %1101
    %1103 = vrot.lane.b32.xlu0 %v910, 32
    %v1104 = vpop.permute.xlu0 %1103
    %1105 = vrot.lane.b32.xlu0 %v916, 32
    %v1106 = vpop.permute.xlu0 %1105
    %1107 = vrot.lane.b32.xlu0 %v912, 32
    %v1108 = vpop.permute.xlu0 %1107
    %1109 = vrot.lane.b32.xlu0 %v918, 32
    %v1110 = vpop.permute.xlu0 %1109
    %vm1111 = vcmp.lt.s32.totalorder %v945, 32
    %v1112 = vsel %vm1111, %v1104, %v1108
    %v1113 = vsel %vm1111, %v1106, %v1110
    %v1114 = vsel %vm1111, %v1100, %v1104
    %v1115 = vsel %vm1111, %v1102, %v1106
    %v1116 = vsel %vm1111, %v1096, %v1100
    %v1117 = vsel %vm1111, %v1098, %v1102
    %v1118 = vsel %vm1111, %v1108, %v1096
    %v1119 = vsel %vm1111, %v1110, %v1098
    %1120 = vst [vmem:[#allocation2 + $0x180] sm:$0xff] %v1118
    %1121 = vst [vmem:[#allocation2 + $0x188] sm:$0xff] %v1116
    %1122 = vst [vmem:[#allocation2 + $0x190] sm:$0xff] %v1114
    %1123 = vst [vmem:[#allocation2 + $0x198] sm:$0xff] %v1112
    %1124 = vst [vmem:[#allocation2 + $0x1a0] sm:$0xff] %v1119
    %1125 = vst [vmem:[#allocation2 + $0x1a8] sm:$0xff] %v1117
    %1126 = vst [vmem:[#allocation2 + $0x1b0] sm:$0xff] %v1115
    %1127 = vst [vmem:[#allocation2 + $0x1b8] sm:$0xff] %v1113
    %1128 = vrot.lane.b32.xlu0 %v585, 33
    %v1129 = vpop.permute.xlu0 %1128
    %1130 = vrot.lane.b32.xlu0 %v591, 33
    %v1131 = vpop.permute.xlu0 %1130
    %1132 = vrot.lane.b32.xlu0 %v587, 33
    %v1133 = vpop.permute.xlu0 %1132
    %1134 = vrot.lane.b32.xlu0 %v593, 33
    %v1135 = vpop.permute.xlu0 %1134
    %1136 = vrot.lane.b32.xlu0 %v910, 33
    %v1137 = vpop.permute.xlu0 %1136
    %1138 = vrot.lane.b32.xlu0 %v916, 33
    %v1139 = vpop.permute.xlu0 %1138
    %1140 = vrot.lane.b32.xlu0 %v912, 33
    %v1141 = vpop.permute.xlu0 %1140
    %1142 = vrot.lane.b32.xlu0 %v918, 33
    %v1143 = vpop.permute.xlu0 %1142
    %vm1144 = vcmp.lt.s32.totalorder %v945, 33
    %v1145 = vsel %vm1144, %v1137, %v1141
    %v1146 = vsel %vm1144, %v1139, %v1143
    %v1147 = vsel %vm1144, %v1133, %v1137
    %v1148 = vsel %vm1144, %v1135, %v1139
    %v1149 = vsel %vm1144, %v1129, %v1133
    %v1150 = vsel %vm1144, %v1131, %v1135
    %v1151 = vsel %vm1144, %v1141, %v1129
    %v1152 = vsel %vm1144, %v1143, %v1131
    %1153 = vst [vmem:[#allocation2 + $0x1c0] sm:$0xff] %v1151
    %1154 = vst [vmem:[#allocation2 + $0x1c8] sm:$0xff] %v1149
    %1155 = vst [vmem:[#allocation2 + $0x1d0] sm:$0xff] %v1147
    %1156 = vst [vmem:[#allocation2 + $0x1d8] sm:$0xff] %v1145
    %1157 = vst [vmem:[#allocation2 + $0x1e0] sm:$0xff] %v1152
    %1158 = vst [vmem:[#allocation2 + $0x1e8] sm:$0xff] %v1150
    %1159 = vst [vmem:[#allocation2 + $0x1f0] sm:$0xff] %v1148
    %1160 = vst [vmem:[#allocation2 + $0x1f8] sm:$0xff] %v1146
    %1161 = vrot.lane.b32.xlu0 %v585, 34
    %v1162 = vpop.permute.xlu0 %1161
    %1163 = vrot.lane.b32.xlu0 %v591, 34
    %v1164 = vpop.permute.xlu0 %1163
    %1165 = vrot.lane.b32.xlu0 %v587, 34
    %v1166 = vpop.permute.xlu0 %1165
    %1167 = vrot.lane.b32.xlu0 %v593, 34
    %v1168 = vpop.permute.xlu0 %1167
    %1169 = vrot.lane.b32.xlu0 %v910, 34
    %v1170 = vpop.permute.xlu0 %1169
    %1171 = vrot.lane.b32.xlu0 %v916, 34
    %v1172 = vpop.permute.xlu0 %1171
    %1173 = vrot.lane.b32.xlu0 %v912, 34
    %v1174 = vpop.permute.xlu0 %1173
    %1175 = vrot.lane.b32.xlu0 %v918, 34
    %v1176 = vpop.permute.xlu0 %1175
    %vm1177 = vcmp.lt.s32.totalorder %v945, 34
    %v1178 = vsel %vm1177, %v1170, %v1174
    %v1179 = vsel %vm1177, %v1172, %v1176
    %v1180 = vsel %vm1177, %v1166, %v1170
    %v1181 = vsel %vm1177, %v1168, %v1172
    %v1182 = vsel %vm1177, %v1162, %v1166
    %v1183 = vsel %vm1177, %v1164, %v1168
    %v1184 = vsel %vm1177, %v1174, %v1162
    %v1185 = vsel %vm1177, %v1176, %v1164
    %1186 = vst [vmem:[#allocation2 + $0x200] sm:$0xff] %v1184
    %1187 = vst [vmem:[#allocation2 + $0x208] sm:$0xff] %v1182
    %1188 = vst [vmem:[#allocation2 + $0x210] sm:$0xff] %v1180
    %1189 = vst [vmem:[#allocation2 + $0x218] sm:$0xff] %v1178
    %1190 = vst [vmem:[#allocation2 + $0x220] sm:$0xff] %v1185
    %1191 = vst [vmem:[#allocation2 + $0x228] sm:$0xff] %v1183
    %1192 = vst [vmem:[#allocation2 + $0x230] sm:$0xff] %v1181
    %1193 = vst [vmem:[#allocation2 + $0x238] sm:$0xff] %v1179
    %v1194 = vld [vmem:[#allocation11] sm:$0xff]
    %v1195 = vld [vmem:[#allocation11 + $0x8] sm:$0xff]
    %v1196 = vld [vmem:[#allocation11 + $0x10] sm:$0xff]
    %v1197 = vld [vmem:[#allocation11 + $0x18] sm:$0xff]
    %v1198 = vld [vmem:[#allocation11 + $0x20] sm:$0xff]
    %v1199 = vld [vmem:[#allocation11 + $0x28] sm:$0xff]
    %v1200 = vld [vmem:[#allocation11 + $0x30] sm:$0xff]
    %v1201 = vld [vmem:[#allocation11 + $0x38] sm:$0xff]
    %v1202 = vld [vmem:[#allocation2] sm:$0xff]
    %v1203 = vld [vmem:[#allocation2 + $0x8] sm:$0xff]
    %v1204 = vld [vmem:[#allocation2 + $0x10] sm:$0xff]
    %v1205 = vld [vmem:[#allocation2 + $0x18] sm:$0xff]
    %v1206 = vld [vmem:[#allocation2 + $0x20] sm:$0xff]
    %v1207 = vld [vmem:[#allocation2 + $0x28] sm:$0xff]
    %v1208 = vld [vmem:[#allocation2 + $0x30] sm:$0xff]
    %v1209 = vld [vmem:[#allocation2 + $0x38] sm:$0xff]
    %v1210 = vld [vmem:[#allocation2 + $0x40] sm:$0xff]
    %v1211 = vld [vmem:[#allocation2 + $0x48] sm:$0xff]
    %v1212 = vld [vmem:[#allocation2 + $0x50] sm:$0xff]
    %v1213 = vld [vmem:[#allocation2 + $0x58] sm:$0xff]
    %v1214 = vld [vmem:[#allocation2 + $0x60] sm:$0xff]
    %v1215 = vld [vmem:[#allocation2 + $0x68] sm:$0xff]
    %v1216 = vld [vmem:[#allocation2 + $0x70] sm:$0xff]
    %v1217 = vld [vmem:[#allocation2 + $0x78] sm:$0xff]
    %v1218 = vld [vmem:[#allocation2 + $0x80] sm:$0xff]
    %v1219 = vld [vmem:[#allocation2 + $0x88] sm:$0xff]
    %v1220 = vld [vmem:[#allocation2 + $0x90] sm:$0xff]
    %v1221 = vld [vmem:[#allocation2 + $0x98] sm:$0xff]
    %v1222 = vld [vmem:[#allocation2 + $0xa0] sm:$0xff]
    %v1223 = vld [vmem:[#allocation2 + $0xa8] sm:$0xff]
    %v1224 = vld [vmem:[#allocation2 + $0xb0] sm:$0xff]
    %v1225 = vld [vmem:[#allocation2 + $0xb8] sm:$0xff]
    %v1226 = vld [vmem:[#allocation2 + $0xc0] sm:$0xff]
    %v1227 = vld [vmem:[#allocation2 + $0xc8] sm:$0xff]
    %v1228 = vld [vmem:[#allocation2 + $0xd0] sm:$0xff]
    %v1229 = vld [vmem:[#allocation2 + $0xd8] sm:$0xff]
    %v1230 = vld [vmem:[#allocation2 + $0xe0] sm:$0xff]
    %v1231 = vld [vmem:[#allocation2 + $0xe8] sm:$0xff]
    %v1232 = vld [vmem:[#allocation2 + $0xf0] sm:$0xff]
    %v1233 = vld [vmem:[#allocation2 + $0xf8] sm:$0xff]
    %v1234 = vld [vmem:[#allocation2 + $0x100] sm:$0xff]
    %v1235 = vld [vmem:[#allocation2 + $0x108] sm:$0xff]
    %v1236 = vld [vmem:[#allocation2 + $0x110] sm:$0xff]
    %v1237 = vld [vmem:[#allocation2 + $0x118] sm:$0xff]
    %v1238 = vld [vmem:[#allocation2 + $0x120] sm:$0xff]
    %v1239 = vld [vmem:[#allocation2 + $0x128] sm:$0xff]
    %v1240 = vld [vmem:[#allocation2 + $0x130] sm:$0xff]
    %v1241 = vld [vmem:[#allocation2 + $0x138] sm:$0xff]
    %v1242 = vld [vmem:[#allocation2 + $0x140] sm:$0xff]
    %v1243 = vld [vmem:[#allocation2 + $0x148] sm:$0xff]
    %v1244 = vld [vmem:[#allocation2 + $0x150] sm:$0xff]
    %v1245 = vld [vmem:[#allocation2 + $0x158] sm:$0xff]
    %v1246 = vld [vmem:[#allocation2 + $0x160] sm:$0xff]
    %v1247 = vld [vmem:[#allocation2 + $0x168] sm:$0xff]
    %v1248 = vld [vmem:[#allocation2 + $0x170] sm:$0xff]
    %v1249 = vld [vmem:[#allocation2 + $0x178] sm:$0xff]
    %v1250 = vld [vmem:[#allocation2 + $0x180] sm:$0xff]
    %v1251 = vld [vmem:[#allocation2 + $0x188] sm:$0xff]
    %v1252 = vld [vmem:[#allocation2 + $0x190] sm:$0xff]
    %v1253 = vld [vmem:[#allocation2 + $0x198] sm:$0xff]
    %v1254 = vld [vmem:[#allocation2 + $0x1a0] sm:$0xff]
    %v1255 = vld [vmem:[#allocation2 + $0x1a8] sm:$0xff]
    %v1256 = vld [vmem:[#allocation2 + $0x1b0] sm:$0xff]
    %v1257 = vld [vmem:[#allocation2 + $0x1b8] sm:$0xff]
    %v1258 = vld [vmem:[#allocation2 + $0x1c0] sm:$0xff]
    %v1259 = vld [vmem:[#allocation2 + $0x1c8] sm:$0xff]
    %v1260 = vld [vmem:[#allocation2 + $0x1d0] sm:$0xff]
    %v1261 = vld [vmem:[#allocation2 + $0x1d8] sm:$0xff]
    %v1262 = vld [vmem:[#allocation2 + $0x1e0] sm:$0xff]
    %v1263 = vld [vmem:[#allocation2 + $0x1e8] sm:$0xff]
    %v1264 = vld [vmem:[#allocation2 + $0x1f0] sm:$0xff]
    %v1265 = vld [vmem:[#allocation2 + $0x1f8] sm:$0xff]
    %v1266 = vld [vmem:[#allocation2 + $0x200] sm:$0xff]
    %v1267 = vld [vmem:[#allocation2 + $0x208] sm:$0xff]
    %v1268 = vld [vmem:[#allocation2 + $0x210] sm:$0xff]
    %v1269 = vld [vmem:[#allocation2 + $0x218] sm:$0xff]
    %v1270 = vld [vmem:[#allocation2 + $0x220] sm:$0xff]
    %v1271 = vld [vmem:[#allocation2 + $0x228] sm:$0xff]
    %v1272 = vld [vmem:[#allocation2 + $0x230] sm:$0xff]
    %v1273 = vld [vmem:[#allocation2 + $0x238] sm:$0xff]
    %v1274 = vld [vmem:[#allocation12] sm:$0xff]
    %v1275 = vld [vmem:[#allocation12 + $0x8] sm:$0xff]
    %v1276 = vld [vmem:[#allocation12 + $0x10] sm:$0xff]
    %v1277 = vld [vmem:[#allocation12 + $0x18] sm:$0xff]
    %v1278 = vld [vmem:[#allocation12 + $0x20] sm:$0xff]
    %v1279 = vld [vmem:[#allocation12 + $0x28] sm:$0xff]
    %v1280 = vld [vmem:[#allocation12 + $0x30] sm:$0xff]
    %v1281 = vld [vmem:[#allocation12 + $0x38] sm:$0xff]
    %v1282 = vld [vmem:[#allocation12 + $0x40] sm:$0xff]
    %v1283 = vld [vmem:[#allocation12 + $0x48] sm:$0xff]
    %v1284 = vld [vmem:[#allocation12 + $0x50] sm:$0xff]
    %v1285 = vld [vmem:[#allocation12 + $0x58] sm:$0xff]
    %v1286 = vld [vmem:[#allocation12 + $0x60] sm:$0xff]
    %v1287 = vld [vmem:[#allocation12 + $0x68] sm:$0xff]
    %v1288 = vld [vmem:[#allocation12 + $0x70] sm:$0xff]
    %v1289 = vld [vmem:[#allocation12 + $0x78] sm:$0xff]
    %vm1290 = vcmask 130048
    %v1292 = vsel %vm1290, %v1195, 0
    %v1295 = vsel %vm1290, %v1197, 0
    %v1298 = vsel %vm1290, %v1199, 0
    %v1301 = vsel %vm1290, %v1201, 0
    %1303 = vmatprep.subr.mxu0 %v1203
    %1304 = vmatpush1.msra.mxu0 %v1202
    %1305 = vmatprep.subr.mxu0 %v1207
    %1306 = vmatpush1.msra.mxu0 %v1206
    %1307 = vmatprep.subr.mxu0 %v1211
    %1308 = vmatpush1.msra.mxu0 %v1210
    %1309 = vmatprep.subr.mxu0 %v1215
    %1310 = vmatpush1.msra.mxu0 %v1214
    %1311 = vmatprep.subr.mxu0 %v1219
    %1312 = vmatpush1.msra.mxu0 %v1218
    %1313 = vmatprep.subr.mxu0 %v1223
    %1314 = vmatpush1.msra.mxu0 %v1222
    %1315 = vmatprep.subr.mxu0 %v1227
    %1316 = vmatpush1.msra.mxu0 %v1226
    %1317 = vmatprep.subr.mxu0 %v1231
    %1318 = vmatpush1.msra.mxu0 %v1230
    %1319 = vmatprep.subr.mxu0 %v1235
    %1320 = vmatpush1.msra.mxu0 %v1234
    %1321 = vmatprep.subr.mxu0 %v1239
    %1322 = vmatpush1.msra.mxu0 %v1238
    %1323 = vmatprep.subr.mxu0 %v1243
    %1324 = vmatpush1.msra.mxu0 %v1242
    %1325 = vmatprep.subr.mxu0 %v1247
    %1326 = vmatpush1.msra.mxu0 %v1246
    %1327 = vmatprep.subr.mxu0 %v1251
    %1328 = vmatpush1.msra.mxu0 %v1250
    %1329 = vmatprep.subr.mxu0 %v1255
    %1330 = vmatpush1.msra.mxu0 %v1254
    %1331 = vmatprep.subr.mxu0 %v1259
    %1332 = vmatpush1.msra.mxu0 %v1258
    %1333 = vmatprep.subr.mxu0 %v1263
    %1334 = vmatpush1.msra.mxu0 %v1262
    %1335 = vmatprep.subr.mxu0 %v1267
    %1336 = vmatpush1.msra.mxu0 %v1266
    %1337 = vmatprep.subr.mxu0 %v1271
    %1338 = vmatpush1.msra.mxu0 %v1270
    %1339 = vmatprep.subr.mxu0 0.0
    %1340 = vmatpush1.msra.mxu0 0.0
    %1341 = vmatprep.subr.mxu0 0.0
    %1342 = vmatpush1.msra.mxu0 0.0
    %1343 = vmatprep.subr.mxu0 0.0
    %1344 = vmatpush1.msra.mxu0 0.0
    %1345 = vmatprep.subr.mxu0 0.0
    %1346 = vmatpush1.msra.mxu0 0.0
    %1347 = vmatprep.subr.mxu0 0.0
    %1348 = vmatpush1.msra.mxu0 0.0
    %1349 = vmatprep.subr.mxu0 0.0
    %1350 = vmatpush1.msra.mxu0 0.0
    %1351 = vmatprep.subr.mxu0 0.0
    %1352 = vmatpush1.msra.mxu0 0.0
    %1353 = vmatprep.subr.mxu0 0.0
    %1354 = vmatpush1.msra.mxu0 0.0
    %1355 = vmatprep.subr.mxu0 0.0
    %1356 = vmatpush1.msra.mxu0 0.0
    %1357 = vmatprep.subr.mxu0 0.0
    %1358 = vmatpush1.msra.mxu0 0.0
    %1359 = vmatprep.subr.mxu0 0.0
    %1360 = vmatpush1.msra.mxu0 0.0
    %1361 = vmatprep.subr.mxu0 0.0
    %1362 = vmatpush1.msra.mxu0 0.0
    %1363 = vmatprep.subr.mxu0 0.0
    %1364 = vmatpush1.msra.mxu0 0.0
    %1365 = vmatprep.subr.mxu0 0.0
    %1366 = vmatpush1.msra.mxu0 0.0
    %1367 = vmatprep.mubr.f32.mxu0 %v1292
    %1368 = vmatmul.mubr.f32.gmra.mrb[0].mxu0 %v1194
    %v1369 = vpop.f32.mrb[0].mxu0
    %v1370 = vadd.f32 %v1274, %v1369
    %v1371 = vpop.f32.mrb[0].mxu0
    %v1372 = vadd.f32 %v1275, %v1371
    %1373 = vmatprep.mubr.f32.mxu0 %v1295
    %1374 = vmatmul.mubr.f32.gmra.mrb[0].mxu0 %v1196
    %v1375 = vpop.f32.mrb[0].mxu0
    %v1376 = vadd.f32 %v1278, %v1375
    %v1377 = vpop.f32.mrb[0].mxu0
    %v1378 = vadd.f32 %v1279, %v1377
    %1379 = vmatprep.mubr.f32.mxu0 %v1298
    %1380 = vmatmul.mubr.f32.gmra.mrb[0].mxu0 %v1198
    %v1381 = vpop.f32.mrb[0].mxu0
    %v1382 = vadd.f32 %v1282, %v1381
    %v1383 = vpop.f32.mrb[0].mxu0
    %v1384 = vadd.f32 %v1283, %v1383
    %1385 = vmatprep.mubr.f32.mxu0 %v1301
    %1386 = vmatmul.mubr.f32.gmra.mrb[0].mxu0 %v1200
    %v1387 = vpop.f32.mrb[0].mxu0
    %v1388 = vadd.f32 %v1286, %v1387
    %v1389 = vpop.f32.mrb[0].mxu0
    %v1390 = vadd.f32 %v1287, %v1389
    %1391 = vdwg.mxu0
    %1392 = vmatprep.subr.mxu0 %v1205
    %1393 = vmatpush1.msra.mxu0 %v1204
    %1394 = vmatprep.subr.mxu0 %v1209
    %1395 = vmatpush1.msra.mxu0 %v1208
    %1396 = vmatprep.subr.mxu0 %v1213
    %1397 = vmatpush1.msra.mxu0 %v1212
    %1398 = vmatprep.subr.mxu0 %v1217
    %1399 = vmatpush1.msra.mxu0 %v1216
    %1400 = vmatprep.subr.mxu0 %v1221
    %1401 = vmatpush1.msra.mxu0 %v1220
    %1402 = vmatprep.subr.mxu0 %v1225
    %1403 = vmatpush1.msra.mxu0 %v1224
    %1404 = vmatprep.subr.mxu0 %v1229
    %1405 = vmatpush1.msra.mxu0 %v1228
    %1406 = vmatprep.subr.mxu0 %v1233
    %1407 = vmatpush1.msra.mxu0 %v1232
    %1408 = vmatprep.subr.mxu0 %v1237
    %1409 = vmatpush1.msra.mxu0 %v1236
    %1410 = vmatprep.subr.mxu0 %v1241
    %1411 = vmatpush1.msra.mxu0 %v1240
    %1412 = vmatprep.subr.mxu0 %v1245
    %1413 = vmatpush1.msra.mxu0 %v1244
    %1414 = vmatprep.subr.mxu0 %v1249
    %1415 = vmatpush1.msra.mxu0 %v1248
    %1416 = vmatprep.subr.mxu0 %v1253
    %1417 = vmatpush1.msra.mxu0 %v1252
    %1418 = vmatprep.subr.mxu0 %v1257
    %1419 = vmatpush1.msra.mxu0 %v1256
    %1420 = vmatprep.subr.mxu0 %v1261
    %1421 = vmatpush1.msra.mxu0 %v1260
    %1422 = vmatprep.subr.mxu0 %v1265
    %1423 = vmatpush1.msra.mxu0 %v1264
    %1424 = vmatprep.subr.mxu0 %v1269
    %1425 = vmatpush1.msra.mxu0 %v1268
    %1426 = vmatprep.subr.mxu0 %v1273
    %1427 = vmatpush1.msra.mxu0 %v1272
    %1428 = vmatprep.subr.mxu0 0.0
    %1429 = vmatpush1.msra.mxu0 0.0
    %1430 = vmatprep.subr.mxu0 0.0
    %1431 = vmatpush1.msra.mxu0 0.0
    %1432 = vmatprep.subr.mxu0 0.0
    %1433 = vmatpush1.msra.mxu0 0.0
    %1434 = vmatprep.subr.mxu0 0.0
    %1435 = vmatpush1.msra.mxu0 0.0
    %1436 = vmatprep.subr.mxu0 0.0
    %1437 = vmatpush1.msra.mxu0 0.0
    %1438 = vmatprep.subr.mxu0 0.0
    %1439 = vmatpush1.msra.mxu0 0.0
    %1440 = vmatprep.subr.mxu0 0.0
    %1441 = vmatpush1.msra.mxu0 0.0
    %1442 = vmatprep.subr.mxu0 0.0
    %1443 = vmatpush1.msra.mxu0 0.0
    %1444 = vmatprep.subr.mxu0 0.0
    %1445 = vmatpush1.msra.mxu0 0.0
    %1446 = vmatprep.subr.mxu0 0.0
    %1447 = vmatpush1.msra.mxu0 0.0
    %1448 = vmatprep.subr.mxu0 0.0
    %1449 = vmatpush1.msra.mxu0 0.0
    %1450 = vmatprep.subr.mxu0 0.0
    %1451 = vmatpush1.msra.mxu0 0.0
    %1452 = vmatprep.subr.mxu0 0.0
    %1453 = vmatpush1.msra.mxu0 0.0
    %1454 = vmatprep.subr.mxu0 0.0
    %1455 = vmatpush1.msra.mxu0 0.0
    %1456 = vmatprep.mubr.f32.mxu0 %v1292
    %1457 = vmatmul.mubr.f32.gmra.mrb[0].mxu0 %v1194
    %v1458 = vpop.f32.mrb[0].mxu0
    %v1459 = vadd.f32 %v1276, %v1458
    %v1460 = vpop.f32.mrb[0].mxu0
    %v1461 = vadd.f32 %v1277, %v1460
    %1462 = vmatprep.mubr.f32.mxu0 %v1295
    %1463 = vmatmul.mubr.f32.gmra.mrb[0].mxu0 %v1196
    %v1464 = vpop.f32.mrb[0].mxu0
    %v1465 = vadd.f32 %v1280, %v1464
    %v1466 = vpop.f32.mrb[0].mxu0
    %v1467 = vadd.f32 %v1281, %v1466
    %1468 = vmatprep.mubr.f32.mxu0 %v1298
    %1469 = vmatmul.mubr.f32.gmra.mrb[0].mxu0 %v1198
    %v1470 = vpop.f32.mrb[0].mxu0
    %v1471 = vadd.f32 %v1284, %v1470
    %v1472 = vpop.f32.mrb[0].mxu0
    %v1473 = vadd.f32 %v1285, %v1472
    %1474 = vmatprep.mubr.f32.mxu0 %v1301
    %1475 = vmatmul.mubr.f32.gmra.mrb[0].mxu0 %v1200
    %v1476 = vpop.f32.mrb[0].mxu0
    %v1477 = vadd.f32 %v1288, %v1476
    %v1478 = vpop.f32.mrb[0].mxu0
    %v1479 = vadd.f32 %v1289, %v1478
    %1480 = vdwg.mxu0
    %v1481 = vmax.f32 %v1370, 0.0
    %v1482 = vmax.f32 %v1372, 0.0
    %v1483 = vmax.f32 %v1459, 0.0
    %v1484 = vmax.f32 %v1461, 0.0
    %v1485 = vmax.f32 %v1376, 0.0
    %v1486 = vmax.f32 %v1378, 0.0
    %v1487 = vmax.f32 %v1465, 0.0
    %v1488 = vmax.f32 %v1467, 0.0
    %v1489 = vmax.f32 %v1382, 0.0
    %v1490 = vmax.f32 %v1384, 0.0
    %v1491 = vmax.f32 %v1471, 0.0
    %v1492 = vmax.f32 %v1473, 0.0
    %v1493 = vmax.f32 %v1388, 0.0
    %v1494 = vmax.f32 %v1390, 0.0
    %v1495 = vmax.f32 %v1477, 0.0
    %v1496 = vmax.f32 %v1479, 0.0
    %1497 = vst [vmem:[#allocation3] sm:$0xff] %v1481
    %1498 = vst [vmem:[#allocation3 + $0x8] sm:$0xff] %v1482
    %1499 = vst [vmem:[#allocation3 + $0x10] sm:$0xff] %v1483
    %1500 = vst [vmem:[#allocation3 + $0x18] sm:$0xff] %v1484
    %1501 = vst [vmem:[#allocation3 + $0x20] sm:$0xff] %v1485
    %1502 = vst [vmem:[#allocation3 + $0x28] sm:$0xff] %v1486
    %1503 = vst [vmem:[#allocation3 + $0x30] sm:$0xff] %v1487
    %1504 = vst [vmem:[#allocation3 + $0x38] sm:$0xff] %v1488
    %1505 = vst [vmem:[#allocation3 + $0x40] sm:$0xff] %v1489
    %1506 = vst [vmem:[#allocation3 + $0x48] sm:$0xff] %v1490
    %1507 = vst [vmem:[#allocation3 + $0x50] sm:$0xff] %v1491
    %1508 = vst [vmem:[#allocation3 + $0x58] sm:$0xff] %v1492
    %1509 = vst [vmem:[#allocation3 + $0x60] sm:$0xff] %v1493
    %1510 = vst [vmem:[#allocation3 + $0x68] sm:$0xff] %v1494
    %1511 = vst [vmem:[#allocation3 + $0x70] sm:$0xff] %v1495
    %1512 = vst [vmem:[#allocation3 + $0x78] sm:$0xff] %v1496
    %1513 = vrot.lane.b32.xlu0 %v1481, 1
    %v1514 = vpop.permute.xlu0 %1513
    %1515 = vrot.lane.b32.xlu0 %v1485, 1
    %v1516 = vpop.permute.xlu0 %1515
    %1517 = vrot.lane.b32.xlu0 %v1489, 1
    %v1518 = vpop.permute.xlu0 %1517
    %1519 = vrot.lane.b32.xlu0 %v1493, 1
    %v1520 = vpop.permute.xlu0 %1519
    %1521 = vrot.lane.b32.xlu0 %v1482, 1
    %v1522 = vpop.permute.xlu0 %1521
    %1523 = vrot.lane.b32.xlu0 %v1486, 1
    %v1524 = vpop.permute.xlu0 %1523
    %1525 = vrot.lane.b32.xlu0 %v1490, 1
    %v1526 = vpop.permute.xlu0 %1525
    %1527 = vrot.lane.b32.xlu0 %v1494, 1
    %v1528 = vpop.permute.xlu0 %1527
    %1529 = vrot.lane.b32.xlu0 %v1483, 1
    %v1530 = vpop.permute.xlu0 %1529
    %1531 = vrot.lane.b32.xlu0 %v1487, 1
    %v1532 = vpop.permute.xlu0 %1531
    %1533 = vrot.lane.b32.xlu0 %v1491, 1
    %v1534 = vpop.permute.xlu0 %1533
    %1535 = vrot.lane.b32.xlu0 %v1495, 1
    %v1536 = vpop.permute.xlu0 %1535
    %1537 = vrot.lane.b32.xlu0 %v1484, 1
    %v1538 = vpop.permute.xlu0 %1537
    %1539 = vrot.lane.b32.xlu0 %v1488, 1
    %v1540 = vpop.permute.xlu0 %1539
    %1541 = vrot.lane.b32.xlu0 %v1492, 1
    %v1542 = vpop.permute.xlu0 %1541
    %1543 = vrot.lane.b32.xlu0 %v1496, 1
    %v1544 = vpop.permute.xlu0 %1543
    %v1545 = vsel %vm946, %v1530, %v1538
    %v1546 = vsel %vm946, %v1532, %v1540
    %v1547 = vsel %vm946, %v1534, %v1542
    %v1548 = vsel %vm946, %v1536, %v1544
    %v1549 = vsel %vm946, %v1522, %v1530
    %v1550 = vsel %vm946, %v1524, %v1532
    %v1551 = vsel %vm946, %v1526, %v1534
    %v1552 = vsel %vm946, %v1528, %v1536
    %v1553 = vsel %vm946, %v1514, %v1522
    %v1554 = vsel %vm946, %v1516, %v1524
    %v1555 = vsel %vm946, %v1518, %v1526
    %v1556 = vsel %vm946, %v1520, %v1528
    %v1557 = vsel %vm946, %v1538, %v1514
    %v1558 = vsel %vm946, %v1540, %v1516
    %v1559 = vsel %vm946, %v1542, %v1518
    %v1560 = vsel %vm946, %v1544, %v1520
    %1561 = vst [vmem:[#allocation3 + $0x80] sm:$0xff] %v1557
    %1562 = vst [vmem:[#allocation3 + $0x88] sm:$0xff] %v1553
    %1563 = vst [vmem:[#allocation3 + $0x90] sm:$0xff] %v1549
    %1564 = vst [vmem:[#allocation3 + $0x98] sm:$0xff] %v1545
    %1565 = vst [vmem:[#allocation3 + $0xa0] sm:$0xff] %v1558
    %1566 = vst [vmem:[#allocation3 + $0xa8] sm:$0xff] %v1554
    %1567 = vst [vmem:[#allocation3 + $0xb0] sm:$0xff] %v1550
    %1568 = vst [vmem:[#allocation3 + $0xb8] sm:$0xff] %v1546
    %1569 = vst [vmem:[#allocation3 + $0xc0] sm:$0xff] %v1559
    %1570 = vst [vmem:[#allocation3 + $0xc8] sm:$0xff] %v1555
    %1571 = vst [vmem:[#allocation3 + $0xd0] sm:$0xff] %v1551
    %1572 = vst [vmem:[#allocation3 + $0xd8] sm:$0xff] %v1547
    %1573 = vst [vmem:[#allocation3 + $0xe0] sm:$0xff] %v1560
    %1574 = vst [vmem:[#allocation3 + $0xe8] sm:$0xff] %v1556
    %1575 = vst [vmem:[#allocation3 + $0xf0] sm:$0xff] %v1552
    %1576 = vst [vmem:[#allocation3 + $0xf8] sm:$0xff] %v1548
    %1577 = vrot.lane.b32.xlu0 %v1481, 2
    %v1578 = vpop.permute.xlu0 %1577
    %1579 = vrot.lane.b32.xlu0 %v1485, 2
    %v1580 = vpop.permute.xlu0 %1579
    %1581 = vrot.lane.b32.xlu0 %v1489, 2
    %v1582 = vpop.permute.xlu0 %1581
    %1583 = vrot.lane.b32.xlu0 %v1493, 2
    %v1584 = vpop.permute.xlu0 %1583
    %1585 = vrot.lane.b32.xlu0 %v1482, 2
    %v1586 = vpop.permute.xlu0 %1585
    %1587 = vrot.lane.b32.xlu0 %v1486, 2
    %v1588 = vpop.permute.xlu0 %1587
    %1589 = vrot.lane.b32.xlu0 %v1490, 2
    %v1590 = vpop.permute.xlu0 %1589
    %1591 = vrot.lane.b32.xlu0 %v1494, 2
    %v1592 = vpop.permute.xlu0 %1591
    %1593 = vrot.lane.b32.xlu0 %v1483, 2
    %v1594 = vpop.permute.xlu0 %1593
    %1595 = vrot.lane.b32.xlu0 %v1487, 2
    %v1596 = vpop.permute.xlu0 %1595
    %1597 = vrot.lane.b32.xlu0 %v1491, 2
    %v1598 = vpop.permute.xlu0 %1597
    %1599 = vrot.lane.b32.xlu0 %v1495, 2
    %v1600 = vpop.permute.xlu0 %1599
    %1601 = vrot.lane.b32.xlu0 %v1484, 2
    %v1602 = vpop.permute.xlu0 %1601
    %1603 = vrot.lane.b32.xlu0 %v1488, 2
    %v1604 = vpop.permute.xlu0 %1603
    %1605 = vrot.lane.b32.xlu0 %v1492, 2
    %v1606 = vpop.permute.xlu0 %1605
    %1607 = vrot.lane.b32.xlu0 %v1496, 2
    %v1608 = vpop.permute.xlu0 %1607
    %v1609 = vsel %vm979, %v1594, %v1602
    %v1610 = vsel %vm979, %v1596, %v1604
    %v1611 = vsel %vm979, %v1598, %v1606
    %v1612 = vsel %vm979, %v1600, %v1608
    %v1613 = vsel %vm979, %v1586, %v1594
    %v1614 = vsel %vm979, %v1588, %v1596
    %v1615 = vsel %vm979, %v1590, %v1598
    %v1616 = vsel %vm979, %v1592, %v1600
    %v1617 = vsel %vm979, %v1578, %v1586
    %v1618 = vsel %vm979, %v1580, %v1588
    %v1619 = vsel %vm979, %v1582, %v1590
    %v1620 = vsel %vm979, %v1584, %v1592
    %v1621 = vsel %vm979, %v1602, %v1578
    %v1622 = vsel %vm979, %v1604, %v1580
    %v1623 = vsel %vm979, %v1606, %v1582
    %v1624 = vsel %vm979, %v1608, %v1584
    %1625 = vst [vmem:[#allocation3 + $0x100] sm:$0xff] %v1621
    %1626 = vst [vmem:[#allocation3 + $0x108] sm:$0xff] %v1617
    %1627 = vst [vmem:[#allocation3 + $0x110] sm:$0xff] %v1613
    %1628 = vst [vmem:[#allocation3 + $0x118] sm:$0xff] %v1609
    %1629 = vst [vmem:[#allocation3 + $0x120] sm:$0xff] %v1622
    %1630 = vst [vmem:[#allocation3 + $0x128] sm:$0xff] %v1618
    %1631 = vst [vmem:[#allocation3 + $0x130] sm:$0xff] %v1614
    %1632 = vst [vmem:[#allocation3 + $0x138] sm:$0xff] %v1610
    %1633 = vst [vmem:[#allocation3 + $0x140] sm:$0xff] %v1623
    %1634 = vst [vmem:[#allocation3 + $0x148] sm:$0xff] %v1619
    %1635 = vst [vmem:[#allocation3 + $0x150] sm:$0xff] %v1615
    %1636 = vst [vmem:[#allocation3 + $0x158] sm:$0xff] %v1611
    %1637 = vst [vmem:[#allocation3 + $0x160] sm:$0xff] %v1624
    %1638 = vst [vmem:[#allocation3 + $0x168] sm:$0xff] %v1620
    %1639 = vst [vmem:[#allocation3 + $0x170] sm:$0xff] %v1616
    %1640 = vst [vmem:[#allocation3 + $0x178] sm:$0xff] %v1612
    %1641 = vrot.lane.b32.xlu0 %v1481, 16
    %v1642 = vpop.permute.xlu0 %1641
    %1643 = vrot.lane.b32.xlu0 %v1485, 16
    %v1644 = vpop.permute.xlu0 %1643
    %1645 = vrot.lane.b32.xlu0 %v1489, 16
    %v1646 = vpop.permute.xlu0 %1645
    %1647 = vrot.lane.b32.xlu0 %v1493, 16
    %v1648 = vpop.permute.xlu0 %1647
    %1649 = vrot.lane.b32.xlu0 %v1482, 16
    %v1650 = vpop.permute.xlu0 %1649
    %1651 = vrot.lane.b32.xlu0 %v1486, 16
    %v1652 = vpop.permute.xlu0 %1651
    %1653 = vrot.lane.b32.xlu0 %v1490, 16
    %v1654 = vpop.permute.xlu0 %1653
    %1655 = vrot.lane.b32.xlu0 %v1494, 16
    %v1656 = vpop.permute.xlu0 %1655
    %1657 = vrot.lane.b32.xlu0 %v1483, 16
    %v1658 = vpop.permute.xlu0 %1657
    %1659 = vrot.lane.b32.xlu0 %v1487, 16
    %v1660 = vpop.permute.xlu0 %1659
    %1661 = vrot.lane.b32.xlu0 %v1491, 16
    %v1662 = vpop.permute.xlu0 %1661
    %1663 = vrot.lane.b32.xlu0 %v1495, 16
    %v1664 = vpop.permute.xlu0 %1663
    %1665 = vrot.lane.b32.xlu0 %v1484, 16
    %v1666 = vpop.permute.xlu0 %1665
    %1667 = vrot.lane.b32.xlu0 %v1488, 16
    %v1668 = vpop.permute.xlu0 %1667
    %1669 = vrot.lane.b32.xlu0 %v1492, 16
    %v1670 = vpop.permute.xlu0 %1669
    %1671 = vrot.lane.b32.xlu0 %v1496, 16
    %v1672 = vpop.permute.xlu0 %1671
    %v1673 = vsel %vm1012, %v1658, %v1666
    %v1674 = vsel %vm1012, %v1660, %v1668
    %v1675 = vsel %vm1012, %v1662, %v1670
    %v1676 = vsel %vm1012, %v1664, %v1672
    %v1677 = vsel %vm1012, %v1650, %v1658
    %v1678 = vsel %vm1012, %v1652, %v1660
    %v1679 = vsel %vm1012, %v1654, %v1662
    %v1680 = vsel %vm1012, %v1656, %v1664
    %v1681 = vsel %vm1012, %v1642, %v1650
    %v1682 = vsel %vm1012, %v1644, %v1652
    %v1683 = vsel %vm1012, %v1646, %v1654
    %v1684 = vsel %vm1012, %v1648, %v1656
    %v1685 = vsel %vm1012, %v1666, %v1642
    %v1686 = vsel %vm1012, %v1668, %v1644
    %v1687 = vsel %vm1012, %v1670, %v1646
    %v1688 = vsel %vm1012, %v1672, %v1648
    %1689 = vst [vmem:[#allocation3 + $0x180] sm:$0xff] %v1685
    %1690 = vst [vmem:[#allocation3 + $0x188] sm:$0xff] %v1681
    %1691 = vst [vmem:[#allocation3 + $0x190] sm:$0xff] %v1677
    %1692 = vst [vmem:[#allocation3 + $0x198] sm:$0xff] %v1673
    %1693 = vst [vmem:[#allocation3 + $0x1a0] sm:$0xff] %v1686
    %1694 = vst [vmem:[#allocation3 + $0x1a8] sm:$0xff] %v1682
    %1695 = vst [vmem:[#allocation3 + $0x1b0] sm:$0xff] %v1678
    %1696 = vst [vmem:[#allocation3 + $0x1b8] sm:$0xff] %v1674
    %1697 = vst [vmem:[#allocation3 + $0x1c0] sm:$0xff] %v1687
    %1698 = vst [vmem:[#allocation3 + $0x1c8] sm:$0xff] %v1683
    %1699 = vst [vmem:[#allocation3 + $0x1d0] sm:$0xff] %v1679
    %1700 = vst [vmem:[#allocation3 + $0x1d8] sm:$0xff] %v1675
    %1701 = vst [vmem:[#allocation3 + $0x1e0] sm:$0xff] %v1688
    %1702 = vst [vmem:[#allocation3 + $0x1e8] sm:$0xff] %v1684
    %1703 = vst [vmem:[#allocation3 + $0x1f0] sm:$0xff] %v1680
    %1704 = vst [vmem:[#allocation3 + $0x1f8] sm:$0xff] %v1676
    %1705 = vrot.lane.b32.xlu0 %v1481, 17
    %v1706 = vpop.permute.xlu0 %1705
    %1707 = vrot.lane.b32.xlu0 %v1485, 17
    %v1708 = vpop.permute.xlu0 %1707
    %1709 = vrot.lane.b32.xlu0 %v1489, 17
    %v1710 = vpop.permute.xlu0 %1709
    %1711 = vrot.lane.b32.xlu0 %v1493, 17
    %v1712 = vpop.permute.xlu0 %1711
    %1713 = vrot.lane.b32.xlu0 %v1482, 17
    %v1714 = vpop.permute.xlu0 %1713
    %1715 = vrot.lane.b32.xlu0 %v1486, 17
    %v1716 = vpop.permute.xlu0 %1715
    %1717 = vrot.lane.b32.xlu0 %v1490, 17
    %v1718 = vpop.permute.xlu0 %1717
    %1719 = vrot.lane.b32.xlu0 %v1494, 17
    %v1720 = vpop.permute.xlu0 %1719
    %1721 = vrot.lane.b32.xlu0 %v1483, 17
    %v1722 = vpop.permute.xlu0 %1721
    %1723 = vrot.lane.b32.xlu0 %v1487, 17
    %v1724 = vpop.permute.xlu0 %1723
    %1725 = vrot.lane.b32.xlu0 %v1491, 17
    %v1726 = vpop.permute.xlu0 %1725
    %1727 = vrot.lane.b32.xlu0 %v1495, 17
    %v1728 = vpop.permute.xlu0 %1727
    %1729 = vrot.lane.b32.xlu0 %v1484, 17
    %v1730 = vpop.permute.xlu0 %1729
    %1731 = vrot.lane.b32.xlu0 %v1488, 17
    %v1732 = vpop.permute.xlu0 %1731
    %1733 = vrot.lane.b32.xlu0 %v1492, 17
    %v1734 = vpop.permute.xlu0 %1733
    %1735 = vrot.lane.b32.xlu0 %v1496, 17
    %v1736 = vpop.permute.xlu0 %1735
    %v1737 = vsel %vm1045, %v1722, %v1730
    %v1738 = vsel %vm1045, %v1724, %v1732
    %v1739 = vsel %vm1045, %v1726, %v1734
    %v1740 = vsel %vm1045, %v1728, %v1736
    %v1741 = vsel %vm1045, %v1714, %v1722
    %v1742 = vsel %vm1045, %v1716, %v1724
    %v1743 = vsel %vm1045, %v1718, %v1726
    %v1744 = vsel %vm1045, %v1720, %v1728
    %v1745 = vsel %vm1045, %v1706, %v1714
    %v1746 = vsel %vm1045, %v1708, %v1716
    %v1747 = vsel %vm1045, %v1710, %v1718
    %v1748 = vsel %vm1045, %v1712, %v1720
    %v1749 = vsel %vm1045, %v1730, %v1706
    %v1750 = vsel %vm1045, %v1732, %v1708
    %v1751 = vsel %vm1045, %v1734, %v1710
    %v1752 = vsel %vm1045, %v1736, %v1712
    %1753 = vst [vmem:[#allocation3 + $0x200] sm:$0xff] %v1749
    %1754 = vst [vmem:[#allocation3 + $0x208] sm:$0xff] %v1745
    %1755 = vst [vmem:[#allocation3 + $0x210] sm:$0xff] %v1741
    %1756 = vst [vmem:[#allocation3 + $0x218] sm:$0xff] %v1737
    %1757 = vst [vmem:[#allocation3 + $0x220] sm:$0xff] %v1750
    %1758 = vst [vmem:[#allocation3 + $0x228] sm:$0xff] %v1746
    %1759 = vst [vmem:[#allocation3 + $0x230] sm:$0xff] %v1742
    %1760 = vst [vmem:[#allocation3 + $0x238] sm:$0xff] %v1738
    %1761 = vst [vmem:[#allocation3 + $0x240] sm:$0xff] %v1751
    %1762 = vst [vmem:[#allocation3 + $0x248] sm:$0xff] %v1747
    %1763 = vst [vmem:[#allocation3 + $0x250] sm:$0xff] %v1743
    %1764 = vst [vmem:[#allocation3 + $0x258] sm:$0xff] %v1739
    %1765 = vst [vmem:[#allocation3 + $0x260] sm:$0xff] %v1752
    %1766 = vst [vmem:[#allocation3 + $0x268] sm:$0xff] %v1748
    %1767 = vst [vmem:[#allocation3 + $0x270] sm:$0xff] %v1744
    %1768 = vst [vmem:[#allocation3 + $0x278] sm:$0xff] %v1740
    %1769 = vrot.lane.b32.xlu0 %v1481, 18
    %v1770 = vpop.permute.xlu0 %1769
    %1771 = vrot.lane.b32.xlu0 %v1485, 18
    %v1772 = vpop.permute.xlu0 %1771
    %1773 = vrot.lane.b32.xlu0 %v1489, 18
    %v1774 = vpop.permute.xlu0 %1773
    %1775 = vrot.lane.b32.xlu0 %v1493, 18
    %v1776 = vpop.permute.xlu0 %1775
    %1777 = vrot.lane.b32.xlu0 %v1482, 18
    %v1778 = vpop.permute.xlu0 %1777
    %1779 = vrot.lane.b32.xlu0 %v1486, 18
    %v1780 = vpop.permute.xlu0 %1779
    %1781 = vrot.lane.b32.xlu0 %v1490, 18
    %v1782 = vpop.permute.xlu0 %1781
    %1783 = vrot.lane.b32.xlu0 %v1494, 18
    %v1784 = vpop.permute.xlu0 %1783
    %1785 = vrot.lane.b32.xlu0 %v1483, 18
    %v1786 = vpop.permute.xlu0 %1785
    %1787 = vrot.lane.b32.xlu0 %v1487, 18
    %v1788 = vpop.permute.xlu0 %1787
    %1789 = vrot.lane.b32.xlu0 %v1491, 18
    %v1790 = vpop.permute.xlu0 %1789
    %1791 = vrot.lane.b32.xlu0 %v1495, 18
    %v1792 = vpop.permute.xlu0 %1791
    %1793 = vrot.lane.b32.xlu0 %v1484, 18
    %v1794 = vpop.permute.xlu0 %1793
    %1795 = vrot.lane.b32.xlu0 %v1488, 18
    %v1796 = vpop.permute.xlu0 %1795
    %1797 = vrot.lane.b32.xlu0 %v1492, 18
    %v1798 = vpop.permute.xlu0 %1797
    %1799 = vrot.lane.b32.xlu0 %v1496, 18
    %v1800 = vpop.permute.xlu0 %1799
    %v1801 = vsel %vm1078, %v1786, %v1794
    %v1802 = vsel %vm1078, %v1788, %v1796
    %v1803 = vsel %vm1078, %v1790, %v1798
    %v1804 = vsel %vm1078, %v1792, %v1800
    %v1805 = vsel %vm1078, %v1778, %v1786
    %v1806 = vsel %vm1078, %v1780, %v1788
    %v1807 = vsel %vm1078, %v1782, %v1790
    %v1808 = vsel %vm1078, %v1784, %v1792
    %v1809 = vsel %vm1078, %v1770, %v1778
    %v1810 = vsel %vm1078, %v1772, %v1780
    %v1811 = vsel %vm1078, %v1774, %v1782
    %v1812 = vsel %vm1078, %v1776, %v1784
    %v1813 = vsel %vm1078, %v1794, %v1770
    %v1814 = vsel %vm1078, %v1796, %v1772
    %v1815 = vsel %vm1078, %v1798, %v1774
    %v1816 = vsel %vm1078, %v1800, %v1776
    %1817 = vst [vmem:[#allocation3 + $0x280] sm:$0xff] %v1813
    %1818 = vst [vmem:[#allocation3 + $0x288] sm:$0xff] %v1809
    %1819 = vst [vmem:[#allocation3 + $0x290] sm:$0xff] %v1805
    %1820 = vst [vmem:[#allocation3 + $0x298] sm:$0xff] %v1801
    %1821 = vst [vmem:[#allocation3 + $0x2a0] sm:$0xff] %v1814
    %1822 = vst [vmem:[#allocation3 + $0x2a8] sm:$0xff] %v1810
    %1823 = vst [vmem:[#allocation3 + $0x2b0] sm:$0xff] %v1806
    %1824 = vst [vmem:[#allocation3 + $0x2b8] sm:$0xff] %v1802
    %1825 = vst [vmem:[#allocation3 + $0x2c0] sm:$0xff] %v1815
    %1826 = vst [vmem:[#allocation3 + $0x2c8] sm:$0xff] %v1811
    %1827 = vst [vmem:[#allocation3 + $0x2d0] sm:$0xff] %v1807
    %1828 = vst [vmem:[#allocation3 + $0x2d8] sm:$0xff] %v1803
    %1829 = vst [vmem:[#allocation3 + $0x2e0] sm:$0xff] %v1816
    %1830 = vst [vmem:[#allocation3 + $0x2e8] sm:$0xff] %v1812
    %1831 = vst [vmem:[#allocation3 + $0x2f0] sm:$0xff] %v1808
    %1832 = vst [vmem:[#allocation3 + $0x2f8] sm:$0xff] %v1804
    %1833 = vrot.lane.b32.xlu0 %v1481, 32
    %v1834 = vpop.permute.xlu0 %1833
    %1835 = vrot.lane.b32.xlu0 %v1485, 32
    %v1836 = vpop.permute.xlu0 %1835
    %1837 = vrot.lane.b32.xlu0 %v1489, 32
    %v1838 = vpop.permute.xlu0 %1837
    %1839 = vrot.lane.b32.xlu0 %v1493, 32
    %v1840 = vpop.permute.xlu0 %1839
    %1841 = vrot.lane.b32.xlu0 %v1482, 32
    %v1842 = vpop.permute.xlu0 %1841
    %1843 = vrot.lane.b32.xlu0 %v1486, 32
    %v1844 = vpop.permute.xlu0 %1843
    %1845 = vrot.lane.b32.xlu0 %v1490, 32
    %v1846 = vpop.permute.xlu0 %1845
    %1847 = vrot.lane.b32.xlu0 %v1494, 32
    %v1848 = vpop.permute.xlu0 %1847
    %1849 = vrot.lane.b32.xlu0 %v1483, 32
    %v1850 = vpop.permute.xlu0 %1849
    %1851 = vrot.lane.b32.xlu0 %v1487, 32
    %v1852 = vpop.permute.xlu0 %1851
    %1853 = vrot.lane.b32.xlu0 %v1491, 32
    %v1854 = vpop.permute.xlu0 %1853
    %1855 = vrot.lane.b32.xlu0 %v1495, 32
    %v1856 = vpop.permute.xlu0 %1855
    %1857 = vrot.lane.b32.xlu0 %v1484, 32
    %v1858 = vpop.permute.xlu0 %1857
    %1859 = vrot.lane.b32.xlu0 %v1488, 32
    %v1860 = vpop.permute.xlu0 %1859
    %1861 = vrot.lane.b32.xlu0 %v1492, 32
    %v1862 = vpop.permute.xlu0 %1861
    %1863 = vrot.lane.b32.xlu0 %v1496, 32
    %v1864 = vpop.permute.xlu0 %1863
    %v1865 = vsel %vm1111, %v1850, %v1858
    %v1866 = vsel %vm1111, %v1852, %v1860
    %v1867 = vsel %vm1111, %v1854, %v1862
    %v1868 = vsel %vm1111, %v1856, %v1864
    %v1869 = vsel %vm1111, %v1842, %v1850
    %v1870 = vsel %vm1111, %v1844, %v1852
    %v1871 = vsel %vm1111, %v1846, %v1854
    %v1872 = vsel %vm1111, %v1848, %v1856
    %v1873 = vsel %vm1111, %v1834, %v1842
    %v1874 = vsel %vm1111, %v1836, %v1844
    %v1875 = vsel %vm1111, %v1838, %v1846
    %v1876 = vsel %vm1111, %v1840, %v1848
    %v1877 = vsel %vm1111, %v1858, %v1834
    %v1878 = vsel %vm1111, %v1860, %v1836
    %v1879 = vsel %vm1111, %v1862, %v1838
    %v1880 = vsel %vm1111, %v1864, %v1840
    %1881 = vst [vmem:[#allocation3 + $0x300] sm:$0xff] %v1877
    %1882 = vst [vmem:[#allocation3 + $0x308] sm:$0xff] %v1873
    %1883 = vst [vmem:[#allocation3 + $0x310] sm:$0xff] %v1869
    %1884 = vst [vmem:[#allocation3 + $0x318] sm:$0xff] %v1865
    %1885 = vst [vmem:[#allocation3 + $0x320] sm:$0xff] %v1878
    %1886 = vst [vmem:[#allocation3 + $0x328] sm:$0xff] %v1874
    %1887 = vst [vmem:[#allocation3 + $0x330] sm:$0xff] %v1870
    %1888 = vst [vmem:[#allocation3 + $0x338] sm:$0xff] %v1866
    %1889 = vst [vmem:[#allocation3 + $0x340] sm:$0xff] %v1879
    %1890 = vst [vmem:[#allocation3 + $0x348] sm:$0xff] %v1875
    %1891 = vst [vmem:[#allocation3 + $0x350] sm:$0xff] %v1871
    %1892 = vst [vmem:[#allocation3 + $0x358] sm:$0xff] %v1867
    %1893 = vst [vmem:[#allocation3 + $0x360] sm:$0xff] %v1880
    %1894 = vst [vmem:[#allocation3 + $0x368] sm:$0xff] %v1876
    %1895 = vst [vmem:[#allocation3 + $0x370] sm:$0xff] %v1872
    %1896 = vst [vmem:[#allocation3 + $0x378] sm:$0xff] %v1868
    %1897 = vrot.lane.b32.xlu0 %v1481, 33
    %v1898 = vpop.permute.xlu0 %1897
    %1899 = vrot.lane.b32.xlu0 %v1485, 33
    %v1900 = vpop.permute.xlu0 %1899
    %1901 = vrot.lane.b32.xlu0 %v1489, 33
    %v1902 = vpop.permute.xlu0 %1901
    %1903 = vrot.lane.b32.xlu0 %v1493, 33
    %v1904 = vpop.permute.xlu0 %1903
    %1905 = vrot.lane.b32.xlu0 %v1482, 33
    %v1906 = vpop.permute.xlu0 %1905
    %1907 = vrot.lane.b32.xlu0 %v1486, 33
    %v1908 = vpop.permute.xlu0 %1907
    %1909 = vrot.lane.b32.xlu0 %v1490, 33
    %v1910 = vpop.permute.xlu0 %1909
    %1911 = vrot.lane.b32.xlu0 %v1494, 33
    %v1912 = vpop.permute.xlu0 %1911
    %1913 = vrot.lane.b32.xlu0 %v1483, 33
    %v1914 = vpop.permute.xlu0 %1913
    %1915 = vrot.lane.b32.xlu0 %v1487, 33
    %v1916 = vpop.permute.xlu0 %1915
    %1917 = vrot.lane.b32.xlu0 %v1491, 33
    %v1918 = vpop.permute.xlu0 %1917
    %1919 = vrot.lane.b32.xlu0 %v1495, 33
    %v1920 = vpop.permute.xlu0 %1919
    %1921 = vrot.lane.b32.xlu0 %v1484, 33
    %v1922 = vpop.permute.xlu0 %1921
    %1923 = vrot.lane.b32.xlu0 %v1488, 33
    %v1924 = vpop.permute.xlu0 %1923
    %1925 = vrot.lane.b32.xlu0 %v1492, 33
    %v1926 = vpop.permute.xlu0 %1925
    %1927 = vrot.lane.b32.xlu0 %v1496, 33
    %v1928 = vpop.permute.xlu0 %1927
    %v1929 = vsel %vm1144, %v1914, %v1922
    %v1930 = vsel %vm1144, %v1916, %v1924
    %v1931 = vsel %vm1144, %v1918, %v1926
    %v1932 = vsel %vm1144, %v1920, %v1928
    %v1933 = vsel %vm1144, %v1906, %v1914
    %v1934 = vsel %vm1144, %v1908, %v1916
    %v1935 = vsel %vm1144, %v1910, %v1918
    %v1936 = vsel %vm1144, %v1912, %v1920
    %v1937 = vsel %vm1144, %v1898, %v1906
    %v1938 = vsel %vm1144, %v1900, %v1908
    %v1939 = vsel %vm1144, %v1902, %v1910
    %v1940 = vsel %vm1144, %v1904, %v1912
    %v1941 = vsel %vm1144, %v1922, %v1898
    %v1942 = vsel %vm1144, %v1924, %v1900
    %v1943 = vsel %vm1144, %v1926, %v1902
    %v1944 = vsel %vm1144, %v1928, %v1904
    %1945 = vst [vmem:[#allocation3 + $0x380] sm:$0xff] %v1941
    %1946 = vst [vmem:[#allocation3 + $0x388] sm:$0xff] %v1937
    %1947 = vst [vmem:[#allocation3 + $0x390] sm:$0xff] %v1933
    %1948 = vst [vmem:[#allocation3 + $0x398] sm:$0xff] %v1929
    %1949 = vst [vmem:[#allocation3 + $0x3a0] sm:$0xff] %v1942
    %1950 = vst [vmem:[#allocation3 + $0x3a8] sm:$0xff] %v1938
    %1951 = vst [vmem:[#allocation3 + $0x3b0] sm:$0xff] %v1934
    %1952 = vst [vmem:[#allocation3 + $0x3b8] sm:$0xff] %v1930
    %1953 = vst [vmem:[#allocation3 + $0x3c0] sm:$0xff] %v1943
    %1954 = vst [vmem:[#allocation3 + $0x3c8] sm:$0xff] %v1939
    %1955 = vst [vmem:[#allocation3 + $0x3d0] sm:$0xff] %v1935
    %1956 = vst [vmem:[#allocation3 + $0x3d8] sm:$0xff] %v1931
    %1957 = vst [vmem:[#allocation3 + $0x3e0] sm:$0xff] %v1944
    %1958 = vst [vmem:[#allocation3 + $0x3e8] sm:$0xff] %v1940
    %1959 = vst [vmem:[#allocation3 + $0x3f0] sm:$0xff] %v1936
    %1960 = vst [vmem:[#allocation3 + $0x3f8] sm:$0xff] %v1932
    %1961 = vrot.lane.b32.xlu0 %v1481, 34
    %v1962 = vpop.permute.xlu0 %1961
    %1963 = vrot.lane.b32.xlu0 %v1485, 34
    %v1964 = vpop.permute.xlu0 %1963
    %1965 = vrot.lane.b32.xlu0 %v1489, 34
    %v1966 = vpop.permute.xlu0 %1965
    %1967 = vrot.lane.b32.xlu0 %v1493, 34
    %v1968 = vpop.permute.xlu0 %1967
    %1969 = vrot.lane.b32.xlu0 %v1482, 34
    %v1970 = vpop.permute.xlu0 %1969
    %1971 = vrot.lane.b32.xlu0 %v1486, 34
    %v1972 = vpop.permute.xlu0 %1971
    %1973 = vrot.lane.b32.xlu0 %v1490, 34
    %v1974 = vpop.permute.xlu0 %1973
    %1975 = vrot.lane.b32.xlu0 %v1494, 34
    %v1976 = vpop.permute.xlu0 %1975
    %1977 = vrot.lane.b32.xlu0 %v1483, 34
    %v1978 = vpop.permute.xlu0 %1977
    %1979 = vrot.lane.b32.xlu0 %v1487, 34
    %v1980 = vpop.permute.xlu0 %1979
    %1981 = vrot.lane.b32.xlu0 %v1491, 34
    %v1982 = vpop.permute.xlu0 %1981
    %1983 = vrot.lane.b32.xlu0 %v1495, 34
    %v1984 = vpop.permute.xlu0 %1983
    %1985 = vrot.lane.b32.xlu0 %v1484, 34
    %v1986 = vpop.permute.xlu0 %1985
    %1987 = vrot.lane.b32.xlu0 %v1488, 34
    %v1988 = vpop.permute.xlu0 %1987
    %1989 = vrot.lane.b32.xlu0 %v1492, 34
    %v1990 = vpop.permute.xlu0 %1989
    %1991 = vrot.lane.b32.xlu0 %v1496, 34
    %v1992 = vpop.permute.xlu0 %1991
    %v1993 = vsel %vm1177, %v1978, %v1986
    %v1994 = vsel %vm1177, %v1980, %v1988
    %v1995 = vsel %vm1177, %v1982, %v1990
    %v1996 = vsel %vm1177, %v1984, %v1992
    %v1997 = vsel %vm1177, %v1970, %v1978
    %v1998 = vsel %vm1177, %v1972, %v1980
    %v1999 = vsel %vm1177, %v1974, %v1982
    %v2000 = vsel %vm1177, %v1976, %v1984
    %v2001 = vsel %vm1177, %v1962, %v1970
    %v2002 = vsel %vm1177, %v1964, %v1972
    %v2003 = vsel %vm1177, %v1966, %v1974
    %v2004 = vsel %vm1177, %v1968, %v1976
    %v2005 = vsel %vm1177, %v1986, %v1962
    %v2006 = vsel %vm1177, %v1988, %v1964
    %v2007 = vsel %vm1177, %v1990, %v1966
    %v2008 = vsel %vm1177, %v1992, %v1968
    %2009 = vst [vmem:[#allocation3 + $0x400] sm:$0xff] %v2005
    %2010 = vst [vmem:[#allocation3 + $0x408] sm:$0xff] %v2001
    %2011 = vst [vmem:[#allocation3 + $0x410] sm:$0xff] %v1997
    %2012 = vst [vmem:[#allocation3 + $0x418] sm:$0xff] %v1993
    %2013 = vst [vmem:[#allocation3 + $0x420] sm:$0xff] %v2006
    %2014 = vst [vmem:[#allocation3 + $0x428] sm:$0xff] %v2002
    %2015 = vst [vmem:[#allocation3 + $0x430] sm:$0xff] %v1998
    %2016 = vst [vmem:[#allocation3 + $0x438] sm:$0xff] %v1994
    %2017 = vst [vmem:[#allocation3 + $0x440] sm:$0xff] %v2007
    %2018 = vst [vmem:[#allocation3 + $0x448] sm:$0xff] %v2003
    %2019 = vst [vmem:[#allocation3 + $0x450] sm:$0xff] %v1999
    %2020 = vst [vmem:[#allocation3 + $0x458] sm:$0xff] %v1995
    %2021 = vst [vmem:[#allocation3 + $0x460] sm:$0xff] %v2008
    %2022 = vst [vmem:[#allocation3 + $0x468] sm:$0xff] %v2004
    %2023 = vst [vmem:[#allocation3 + $0x470] sm:$0xff] %v2000
    %2024 = vst [vmem:[#allocation3 + $0x478] sm:$0xff] %v1996
    %v2025 = vld [vmem:[%s7] sm:$0xff]
    %v2026 = vld [vmem:[%s7 + $0x8] sm:$0xf]
    %v2027 = vld [vmem:[#allocation3] sm:$0xff]
    %v2028 = vld [vmem:[#allocation3 + $0x8] sm:$0xff]
    %v2029 = vld [vmem:[#allocation3 + $0x10] sm:$0xff]
    %v2030 = vld [vmem:[#allocation3 + $0x18] sm:$0xff]
    %v2031 = vld [vmem:[#allocation3 + $0x20] sm:$0xff]
    %v2032 = vld [vmem:[#allocation3 + $0x28] sm:$0xff]
    %v2033 = vld [vmem:[#allocation3 + $0x30] sm:$0xff]
    %v2034 = vld [vmem:[#allocation3 + $0x38] sm:$0xff]
    %v2035 = vld [vmem:[#allocation3 + $0x40] sm:$0xff]
    %v2036 = vld [vmem:[#allocation3 + $0x48] sm:$0xff]
    %v2037 = vld [vmem:[#allocation3 + $0x50] sm:$0xff]
    %v2038 = vld [vmem:[#allocation3 + $0x58] sm:$0xff]
    %v2039 = vld [vmem:[#allocation3 + $0x60] sm:$0xff]
    %v2040 = vld [vmem:[#allocation3 + $0x68] sm:$0xff]
    %v2041 = vld [vmem:[#allocation3 + $0x70] sm:$0xff]
    %v2042 = vld [vmem:[#allocation3 + $0x78] sm:$0xff]
    %v2043 = vld [vmem:[#allocation3 + $0x80] sm:$0xff]
    %v2044 = vld [vmem:[#allocation3 + $0x88] sm:$0xff]
    %v2045 = vld [vmem:[#allocation3 + $0x90] sm:$0xff]
    %v2046 = vld [vmem:[#allocation3 + $0x98] sm:$0xff]
    %v2047 = vld [vmem:[#allocation3 + $0xa0] sm:$0xff]
    %v2048 = vld [vmem:[#allocation3 + $0xa8] sm:$0xff]
    %v2049 = vld [vmem:[#allocation3 + $0xb0] sm:$0xff]
    %v2050 = vld [vmem:[#allocation3 + $0xb8] sm:$0xff]
    %v2051 = vld [vmem:[#allocation3 + $0xc0] sm:$0xff]
    %v2052 = vld [vmem:[#allocation3 + $0xc8] sm:$0xff]
    %v2053 = vld [vmem:[#allocation3 + $0xd0] sm:$0xff]
    %v2054 = vld [vmem:[#allocation3 + $0xd8] sm:$0xff]
    %v2055 = vld [vmem:[#allocation3 + $0xe0] sm:$0xff]
    %v2056 = vld [vmem:[#allocation3 + $0xe8] sm:$0xff]
    %v2057 = vld [vmem:[#allocation3 + $0xf0] sm:$0xff]
    %v2058 = vld [vmem:[#allocation3 + $0xf8] sm:$0xff]
    %v2059 = vld [vmem:[#allocation3 + $0x100] sm:$0xff]
    %v2060 = vld [vmem:[#allocation3 + $0x108] sm:$0xff]
    %v2061 = vld [vmem:[#allocation3 + $0x110] sm:$0xff]
    %v2062 = vld [vmem:[#allocation3 + $0x118] sm:$0xff]
    %v2063 = vld [vmem:[#allocation3 + $0x120] sm:$0xff]
    %v2064 = vld [vmem:[#allocation3 + $0x128] sm:$0xff]
    %v2065 = vld [vmem:[#allocation3 + $0x130] sm:$0xff]
    %v2066 = vld [vmem:[#allocation3 + $0x138] sm:$0xff]
    %v2067 = vld [vmem:[#allocation3 + $0x140] sm:$0xff]
    %v2068 = vld [vmem:[#allocation3 + $0x148] sm:$0xff]
    %v2069 = vld [vmem:[#allocation3 + $0x150] sm:$0xff]
    %v2070 = vld [vmem:[#allocation3 + $0x158] sm:$0xff]
    %v2071 = vld [vmem:[#allocation3 + $0x160] sm:$0xff]
    %v2072 = vld [vmem:[#allocation3 + $0x168] sm:$0xff]
    %v2073 = vld [vmem:[#allocation3 + $0x170] sm:$0xff]
    %v2074 = vld [vmem:[#allocation3 + $0x178] sm:$0xff]
    %v2075 = vld [vmem:[#allocation3 + $0x180] sm:$0xff]
    %v2076 = vld [vmem:[#allocation3 + $0x188] sm:$0xff]
    %v2077 = vld [vmem:[#allocation3 + $0x190] sm:$0xff]
    %v2078 = vld [vmem:[#allocation3 + $0x198] sm:$0xff]
    %v2079 = vld [vmem:[#allocation3 + $0x1a0] sm:$0xff]
    %v2080 = vld [vmem:[#allocation3 + $0x1a8] sm:$0xff]
    %v2081 = vld [vmem:[#allocation3 + $0x1b0] sm:$0xff]
    %v2082 = vld [vmem:[#allocation3 + $0x1b8] sm:$0xff]
    %v2083 = vld [vmem:[#allocation3 + $0x1c0] sm:$0xff]
    %v2084 = vld [vmem:[#allocation3 + $0x1c8] sm:$0xff]
    %v2085 = vld [vmem:[#allocation3 + $0x1d0] sm:$0xff]
    %v2086 = vld [vmem:[#allocation3 + $0x1d8] sm:$0xff]
    %v2087 = vld [vmem:[#allocation3 + $0x1e0] sm:$0xff]
    %v2088 = vld [vmem:[#allocation3 + $0x1e8] sm:$0xff]
    %v2089 = vld [vmem:[#allocation3 + $0x1f0] sm:$0xff]
    %v2090 = vld [vmem:[#allocation3 + $0x1f8] sm:$0xff]
    %v2091 = vld [vmem:[#allocation3 + $0x200] sm:$0xff]
    %v2092 = vld [vmem:[#allocation3 + $0x208] sm:$0xff]
    %v2093 = vld [vmem:[#allocation3 + $0x210] sm:$0xff]
    %v2094 = vld [vmem:[#allocation3 + $0x218] sm:$0xff]
    %v2095 = vld [vmem:[#allocation3 + $0x220] sm:$0xff]
    %v2096 = vld [vmem:[#allocation3 + $0x228] sm:$0xff]
    %v2097 = vld [vmem:[#allocation3 + $0x230] sm:$0xff]
    %v2098 = vld [vmem:[#allocation3 + $0x238] sm:$0xff]
    %v2099 = vld [vmem:[#allocation3 + $0x240] sm:$0xff]
    %v2100 = vld [vmem:[#allocation3 + $0x248] sm:$0xff]
    %v2101 = vld [vmem:[#allocation3 + $0x250] sm:$0xff]
    %v2102 = vld [vmem:[#allocation3 + $0x258] sm:$0xff]
    %v2103 = vld [vmem:[#allocation3 + $0x260] sm:$0xff]
    %v2104 = vld [vmem:[#allocation3 + $0x268] sm:$0xff]
    %v2105 = vld [vmem:[#allocation3 + $0x270] sm:$0xff]
    %v2106 = vld [vmem:[#allocation3 + $0x278] sm:$0xff]
    %v2107 = vld [vmem:[#allocation3 + $0x280] sm:$0xff]
    %v2108 = vld [vmem:[#allocation3 + $0x288] sm:$0xff]
    %v2109 = vld [vmem:[#allocation3 + $0x290] sm:$0xff]
    %v2110 = vld [vmem:[#allocation3 + $0x298] sm:$0xff]
    %v2111 = vld [vmem:[#allocation3 + $0x2a0] sm:$0xff]
    %v2112 = vld [vmem:[#allocation3 + $0x2a8] sm:$0xff]
    %v2113 = vld [vmem:[#allocation3 + $0x2b0] sm:$0xff]
    %v2114 = vld [vmem:[#allocation3 + $0x2b8] sm:$0xff]
    %v2115 = vld [vmem:[#allocation3 + $0x2c0] sm:$0xff]
    %v2116 = vld [vmem:[#allocation3 + $0x2c8] sm:$0xff]
    %v2117 = vld [vmem:[#allocation3 + $0x2d0] sm:$0xff]
    %v2118 = vld [vmem:[#allocation3 + $0x2d8] sm:$0xff]
    %v2119 = vld [vmem:[#allocation3 + $0x2e0] sm:$0xff]
    %v2120 = vld [vmem:[#allocation3 + $0x2e8] sm:$0xff]
    %v2121 = vld [vmem:[#allocation3 + $0x2f0] sm:$0xff]
    %v2122 = vld [vmem:[#allocation3 + $0x2f8] sm:$0xff]
    %v2123 = vld [vmem:[#allocation3 + $0x300] sm:$0xff]
    %v2124 = vld [vmem:[#allocation3 + $0x308] sm:$0xff]
    %v2125 = vld [vmem:[#allocation3 + $0x310] sm:$0xff]
    %v2126 = vld [vmem:[#allocation3 + $0x318] sm:$0xff]
    %v2127 = vld [vmem:[#allocation3 + $0x320] sm:$0xff]
    %v2128 = vld [vmem:[#allocation3 + $0x328] sm:$0xff]
    %v2129 = vld [vmem:[#allocation3 + $0x330] sm:$0xff]
    %v2130 = vld [vmem:[#allocation3 + $0x338] sm:$0xff]
    %v2131 = vld [vmem:[#allocation3 + $0x340] sm:$0xff]
    %v2132 = vld [vmem:[#allocation3 + $0x348] sm:$0xff]
    %v2133 = vld [vmem:[#allocation3 + $0x350] sm:$0xff]
    %v2134 = vld [vmem:[#allocation3 + $0x358] sm:$0xff]
    %v2135 = vld [vmem:[#allocation3 + $0x360] sm:$0xff]
    %v2136 = vld [vmem:[#allocation3 + $0x368] sm:$0xff]
    %v2137 = vld [vmem:[#allocation3 + $0x370] sm:$0xff]
    %v2138 = vld [vmem:[#allocation3 + $0x378] sm:$0xff]
    %v2139 = vld [vmem:[#allocation3 + $0x380] sm:$0xff]
    %v2140 = vld [vmem:[#allocation3 + $0x388] sm:$0xff]
    %v2141 = vld [vmem:[#allocation3 + $0x390] sm:$0xff]
    %v2142 = vld [vmem:[#allocation3 + $0x398] sm:$0xff]
    %v2143 = vld [vmem:[#allocation3 + $0x3a0] sm:$0xff]
    %v2144 = vld [vmem:[#allocation3 + $0x3a8] sm:$0xff]
    %v2145 = vld [vmem:[#allocation3 + $0x3b0] sm:$0xff]
    %v2146 = vld [vmem:[#allocation3 + $0x3b8] sm:$0xff]
    %v2147 = vld [vmem:[#allocation3 + $0x3c0] sm:$0xff]
    %v2148 = vld [vmem:[#allocation3 + $0x3c8] sm:$0xff]
    %v2149 = vld [vmem:[#allocation3 + $0x3d0] sm:$0xff]
    %v2150 = vld [vmem:[#allocation3 + $0x3d8] sm:$0xff]
    %v2151 = vld [vmem:[#allocation3 + $0x3e0] sm:$0xff]
    %v2152 = vld [vmem:[#allocation3 + $0x3e8] sm:$0xff]
    %v2153 = vld [vmem:[#allocation3 + $0x3f0] sm:$0xff]
    %v2154 = vld [vmem:[#allocation3 + $0x3f8] sm:$0xff]
    %v2155 = vld [vmem:[#allocation3 + $0x400] sm:$0xff]
    %v2156 = vld [vmem:[#allocation3 + $0x408] sm:$0xff]
    %v2157 = vld [vmem:[#allocation3 + $0x410] sm:$0xff]
    %v2158 = vld [vmem:[#allocation3 + $0x418] sm:$0xff]
    %v2159 = vld [vmem:[#allocation3 + $0x420] sm:$0xff]
    %v2160 = vld [vmem:[#allocation3 + $0x428] sm:$0xff]
    %v2161 = vld [vmem:[#allocation3 + $0x430] sm:$0xff]
    %v2162 = vld [vmem:[#allocation3 + $0x438] sm:$0xff]
    %v2163 = vld [vmem:[#allocation3 + $0x440] sm:$0xff]
    %v2164 = vld [vmem:[#allocation3 + $0x448] sm:$0xff]
    %v2165 = vld [vmem:[#allocation3 + $0x450] sm:$0xff]
    %v2166 = vld [vmem:[#allocation3 + $0x458] sm:$0xff]
    %v2167 = vld [vmem:[#allocation3 + $0x460] sm:$0xff]
    %v2168 = vld [vmem:[#allocation3 + $0x468] sm:$0xff]
    %v2169 = vld [vmem:[#allocation3 + $0x470] sm:$0xff]
    %v2170 = vld [vmem:[#allocation3 + $0x478] sm:$0xff]
    %v2171 = vld [vmem:[%s8] sm:$0xff]
    %v2172 = vld [vmem:[%s8 + $0x8] sm:$0xff]
    %v2175 = vcombine.high %v2025, %v2025
    %v2179 = vcombine.high %v2171, %v2171
    %v2180 = vcombine.high %v2172, %v2172
    %v2183 = vsel %vm131, %v2026, 0
    %2185 = vmatprep.subr.mxu0 %v2028
    %2186 = vmatpush1.msra.mxu0 %v2027
    %2187 = vmatprep.subr.mxu0 %v2032
    %2188 = vmatpush1.msra.mxu0 %v2031
    %2189 = vmatprep.subr.mxu0 %v2036
    %2190 = vmatpush1.msra.mxu0 %v2035
    %2191 = vmatprep.subr.mxu0 %v2040
    %2192 = vmatpush1.msra.mxu0 %v2039
    %2193 = vmatprep.subr.mxu0 %v2044
    %2194 = vmatpush1.msra.mxu0 %v2043
    %2195 = vmatprep.subr.mxu0 %v2048
    %2196 = vmatpush1.msra.mxu0 %v2047
    %2197 = vmatprep.subr.mxu0 %v2052
    %2198 = vmatpush1.msra.mxu0 %v2051
    %2199 = vmatprep.subr.mxu0 %v2056
    %2200 = vmatpush1.msra.mxu0 %v2055
    %2201 = vmatprep.subr.mxu0 %v2060
    %2202 = vmatpush1.msra.mxu0 %v2059
    %2203 = vmatprep.subr.mxu0 %v2064
    %2204 = vmatpush1.msra.mxu0 %v2063
    %2205 = vmatprep.subr.mxu0 %v2068
    %2206 = vmatpush1.msra.mxu0 %v2067
    %2207 = vmatprep.subr.mxu0 %v2072
    %2208 = vmatpush1.msra.mxu0 %v2071
    %2209 = vmatprep.subr.mxu0 %v2076
    %2210 = vmatpush1.msra.mxu0 %v2075
    %2211 = vmatprep.subr.mxu0 %v2080
    %2212 = vmatpush1.msra.mxu0 %v2079
    %2213 = vmatprep.subr.mxu0 %v2084
    %2214 = vmatpush1.msra.mxu0 %v2083
    %2215 = vmatprep.subr.mxu0 %v2088
    %2216 = vmatpush1.msra.mxu0 %v2087
    %2217 = vmatprep.subr.mxu0 %v2092
    %2218 = vmatpush1.msra.mxu0 %v2091
    %2219 = vmatprep.subr.mxu0 %v2096
    %2220 = vmatpush1.msra.mxu0 %v2095
    %2221 = vmatprep.subr.mxu0 %v2100
    %2222 = vmatpush1.msra.mxu0 %v2099
    %2223 = vmatprep.subr.mxu0 %v2104
    %2224 = vmatpush1.msra.mxu0 %v2103
    %2225 = vmatprep.subr.mxu0 %v2108
    %2226 = vmatpush1.msra.mxu0 %v2107
    %2227 = vmatprep.subr.mxu0 %v2112
    %2228 = vmatpush1.msra.mxu0 %v2111
    %2229 = vmatprep.subr.mxu0 %v2116
    %2230 = vmatpush1.msra.mxu0 %v2115
    %2231 = vmatprep.subr.mxu0 %v2120
    %2232 = vmatpush1.msra.mxu0 %v2119
    %2233 = vmatprep.subr.mxu0 %v2124
    %2234 = vmatpush1.msra.mxu0 %v2123
    %2235 = vmatprep.subr.mxu0 %v2128
    %2236 = vmatpush1.msra.mxu0 %v2127
    %2237 = vmatprep.subr.mxu0 %v2132
    %2238 = vmatpush1.msra.mxu0 %v2131
    %2239 = vmatprep.subr.mxu0 %v2136
    %2240 = vmatpush1.msra.mxu0 %v2135
    %2241 = vmatprep.subr.mxu0 %v2140
    %2242 = vmatpush1.msra.mxu0 %v2139
    %2243 = vmatprep.subr.mxu0 %v2144
    %2244 = vmatpush1.msra.mxu0 %v2143
    %2245 = vmatprep.subr.mxu0 %v2148
    %2246 = vmatpush1.msra.mxu0 %v2147
    %2247 = vmatprep.subr.mxu0 %v2152
    %2248 = vmatpush1.msra.mxu0 %v2151
    %2249 = vmatprep.mubr.f32.mxu0 %v2175
    %2250 = vmatmul.mubr.f32.gmra.mrb[0].mxu0 %v2025
    %v2251 = vpop.f32.mrb[0].mxu0
    %v2252 = vadd.f32 %v2171, %v2251
    %v2253 = vpop.f32.mrb[0].mxu0
    %v2254 = vadd.f32 %v2179, %v2253
    %2255 = vdwg.mxu0
    %2256 = vmatprep.subr.mxu0 %v2156
    %2257 = vmatpush1.msra.mxu0 %v2155
    %2258 = vmatprep.subr.mxu0 %v2160
    %2259 = vmatpush1.msra.mxu0 %v2159
    %2260 = vmatprep.subr.mxu0 %v2164
    %2261 = vmatpush1.msra.mxu0 %v2163
    %2262 = vmatprep.subr.mxu0 %v2168
    %2263 = vmatpush1.msra.mxu0 %v2167
    %2264 = vmatprep.subr.mxu0 0.0
    %2265 = vmatpush1.msra.mxu0 0.0
    %2266 = vmatprep.subr.mxu0 0.0
    %2267 = vmatpush1.msra.mxu0 0.0
    %2268 = vmatprep.subr.mxu0 0.0
    %2269 = vmatpush1.msra.mxu0 0.0
    %2270 = vmatprep.subr.mxu0 0.0
    %2271 = vmatpush1.msra.mxu0 0.0
    %2272 = vmatprep.subr.mxu0 0.0
    %2273 = vmatpush1.msra.mxu0 0.0
    %2274 = vmatprep.subr.mxu0 0.0
    %2275 = vmatpush1.msra.mxu0 0.0
    %2276 = vmatprep.subr.mxu0 0.0
    %2277 = vmatpush1.msra.mxu0 0.0
    %2278 = vmatprep.subr.mxu0 0.0
    %2279 = vmatpush1.msra.mxu0 0.0
    %2280 = vmatprep.subr.mxu0 0.0
    %2281 = vmatpush1.msra.mxu0 0.0
    %2282 = vmatprep.subr.mxu0 0.0
    %2283 = vmatpush1.msra.mxu0 0.0
    %2284 = vmatprep.subr.mxu0 0.0
    %2285 = vmatpush1.msra.mxu0 0.0
    %2286 = vmatprep.subr.mxu0 0.0
    %2287 = vmatpush1.msra.mxu0 0.0
    %2288 = vmatprep.subr.mxu0 0.0
    %2289 = vmatpush1.msra.mxu0 0.0
    %2290 = vmatprep.subr.mxu0 0.0
    %2291 = vmatpush1.msra.mxu0 0.0
    %2292 = vmatprep.subr.mxu0 0.0
    %2293 = vmatpush1.msra.mxu0 0.0
    %2294 = vmatprep.subr.mxu0 0.0
    %2295 = vmatpush1.msra.mxu0 0.0
    %2296 = vmatprep.subr.mxu0 0.0
    %2297 = vmatpush1.msra.mxu0 0.0
    %2298 = vmatprep.subr.mxu0 0.0
    %2299 = vmatpush1.msra.mxu0 0.0
    %2300 = vmatprep.subr.mxu0 0.0
    %2301 = vmatpush1.msra.mxu0 0.0
    %2302 = vmatprep.subr.mxu0 0.0
    %2303 = vmatpush1.msra.mxu0 0.0
    %2304 = vmatprep.subr.mxu0 0.0
    %2305 = vmatpush1.msra.mxu0 0.0
    %2306 = vmatprep.subr.mxu0 0.0
    %2307 = vmatpush1.msra.mxu0 0.0
    %2308 = vmatprep.subr.mxu0 0.0
    %2309 = vmatpush1.msra.mxu0 0.0
    %2310 = vmatprep.subr.mxu0 0.0
    %2311 = vmatpush1.msra.mxu0 0.0
    %2312 = vmatprep.subr.mxu0 0.0
    %2313 = vmatpush1.msra.mxu0 0.0
    %2314 = vmatprep.subr.mxu0 0.0
    %2315 = vmatpush1.msra.mxu0 0.0
    %2316 = vmatprep.subr.mxu0 0.0
    %2317 = vmatpush1.msra.mxu0 0.0
    %2318 = vmatprep.subr.mxu0 0.0
    %2319 = vmatpush1.msra.mxu0 0.0
    %2320 = vmatprep.mubr.f32.mxu0 0.0
    %2321 = vmatmul.mubr.f32.gmra.mrb[0].mxu0 %v2183
    %v2322 = vpop.f32.mrb[0].mxu0
    %v2323 = vadd.f32 %v2252, %v2322
    %v2324 = vpop.f32.mrb[0].mxu0
    %v2325 = vadd.f32 %v2254, %v2324
    %2326 = vdwg.mxu0
    %2327 = vmatprep.subr.mxu0 %v2030
    %2328 = vmatpush1.msra.mxu0 %v2029
    %2329 = vmatprep.subr.mxu0 %v2034
    %2330 = vmatpush1.msra.mxu0 %v2033
    %2331 = vmatprep.subr.mxu0 %v2038
    %2332 = vmatpush1.msra.mxu0 %v2037
    %2333 = vmatprep.subr.mxu0 %v2042
    %2334 = vmatpush1.msra.mxu0 %v2041
    %2335 = vmatprep.subr.mxu0 %v2046
    %2336 = vmatpush1.msra.mxu0 %v2045
    %2337 = vmatprep.subr.mxu0 %v2050
    %2338 = vmatpush1.msra.mxu0 %v2049
    %2339 = vmatprep.subr.mxu0 %v2054
    %2340 = vmatpush1.msra.mxu0 %v2053
    %2341 = vmatprep.subr.mxu0 %v2058
    %2342 = vmatpush1.msra.mxu0 %v2057
    %2343 = vmatprep.subr.mxu0 %v2062
    %2344 = vmatpush1.msra.mxu0 %v2061
    %2345 = vmatprep.subr.mxu0 %v2066
    %2346 = vmatpush1.msra.mxu0 %v2065
    %2347 = vmatprep.subr.mxu0 %v2070
    %2348 = vmatpush1.msra.mxu0 %v2069
    %2349 = vmatprep.subr.mxu0 %v2074
    %2350 = vmatpush1.msra.mxu0 %v2073
    %2351 = vmatprep.subr.mxu0 %v2078
    %2352 = vmatpush1.msra.mxu0 %v2077
    %2353 = vmatprep.subr.mxu0 %v2082
    %2354 = vmatpush1.msra.mxu0 %v2081
    %2355 = vmatprep.subr.mxu0 %v2086
    %2356 = vmatpush1.msra.mxu0 %v2085
    %2357 = vmatprep.subr.mxu0 %v2090
    %2358 = vmatpush1.msra.mxu0 %v2089
    %2359 = vmatprep.subr.mxu0 %v2094
    %2360 = vmatpush1.msra.mxu0 %v2093
    %2361 = vmatprep.subr.mxu0 %v2098
    %2362 = vmatpush1.msra.mxu0 %v2097
    %2363 = vmatprep.subr.mxu0 %v2102
    %2364 = vmatpush1.msra.mxu0 %v2101
    %2365 = vmatprep.subr.mxu0 %v2106
    %2366 = vmatpush1.msra.mxu0 %v2105
    %2367 = vmatprep.subr.mxu0 %v2110
    %2368 = vmatpush1.msra.mxu0 %v2109
    %2369 = vmatprep.subr.mxu0 %v2114
    %2370 = vmatpush1.msra.mxu0 %v2113
    %2371 = vmatprep.subr.mxu0 %v2118
    %2372 = vmatpush1.msra.mxu0 %v2117
    %2373 = vmatprep.subr.mxu0 %v2122
    %2374 = vmatpush1.msra.mxu0 %v2121
    %2375 = vmatprep.subr.mxu0 %v2126
    %2376 = vmatpush1.msra.mxu0 %v2125
    %2377 = vmatprep.subr.mxu0 %v2130
    %2378 = vmatpush1.msra.mxu0 %v2129
    %2379 = vmatprep.subr.mxu0 %v2134
    %2380 = vmatpush1.msra.mxu0 %v2133
    %2381 = vmatprep.subr.mxu0 %v2138
    %2382 = vmatpush1.msra.mxu0 %v2137
    %2383 = vmatprep.subr.mxu0 %v2142
    %2384 = vmatpush1.msra.mxu0 %v2141
    %2385 = vmatprep.subr.mxu0 %v2146
    %2386 = vmatpush1.msra.mxu0 %v2145
    %2387 = vmatprep.subr.mxu0 %v2150
    %2388 = vmatpush1.msra.mxu0 %v2149
    %2389 = vmatprep.subr.mxu0 %v2154
    %2390 = vmatpush1.msra.mxu0 %v2153
    %2391 = vmatprep.mubr.f32.mxu0 %v2175
    %2392 = vmatmul.mubr.f32.gmra.mrb[0].mxu0 %v2025
    %v2393 = vpop.f32.mrb[0].mxu0
    %v2394 = vadd.f32 %v2172, %v2393
    %v2395 = vpop.f32.mrb[0].mxu0
    %v2396 = vadd.f32 %v2180, %v2395
    %2397 = vdwg.mxu0
    %2398 = vmatprep.subr.mxu0 %v2158
    %2399 = vmatpush1.msra.mxu0 %v2157
    %2400 = vmatprep.subr.mxu0 %v2162
    %2401 = vmatpush1.msra.mxu0 %v2161
    %2402 = vmatprep.subr.mxu0 %v2166
    %2403 = vmatpush1.msra.mxu0 %v2165
    %2404 = vmatprep.subr.mxu0 %v2170
    %2405 = vmatpush1.msra.mxu0 %v2169
    %2406 = vmatprep.subr.mxu0 0.0
    %2407 = vmatpush1.msra.mxu0 0.0
    %2408 = vmatprep.subr.mxu0 0.0
    %2409 = vmatpush1.msra.mxu0 0.0
    %2410 = vmatprep.subr.mxu0 0.0
    %2411 = vmatpush1.msra.mxu0 0.0
    %2412 = vmatprep.subr.mxu0 0.0
    %2413 = vmatpush1.msra.mxu0 0.0
    %2414 = vmatprep.subr.mxu0 0.0
    %2415 = vmatpush1.msra.mxu0 0.0
    %2416 = vmatprep.subr.mxu0 0.0
    %2417 = vmatpush1.msra.mxu0 0.0
    %2418 = vmatprep.subr.mxu0 0.0
    %2419 = vmatpush1.msra.mxu0 0.0
    %2420 = vmatprep.subr.mxu0 0.0
    %2421 = vmatpush1.msra.mxu0 0.0
    %2422 = vmatprep.subr.mxu0 0.0
    %2423 = vmatpush1.msra.mxu0 0.0
    %2424 = vmatprep.subr.mxu0 0.0
    %2425 = vmatpush1.msra.mxu0 0.0
    %2426 = vmatprep.subr.mxu0 0.0
    %2427 = vmatpush1.msra.mxu0 0.0
    %2428 = vmatprep.subr.mxu0 0.0
    %2429 = vmatpush1.msra.mxu0 0.0
    %2430 = vmatprep.subr.mxu0 0.0
    %2431 = vmatpush1.msra.mxu0 0.0
    %2432 = vmatprep.subr.mxu0 0.0
    %2433 = vmatpush1.msra.mxu0 0.0
    %2434 = vmatprep.subr.mxu0 0.0
    %2435 = vmatpush1.msra.mxu0 0.0
    %2436 = vmatprep.subr.mxu0 0.0
    %2437 = vmatpush1.msra.mxu0 0.0
    %2438 = vmatprep.subr.mxu0 0.0
    %2439 = vmatpush1.msra.mxu0 0.0
    %2440 = vmatprep.subr.mxu0 0.0
    %2441 = vmatpush1.msra.mxu0 0.0
    %2442 = vmatprep.subr.mxu0 0.0
    %2443 = vmatpush1.msra.mxu0 0.0
    %2444 = vmatprep.subr.mxu0 0.0
    %2445 = vmatpush1.msra.mxu0 0.0
    %2446 = vmatprep.subr.mxu0 0.0
    %2447 = vmatpush1.msra.mxu0 0.0
    %2448 = vmatprep.subr.mxu0 0.0
    %2449 = vmatpush1.msra.mxu0 0.0
    %2450 = vmatprep.subr.mxu0 0.0
    %2451 = vmatpush1.msra.mxu0 0.0
    %2452 = vmatprep.subr.mxu0 0.0
    %2453 = vmatpush1.msra.mxu0 0.0
    %2454 = vmatprep.subr.mxu0 0.0
    %2455 = vmatpush1.msra.mxu0 0.0
    %2456 = vmatprep.subr.mxu0 0.0
    %2457 = vmatpush1.msra.mxu0 0.0
    %2458 = vmatprep.subr.mxu0 0.0
    %2459 = vmatpush1.msra.mxu0 0.0
    %2460 = vmatprep.subr.mxu0 0.0
    %2461 = vmatpush1.msra.mxu0 0.0
    %2462 = vmatprep.mubr.f32.mxu0 0.0
    %2463 = vmatmul.mubr.f32.gmra.mrb[0].mxu0 %v2183
    %v2464 = vpop.f32.mrb[0].mxu0
    %v2465 = vadd.f32 %v2394, %v2464
    %v2466 = vpop.f32.mrb[0].mxu0
    %v2467 = vadd.f32 %v2396, %v2466
    %2468 = vdwg.mxu0
    %v2471 = vcombine.low %v2323, %v2325
    %2473 = vst [vmem:[%s9] sm:$0xff] %v2471
    %v2476 = vcombine.low %v2465, %v2467
    %s2478 = scalar_lea.vmem %s9, 8
    %2479 = vst [vmem:[%s2478] sm:$0xff] %v2476
    // Predicated region
    $region62: #{fwd.1} parent=1 // pred_check
      _
    $region63: #{fwd.1} parent=1 // pred_check_branch
      %2481 = sbr.rel (0) target = $region65
    $region64: #{fwd.1} parent=1 // pred_region
      _
    $region65: #{fwd.1} parent=1 // pred_fallthru
      _
    // Predicated region
    $region66: #{fwd.1} parent=1 // pred_check
      _
    $region67: #{fwd.1} parent=1 // pred_check_branch
      %2483 = sbr.rel (0) target = $region69
    $region68: #{fwd.1} parent=1 // pred_region
      _
    $region69: #{fwd.1} parent=1 // pred_fallthru
      _
    %2484 = vsyncpa [#allocation5], 1
    %2485 = vsyncpa [#allocation7], 1
    %2486 = vsyncpa [#allocation10], 1
    %2487 = vsyncpa [#allocation13], 1

</llo_original>
